<compile_context>
chip_gen: v7x
topology: tpu7x:2x2x1
jax: 0.10.0
libtpu: 0.0.40
codegen_flags: <defaults>
</compile_context>

<pallas_src>
import functools

import jax
import jax.numpy as jnp
from jax.experimental import pallas as pl
from jax.experimental.pallas import tpu as pltpu


# --------------------------- wrapper-side weight prep ---------------------------

def _onehot_rows(n_in, n_out, offset, stride):
    """M[r, i] = 1.0 iff r == offset + stride * i ; shape (n_out, n_in)."""
    r = jnp.arange(n_out)[:, None]
    i = jnp.arange(n_in)[None, :]
    return (r == offset + stride * i).astype(jnp.float32)


def _flip_hwio(w_t):
    """PyTorch ConvTranspose2d weight (Cin, Cout, kh, kw) -> equivalent forward-conv
    weight in HWIO layout (kh, kw, Cin, Cout), spatially flipped."""
    return jnp.transpose(jnp.flip(w_t, (2, 3)), (2, 3, 0, 1))


def _bn_fold(gamma, beta, mean, var, eps=1e-5):
    scale = gamma / jnp.sqrt(var + eps)
    return scale, beta - mean * scale


def _band_matrices(w_conv, scale, w_pad, w_out):
    """Banded (block-Toeplitz) weight matrices for a stride-1 conv in the
    (rows, W*C) layout.  Returns (k, w_pad*Cin, w_out*Cout) bf16, BN scale folded in.
    A[kh, (ow+kw)*Cin + ci, ow*Cout + co] = w_conv[kh, kw, ci, co] * scale[co]."""
    k, _, ci, co = w_conv.shape
    mats = []
    for kh in range(k):
        a = jnp.zeros((w_pad * ci, w_out * co), jnp.float32)
        for kw in range(k):
            u = _onehot_rows(w_out, w_pad, kw, 1)                 # (w_pad, w_out)
            a = a + jnp.kron(u, w_conv[kh, kw] * scale[None, :])
        mats.append(a)
    return jnp.stack(mats).astype(jnp.bfloat16)


def _kron_eye(m_w, c):
    """kron(M^T, I_c): scatter along the W axis of a (rows, W*C) tile."""
    return jnp.kron(m_w.T, jnp.eye(c, dtype=jnp.float32))


# --------------------------------- Pallas kernel ---------------------------------

def _block_up_conv_kernel(use_residual, h1o, h2o, k,
                          x_ref,
                          p1h_ref, p1w_ref, a1_ref, b1_ref,
                          d2h_ref, s2w_ref, a2_ref, b2_ref,
                          p3h_ref, p3w_ref, a3_ref, b3_ref,
                          *rest):
    if use_residual:
        drh_ref, srw_ref, bd_ref, o_ref = rest
    else:
        (o_ref,) = rest

    def pad2d(x2d, hmat_ref, wmat_ref):
        # zero-pad / zero-dilate in the (rows, W*C) layout via two 0/1 matmuls
        t = jnp.dot(x2d.astype(jnp.bfloat16), wmat_ref[...],
                    preferred_element_type=jnp.float32)
        return jnp.dot(hmat_ref[...], t.astype(jnp.bfloat16),
                       preferred_element_type=jnp.float32)

    def conv_band(xp, a_ref, shift_ref, h_out, relu):
        # stride-1 conv as k wide-K matmuls against banded weights; f32 accumulate
        acc = jnp.zeros((h_out, a_ref.shape[2]), jnp.float32)
        for kh in range(k):                                        # static, k == 3
            lhs = xp[kh:kh + h_out, :].astype(jnp.bfloat16)
            acc = acc + jnp.dot(lhs, a_ref[kh],
                                preferred_element_type=jnp.float32)
        out = acc + shift_ref[...]                                 # folded-BN shift (f32)
        return jnp.maximum(out, 0.0) if relu else out

    x = x_ref[...]                                                 # (H, W*Cin) bf16

    # stage 1: ConvTranspose(k3, s1, p1) + BN + ReLU
    xp1 = pad2d(x, p1h_ref, p1w_ref)
    h1 = conv_band(xp1, a1_ref, b1_ref, h1o, True)

    # stage 2: ConvTranspose(k3, s, p1, op1) + BN + ReLU  (zero-dilate, pad, conv)
    xp2 = pad2d(h1, d2h_ref, s2w_ref)
    h2 = conv_band(xp2, a2_ref, b2_ref, h2o, True)

    # stage 3: ConvTranspose(k3, s1, p1) + BN + ReLU
    xp3 = pad2d(h2, p3h_ref, p3w_ref)
    out = conv_band(xp3, a3_ref, b3_ref, h2o, True)

    if use_residual:
        # identity branch: ConvTranspose(k1, s, p0, op1) + BN, added after last ReLU
        r = jnp.dot(x, srw_ref[...], preferred_element_type=jnp.float32)
        r = jnp.dot(drh_ref[...], r.astype(jnp.bfloat16),
                    preferred_element_type=jnp.float32)
        out = out + r + bd_ref[...]

    o_ref[...] = out.astype(o_ref.dtype)


# --------------------------------- public wrapper ---------------------------------

def block_up_conv_forward(x_nchw, params, *, stride, residual=True):
    """Pallas TPU implementation of BlockUpConv.forward (NCHW in/out, eval-mode BN)."""
    # NOTE: output_padding=1 in the module requires stride > 1 (PyTorch errors otherwise).
    assert stride >= 2, "BlockUpConv uses output_padding=1, which requires stride > 1"
    n, cin, h, w = x_nchw.shape
    cout = int(params["w1"].shape[1])
    k = int(params["w1"].shape[2])
    pad, op = 1, 1

    h1o, w1o = h, w                                   # stage 1 keeps spatial size
    h2o = (h1o - 1) * stride - 2 * pad + k + op       # stages 2/3 & residual output size
    w2o = (w1o - 1) * stride - 2 * pad + k + op
    hp1, wp1 = h + 2 * (k - 1 - pad), w + 2 * (k - 1 - pad)
    hp2 = (h1o - 1) * stride + 1 + 2 * (k - 1 - pad) + op
    wp2 = (w1o - 1) * stride + 1 + 2 * (k - 1 - pad) + op
    hp3, wp3 = h2o + 2 * (k - 1 - pad), w2o + 2 * (k - 1 - pad)

    # fold eval-mode BatchNorm into per-channel scale / shift
    s1, sh1 = _bn_fold(params["g1"], params["b1"], params["m1"], params["v1"])
    s2, sh2 = _bn_fold(params["g2"], params["b2"], params["m2"], params["v2"])
    s3, sh3 = _bn_fold(params["g3"], params["b3"], params["m3"], params["v3"])

    a1 = _band_matrices(_flip_hwio(params["w1"]), s1, wp1, w1o)
    a2 = _band_matrices(_flip_hwio(params["w2"]), s2, wp2, w2o)
    a3 = _band_matrices(_flip_hwio(params["w3"]), s3, wp3, w2o)

    bf16 = jnp.bfloat16
    p1h = _onehot_rows(h, hp1, k - 1 - pad, 1).astype(bf16)
    p1w = _kron_eye(_onehot_rows(w, wp1, k - 1 - pad, 1), cin).astype(bf16)
    d2h = _onehot_rows(h1o, hp2, k - 1 - pad, stride).astype(bf16)
    s2w = _kron_eye(_onehot_rows(w1o, wp2, k - 1 - pad, stride), cout).astype(bf16)
    p3h = _onehot_rows(h2o, hp3, k - 1 - pad, 1).astype(bf16)
    p3w = _kron_eye(_onehot_rows(w2o, wp3, k - 1 - pad, 1), cout).astype(bf16)

    b1t = jnp.tile(sh1, w1o)[None, :].astype(jnp.float32)
    b2t = jnp.tile(sh2, w2o)[None, :].astype(jnp.float32)
    b3t = jnp.tile(sh3, w2o)[None, :].astype(jnp.float32)

    # lane-dense (rows, W*C) layout, bf16 in HBM/VMEM
    x2d = jnp.transpose(x_nchw, (0, 2, 3, 1)).reshape(n, h, w * cin).astype(bf16)

    inputs = [x2d, p1h, p1w, a1, b1t, d2h, s2w, a2, b2t, p3h, p3w, a3, b3t]
    if residual:
        sd, shd = _bn_fold(params["gd"], params["bd"], params["md"], params["vd"])
        wd = params["wd"][:, :, 0, 0]                              # (cin, cout)
        drh = _onehot_rows(h, h2o, 0, stride).astype(bf16)
        srw = jnp.kron(_onehot_rows(w, w2o, 0, stride).T,
                       wd * sd[None, :]).astype(bf16)
        bdt = jnp.tile(shd, w2o)[None, :].astype(jnp.float32)
        inputs += [drh, srw, bdt]

    def full_spec(arr):
        if arr.ndim == 2:
            return pl.BlockSpec(arr.shape, lambda i: (0, 0))
        return pl.BlockSpec(arr.shape, lambda i: (0, 0, 0))

    in_specs = [pl.BlockSpec((None, h, w * cin), lambda i: (i, 0, 0))]
    in_specs += [full_spec(a) for a in inputs[1:]]
    out_spec = pl.BlockSpec((None, h2o, w2o * cout), lambda i: (i, 0, 0))

    # rough roofline hints for XLA scheduling
    flops = 2 * n * (
        h * (w * cin) * (wp1 * cin) + hp1 * h * (wp1 * cin)
        + k * h1o * (wp1 * cin) * (w1o * cout)
        + h1o * (w1o * cout) * (wp2 * cout) + hp2 * h1o * (wp2 * cout)
        + k * h2o * (wp2 * cout) * (w2o * cout)
        + h2o * (w2o * cout) * (wp3 * cout) + hp3 * h2o * (wp3 * cout)
        + k * h2o * (wp3 * cout) * (w2o * cout)
        + (h * (w * cin) * (w2o * cout) + h2o * h * (w2o * cout) if residual else 0))
    bytes_accessed = (sum(int(a.size) * a.dtype.itemsize for a in inputs)
                      + n * h2o * w2o * cout * 4)

    kernel = functools.partial(_block_up_conv_kernel, residual, h1o, h2o, k)

    out2d = pl.pallas_call(
        kernel,
        out_shape=jax.ShapeDtypeStruct((n, h2o, w2o * cout), jnp.float32),
        grid_spec=pltpu.PrefetchScalarGridSpec(
            num_scalar_prefetch=0,
            grid=(n,),
            in_specs=in_specs,
            out_specs=out_spec),
        compiler_params=pltpu.CompilerParams(
            dimension_semantics=("parallel",),
            vmem_limit_bytes=64 * 1024 * 1024),
        cost_estimate=pl.CostEstimate(flops=int(flops), transcendentals=0,
                                      bytes_accessed=int(bytes_accessed)),
    )(*inputs)

    out = out2d.reshape(n, h2o, w2o, cout)
    return jnp.transpose(out, (0, 3, 1, 2))                        # NHWC -> NCHW


# --------------------------- pure-JAX reference (checking) ---------------------------

def _conv_transpose_ref(x_nhwc, w_t, stride, padding, output_padding):
    """ConvTranspose2d with PyTorch semantics (weight layout (Cin, Cout, kh, kw))."""
    k = w_t.shape[2]
    w_conv = jnp.transpose(jnp.flip(w_t, (2, 3)), (2, 3, 0, 1))     # flipped HWIO
    lo = k - 1 - padding
    hi = k - 1 - padding + output_padding
    return jax.lax.conv_general_dilated(
        x_nhwc, w_conv, window_strides=(1, 1),
        padding=[(lo, hi), (lo, hi)],
        lhs_dilation=(stride, stride),
        dimension_numbers=("NHWC", "HWIO", "NHWC"))


def block_up_conv_reference(x_nchw, p, *, stride, residual=True):
    x = jnp.transpose(x_nchw, (0, 2, 3, 1))
    eps = 1e-5

    def bn(y, g, b, m, v):
        return (y - m) / jnp.sqrt(v + eps) * g + b

    h = jax.nn.relu(bn(_conv_transpose_ref(x, p["w1"], 1, 1, 0),
                       p["g1"], p["b1"], p["m1"], p["v1"]))
    h = jax.nn.relu(bn(_conv_transpose_ref(h, p["w2"], stride, 1, 1),
                       p["g2"], p["b2"], p["m2"], p["v2"]))
    h = jax.nn.relu(bn(_conv_transpose_ref(h, p["w3"], 1, 1, 0),
                       p["g3"], p["b3"], p["m3"], p["v3"]))
    if residual:
        idn = bn(_conv_transpose_ref(x, p["wd"], stride, 0, 1),
                 p["gd"], p["bd"], p["md"], p["vd"])
        h = h + idn
    return jnp.transpose(h, (0, 3, 1, 2))


# --------------------------------------- main ---------------------------------------

if __name__ == "__main__":
    N, CIN, COUT, H, W = 2, 4, 8, 16, 16
    K, STRIDE = 3, 2

    key = jax.random.PRNGKey(0)
    keys = jax.random.split(key, 5)

    def bn_params(c, base):
        gamma = 1.0 + 0.1 * jnp.arange(c, dtype=jnp.float32)
        beta = base + 0.05 * jnp.arange(c, dtype=jnp.float32)
        mean = 0.02 * jnp.arange(c, dtype=jnp.float32)
        var = 1.0 + 0.01 * jnp.arange(c, dtype=jnp.float32)
        return gamma, beta, mean, var

    # ConvTranspose2d weights in PyTorch layout (Cin, Cout, kh, kw)
    w1 = 0.1 * jax.random.normal(keys[0], (CIN, COUT, K, K), jnp.float32)
    w2 = 0.1 * jax.random.normal(keys[1], (COUT, COUT, K, K), jnp.float32)
    w3 = 0.1 * jax.random.normal(keys[2], (COUT, COUT, K, K), jnp.float32)
    wd = 0.1 * jax.random.normal(keys[3], (CIN, COUT, 1, 1), jnp.float32)

    g1, b1, m1, v1 = bn_params(COUT, 0.00)
    g2, b2, m2, v2 = bn_params(COUT, 0.01)
    g3, b3, m3, v3 = bn_params(COUT, 0.02)
    gd, bd, md, vd = bn_params(COUT, 0.03)

    params = dict(w1=w1, g1=g1, b1=b1, m1=m1, v1=v1,
                  w2=w2, g2=g2, b2=b2, m2=m2, v2=v2,
                  w3=w3, g3=g3, b3=b3, m3=m3, v3=v3,
                  wd=wd, gd=gd, bd=bd, md=md, vd=vd)

    x = jax.random.normal(keys[4], (N, CIN, H, W), jnp.float32)

    out = jax.block_until_ready(
        block_up_conv_forward(x, params, stride=STRIDE, residual=True))
    ref = jax.block_until_ready(
        block_up_conv_reference(x, params, stride=STRIDE, residual=True))

    h_out = (H - 1) * STRIDE + 2
    assert out.shape == (N, COUT, h_out, h_out), out.shape
    err = float(jnp.max(jnp.abs(out - ref.astype(jnp.float32))))
    assert jnp.allclose(out, ref, atol=5e-2, rtol=5e-2), err

    print("KERNEL_OK")
</pallas_src>

<mosaic_0001>
module attributes {stable_mosaic.version = 11 : i64} {
  func.func @_block_up_conv_kernel(%arg0: i32, %arg1: memref<1x16x64xbf16, #tpu.memory_space<vmem>>, %arg2: memref<18x16xbf16, #tpu.memory_space<vmem>>, %arg3: memref<64x72xbf16, #tpu.memory_space<vmem>>, %arg4: memref<3x72x128xbf16, #tpu.memory_space<vmem>>, %arg5: memref<1x128xf32, #tpu.memory_space<vmem>>, %arg6: memref<34x16xbf16, #tpu.memory_space<vmem>>, %arg7: memref<128x272xbf16, #tpu.memory_space<vmem>>, %arg8: memref<3x272x256xbf16, #tpu.memory_space<vmem>>, %arg9: memref<1x256xf32, #tpu.memory_space<vmem>>, %arg10: memref<34x32xbf16, #tpu.memory_space<vmem>>, %arg11: memref<256x272xbf16, #tpu.memory_space<vmem>>, %arg12: memref<3x272x256xbf16, #tpu.memory_space<vmem>>, %arg13: memref<1x256xf32, #tpu.memory_space<vmem>>, %arg14: memref<32x16xbf16, #tpu.memory_space<vmem>>, %arg15: memref<64x256xbf16, #tpu.memory_space<vmem>>, %arg16: memref<1x256xf32, #tpu.memory_space<vmem>>, %arg17: memref<1x32x256xf32, #tpu.memory_space<vmem>>) attributes {dimension_semantics = [#tpu.dimension_semantics<parallel>], iteration_bounds = array<i64: 2>, scalar_prefetch = 0 : i64, scratch_operands = 0 : i64, tpu.core_type = #tpu.core_type<tc>, window_params = [{transform_indices = @transform_0, window_bounds = array<i64: 1, 16, 64>}, {pipeline_mode = #tpu.pipeline_mode<synchronous>, transform_indices = @transform_1, window_bounds = array<i64: 18, 16>}, {pipeline_mode = #tpu.pipeline_mode<synchronous>, transform_indices = @transform_2, window_bounds = array<i64: 64, 72>}, {pipeline_mode = #tpu.pipeline_mode<synchronous>, transform_indices = @transform_3, window_bounds = array<i64: 3, 72, 128>}, {pipeline_mode = #tpu.pipeline_mode<synchronous>, transform_indices = @transform_4, window_bounds = array<i64: 1, 128>}, {pipeline_mode = #tpu.pipeline_mode<synchronous>, transform_indices = @transform_5, window_bounds = array<i64: 34, 16>}, {pipeline_mode = #tpu.pipeline_mode<synchronous>, transform_indices = @transform_6, window_bounds = array<i64: 128, 272>}, {pipeline_mode = #tpu.pipeline_mode<synchronous>, transform_indices = @transform_7, window_bounds = array<i64: 3, 272, 256>}, {pipeline_mode = #tpu.pipeline_mode<synchronous>, transform_indices = @transform_8, window_bounds = array<i64: 1, 256>}, {pipeline_mode = #tpu.pipeline_mode<synchronous>, transform_indices = @transform_9, window_bounds = array<i64: 34, 32>}, {pipeline_mode = #tpu.pipeline_mode<synchronous>, transform_indices = @transform_10, window_bounds = array<i64: 256, 272>}, {pipeline_mode = #tpu.pipeline_mode<synchronous>, transform_indices = @transform_11, window_bounds = array<i64: 3, 272, 256>}, {pipeline_mode = #tpu.pipeline_mode<synchronous>, transform_indices = @transform_12, window_bounds = array<i64: 1, 256>}, {pipeline_mode = #tpu.pipeline_mode<synchronous>, transform_indices = @transform_13, window_bounds = array<i64: 32, 16>}, {pipeline_mode = #tpu.pipeline_mode<synchronous>, transform_indices = @transform_14, window_bounds = array<i64: 64, 256>}, {pipeline_mode = #tpu.pipeline_mode<synchronous>, transform_indices = @transform_15, window_bounds = array<i64: 1, 256>}, {transform_indices = @transform_16, window_bounds = array<i64: 1, 32, 256>}]} {
    %c0 = arith.constant 0 : index
    %c0_0 = arith.constant 0 : index
    %c0_1 = arith.constant 0 : index
    %0 = vector.load %arg1[%c0, %c0_0, %c0_1] : memref<1x16x64xbf16, #tpu.memory_space<vmem>>, vector<1x16x64xbf16>
    %1 = vector.shape_cast %0 : vector<1x16x64xbf16> to vector<16x64xbf16>
    %c0_2 = arith.constant 0 : index
    %c0_3 = arith.constant 0 : index
    %2 = vector.load %arg3[%c0_2, %c0_3] : memref<64x72xbf16, #tpu.memory_space<vmem>>, vector<64x72xbf16>
    %cst = arith.constant dense<0.000000e+00> : vector<16x72xf32>
    %3 = tpu.matmul %1, %2, %cst {dimension_numbers = #tpu.dot_dimension_numbers<[1], [0], [0], [1], [0, 0, 1, 1], [], []>} : vector<16x64xbf16>, vector<64x72xbf16>, vector<16x72xf32> -> vector<16x72xf32>
    %c0_4 = arith.constant 0 : index
    %c0_5 = arith.constant 0 : index
    %4 = vector.load %arg2[%c0_4, %c0_5] : memref<18x16xbf16, #tpu.memory_space<vmem>>, vector<18x16xbf16>
    %5 = arith.truncf %3 : vector<16x72xf32> to vector<16x72xbf16>
    %cst_6 = arith.constant dense<0.000000e+00> : vector<18x72xf32>
    %6 = tpu.matmul %4, %5, %cst_6 {dimension_numbers = #tpu.dot_dimension_numbers<[1], [0], [0], [1], [0, 0, 1, 1], [], []>} : vector<18x16xbf16>, vector<16x72xbf16>, vector<18x72xf32> -> vector<18x72xf32>
    %cst_7 = arith.constant 0.000000e+00 : f32
    %7 = vector.broadcast %cst_7 : f32 to vector<16x128xf32>
    %8 = vector.extract_strided_slice %6 {offsets = [0, 0], sizes = [16, 72], strides = [1, 1]} : vector<18x72xf32> to vector<16x72xf32>
    %9 = arith.truncf %8 : vector<16x72xf32> to vector<16x72xbf16>
    %c0_8 = arith.constant 0 : index
    %c0_9 = arith.constant 0 : index
    %c0_10 = arith.constant 0 : index
    %10 = vector.load %arg4[%c0_8, %c0_9, %c0_10] : memref<3x72x128xbf16, #tpu.memory_space<vmem>>, vector<1x72x128xbf16>
    %11 = vector.shape_cast %10 : vector<1x72x128xbf16> to vector<72x128xbf16>
    %cst_11 = arith.constant dense<0.000000e+00> : vector<16x128xf32>
    %12 = tpu.matmul %9, %11, %cst_11 {dimension_numbers = #tpu.dot_dimension_numbers<[1], [0], [0], [1], [0, 0, 1, 1], [], []>} : vector<16x72xbf16>, vector<72x128xbf16>, vector<16x128xf32> -> vector<16x128xf32>
    %13 = arith.addf %7, %12 : vector<16x128xf32>
    %14 = vector.extract_strided_slice %6 {offsets = [1, 0], sizes = [16, 72], strides = [1, 1]} : vector<18x72xf32> to vector<16x72xf32>
    %15 = arith.truncf %14 : vector<16x72xf32> to vector<16x72xbf16>
    %c1 = arith.constant 1 : index
    %c0_12 = arith.constant 0 : index
    %c0_13 = arith.constant 0 : index
    %16 = vector.load %arg4[%c1, %c0_12, %c0_13] : memref<3x72x128xbf16, #tpu.memory_space<vmem>>, vector<1x72x128xbf16>
    %17 = vector.shape_cast %16 : vector<1x72x128xbf16> to vector<72x128xbf16>
    %cst_14 = arith.constant dense<0.000000e+00> : vector<16x128xf32>
    %18 = tpu.matmul %15, %17, %cst_14 {dimension_numbers = #tpu.dot_dimension_numbers<[1], [0], [0], [1], [0, 0, 1, 1], [], []>} : vector<16x72xbf16>, vector<72x128xbf16>, vector<16x128xf32> -> vector<16x128xf32>
    %19 = arith.addf %13, %18 : vector<16x128xf32>
    %20 = vector.extract_strided_slice %6 {offsets = [2, 0], sizes = [16, 72], strides = [1, 1]} : vector<18x72xf32> to vector<16x72xf32>
    %21 = arith.truncf %20 : vector<16x72xf32> to vector<16x72xbf16>
    %c2 = arith.constant 2 : index
    %c0_15 = arith.constant 0 : index
    %c0_16 = arith.constant 0 : index
    %22 = vector.load %arg4[%c2, %c0_15, %c0_16] : memref<3x72x128xbf16, #tpu.memory_space<vmem>>, vector<1x72x128xbf16>
    %23 = vector.shape_cast %22 : vector<1x72x128xbf16> to vector<72x128xbf16>
    %cst_17 = arith.constant dense<0.000000e+00> : vector<16x128xf32>
    %24 = tpu.matmul %21, %23, %cst_17 {dimension_numbers = #tpu.dot_dimension_numbers<[1], [0], [0], [1], [0, 0, 1, 1], [], []>} : vector<16x72xbf16>, vector<72x128xbf16>, vector<16x128xf32> -> vector<16x128xf32>
    %25 = arith.addf %19, %24 : vector<16x128xf32>
    %c0_18 = arith.constant 0 : index
    %c0_19 = arith.constant 0 : index
    %26 = vector.load %arg5[%c0_18, %c0_19] : memref<1x128xf32, #tpu.memory_space<vmem>>, vector<1x128xf32>
    %27 = vector.broadcast %26 : vector<1x128xf32> to vector<16x128xf32>
    %28 = arith.addf %25, %27 : vector<16x128xf32>
    %cst_20 = arith.constant 0.000000e+00 : f32
    %29 = vector.broadcast %cst_20 : f32 to vector<16x128xf32>
    %30 = arith.maximumf %28, %29 : vector<16x128xf32>
    %31 = arith.truncf %30 : vector<16x128xf32> to vector<16x128xbf16>
    %c0_21 = arith.constant 0 : index
    %c0_22 = arith.constant 0 : index
    %32 = vector.load %arg7[%c0_21, %c0_22] : memref<128x272xbf16, #tpu.memory_space<vmem>>, vector<128x272xbf16>
    %cst_23 = arith.constant dense<0.000000e+00> : vector<16x272xf32>
    %33 = tpu.matmul %31, %32, %cst_23 {dimension_numbers = #tpu.dot_dimension_numbers<[1], [0], [0], [1], [0, 0, 1, 1], [], []>} : vector<16x128xbf16>, vector<128x272xbf16>, vector<16x272xf32> -> vector<16x272xf32>
    %c0_24 = arith.constant 0 : index
    %c0_25 = arith.constant 0 : index
    %34 = vector.load %arg6[%c0_24, %c0_25] : memref<34x16xbf16, #tpu.memory_space<vmem>>, vector<34x16xbf16>
    %35 = arith.truncf %33 : vector<16x272xf32> to vector<16x272xbf16>
    %cst_26 = arith.constant dense<0.000000e+00> : vector<34x272xf32>
    %36 = tpu.matmul %34, %35, %cst_26 {dimension_numbers = #tpu.dot_dimension_numbers<[1], [0], [0], [1], [0, 0, 1, 1], [], []>} : vector<34x16xbf16>, vector<16x272xbf16>, vector<34x272xf32> -> vector<34x272xf32>
    %cst_27 = arith.constant 0.000000e+00 : f32
    %37 = vector.broadcast %cst_27 : f32 to vector<32x256xf32>
    %38 = vector.extract_strided_slice %36 {offsets = [0, 0], sizes = [32, 272], strides = [1, 1]} : vector<34x272xf32> to vector<32x272xf32>
    %39 = arith.truncf %38 : vector<32x272xf32> to vector<32x272xbf16>
    %c0_28 = arith.constant 0 : index
    %c0_29 = arith.constant 0 : index
    %c0_30 = arith.constant 0 : index
    %40 = vector.load %arg8[%c0_28, %c0_29, %c0_30] : memref<3x272x256xbf16, #tpu.memory_space<vmem>>, vector<1x272x256xbf16>
    %41 = vector.shape_cast %40 : vector<1x272x256xbf16> to vector<272x256xbf16>
    %cst_31 = arith.constant dense<0.000000e+00> : vector<32x256xf32>
    %42 = tpu.matmul %39, %41, %cst_31 {dimension_numbers = #tpu.dot_dimension_numbers<[1], [0], [0], [1], [0, 0, 1, 1], [], []>} : vector<32x272xbf16>, vector<272x256xbf16>, vector<32x256xf32> -> vector<32x256xf32>
    %43 = arith.addf %37, %42 : vector<32x256xf32>
    %44 = vector.extract_strided_slice %36 {offsets = [1, 0], sizes = [32, 272], strides = [1, 1]} : vector<34x272xf32> to vector<32x272xf32>
    %45 = arith.truncf %44 : vector<32x272xf32> to vector<32x272xbf16>
    %c1_32 = arith.constant 1 : index
    %c0_33 = arith.constant 0 : index
    %c0_34 = arith.constant 0 : index
    %46 = vector.load %arg8[%c1_32, %c0_33, %c0_34] : memref<3x272x256xbf16, #tpu.memory_space<vmem>>, vector<1x272x256xbf16>
    %47 = vector.shape_cast %46 : vector<1x272x256xbf16> to vector<272x256xbf16>
    %cst_35 = arith.constant dense<0.000000e+00> : vector<32x256xf32>
    %48 = tpu.matmul %45, %47, %cst_35 {dimension_numbers = #tpu.dot_dimension_numbers<[1], [0], [0], [1], [0, 0, 1, 1], [], []>} : vector<32x272xbf16>, vector<272x256xbf16>, vector<32x256xf32> -> vector<32x256xf32>
    %49 = arith.addf %43, %48 : vector<32x256xf32>
    %50 = vector.extract_strided_slice %36 {offsets = [2, 0], sizes = [32, 272], strides = [1, 1]} : vector<34x272xf32> to vector<32x272xf32>
    %51 = arith.truncf %50 : vector<32x272xf32> to vector<32x272xbf16>
    %c2_36 = arith.constant 2 : index
    %c0_37 = arith.constant 0 : index
    %c0_38 = arith.constant 0 : index
    %52 = vector.load %arg8[%c2_36, %c0_37, %c0_38] : memref<3x272x256xbf16, #tpu.memory_space<vmem>>, vector<1x272x256xbf16>
    %53 = vector.shape_cast %52 : vector<1x272x256xbf16> to vector<272x256xbf16>
    %cst_39 = arith.constant dense<0.000000e+00> : vector<32x256xf32>
    %54 = tpu.matmul %51, %53, %cst_39 {dimension_numbers = #tpu.dot_dimension_numbers<[1], [0], [0], [1], [0, 0, 1, 1], [], []>} : vector<32x272xbf16>, vector<272x256xbf16>, vector<32x256xf32> -> vector<32x256xf32>
    %55 = arith.addf %49, %54 : vector<32x256xf32>
    %c0_40 = arith.constant 0 : index
    %c0_41 = arith.constant 0 : index
    %56 = vector.load %arg9[%c0_40, %c0_41] : memref<1x256xf32, #tpu.memory_space<vmem>>, vector<1x256xf32>
    %57 = vector.broadcast %56 : vector<1x256xf32> to vector<32x256xf32>
    %58 = arith.addf %55, %57 : vector<32x256xf32>
    %cst_42 = arith.constant 0.000000e+00 : f32
    %59 = vector.broadcast %cst_42 : f32 to vector<32x256xf32>
    %60 = arith.maximumf %58, %59 : vector<32x256xf32>
    %61 = arith.truncf %60 : vector<32x256xf32> to vector<32x256xbf16>
    %c0_43 = arith.constant 0 : index
    %c0_44 = arith.constant 0 : index
    %62 = vector.load %arg11[%c0_43, %c0_44] : memref<256x272xbf16, #tpu.memory_space<vmem>>, vector<256x272xbf16>
    %cst_45 = arith.constant dense<0.000000e+00> : vector<32x272xf32>
    %63 = tpu.matmul %61, %62, %cst_45 {dimension_numbers = #tpu.dot_dimension_numbers<[1], [0], [0], [1], [0, 0, 1, 1], [], []>} : vector<32x256xbf16>, vector<256x272xbf16>, vector<32x272xf32> -> vector<32x272xf32>
    %c0_46 = arith.constant 0 : index
    %c0_47 = arith.constant 0 : index
    %64 = vector.load %arg10[%c0_46, %c0_47] : memref<34x32xbf16, #tpu.memory_space<vmem>>, vector<34x32xbf16>
    %65 = arith.truncf %63 : vector<32x272xf32> to vector<32x272xbf16>
    %cst_48 = arith.constant dense<0.000000e+00> : vector<34x272xf32>
    %66 = tpu.matmul %64, %65, %cst_48 {dimension_numbers = #tpu.dot_dimension_numbers<[1], [0], [0], [1], [0, 0, 1, 1], [], []>} : vector<34x32xbf16>, vector<32x272xbf16>, vector<34x272xf32> -> vector<34x272xf32>
    %cst_49 = arith.constant 0.000000e+00 : f32
    %67 = vector.broadcast %cst_49 : f32 to vector<32x256xf32>
    %68 = vector.extract_strided_slice %66 {offsets = [0, 0], sizes = [32, 272], strides = [1, 1]} : vector<34x272xf32> to vector<32x272xf32>
    %69 = arith.truncf %68 : vector<32x272xf32> to vector<32x272xbf16>
    %c0_50 = arith.constant 0 : index
    %c0_51 = arith.constant 0 : index
    %c0_52 = arith.constant 0 : index
    %70 = vector.load %arg12[%c0_50, %c0_51, %c0_52] : memref<3x272x256xbf16, #tpu.memory_space<vmem>>, vector<1x272x256xbf16>
    %71 = vector.shape_cast %70 : vector<1x272x256xbf16> to vector<272x256xbf16>
    %cst_53 = arith.constant dense<0.000000e+00> : vector<32x256xf32>
    %72 = tpu.matmul %69, %71, %cst_53 {dimension_numbers = #tpu.dot_dimension_numbers<[1], [0], [0], [1], [0, 0, 1, 1], [], []>} : vector<32x272xbf16>, vector<272x256xbf16>, vector<32x256xf32> -> vector<32x256xf32>
    %73 = arith.addf %67, %72 : vector<32x256xf32>
    %74 = vector.extract_strided_slice %66 {offsets = [1, 0], sizes = [32, 272], strides = [1, 1]} : vector<34x272xf32> to vector<32x272xf32>
    %75 = arith.truncf %74 : vector<32x272xf32> to vector<32x272xbf16>
    %c1_54 = arith.constant 1 : index
    %c0_55 = arith.constant 0 : index
    %c0_56 = arith.constant 0 : index
    %76 = vector.load %arg12[%c1_54, %c0_55, %c0_56] : memref<3x272x256xbf16, #tpu.memory_space<vmem>>, vector<1x272x256xbf16>
    %77 = vector.shape_cast %76 : vector<1x272x256xbf16> to vector<272x256xbf16>
    %cst_57 = arith.constant dense<0.000000e+00> : vector<32x256xf32>
    %78 = tpu.matmul %75, %77, %cst_57 {dimension_numbers = #tpu.dot_dimension_numbers<[1], [0], [0], [1], [0, 0, 1, 1], [], []>} : vector<32x272xbf16>, vector<272x256xbf16>, vector<32x256xf32> -> vector<32x256xf32>
    %79 = arith.addf %73, %78 : vector<32x256xf32>
    %80 = vector.extract_strided_slice %66 {offsets = [2, 0], sizes = [32, 272], strides = [1, 1]} : vector<34x272xf32> to vector<32x272xf32>
    %81 = arith.truncf %80 : vector<32x272xf32> to vector<32x272xbf16>
    %c2_58 = arith.constant 2 : index
    %c0_59 = arith.constant 0 : index
    %c0_60 = arith.constant 0 : index
    %82 = vector.load %arg12[%c2_58, %c0_59, %c0_60] : memref<3x272x256xbf16, #tpu.memory_space<vmem>>, vector<1x272x256xbf16>
    %83 = vector.shape_cast %82 : vector<1x272x256xbf16> to vector<272x256xbf16>
    %cst_61 = arith.constant dense<0.000000e+00> : vector<32x256xf32>
    %84 = tpu.matmul %81, %83, %cst_61 {dimension_numbers = #tpu.dot_dimension_numbers<[1], [0], [0], [1], [0, 0, 1, 1], [], []>} : vector<32x272xbf16>, vector<272x256xbf16>, vector<32x256xf32> -> vector<32x256xf32>
    %85 = arith.addf %79, %84 : vector<32x256xf32>
    %c0_62 = arith.constant 0 : index
    %c0_63 = arith.constant 0 : index
    %86 = vector.load %arg13[%c0_62, %c0_63] : memref<1x256xf32, #tpu.memory_space<vmem>>, vector<1x256xf32>
    %87 = vector.broadcast %86 : vector<1x256xf32> to vector<32x256xf32>
    %88 = arith.addf %85, %87 : vector<32x256xf32>
    %cst_64 = arith.constant 0.000000e+00 : f32
    %89 = vector.broadcast %cst_64 : f32 to vector<32x256xf32>
    %90 = arith.maximumf %88, %89 : vector<32x256xf32>
    %c0_65 = arith.constant 0 : index
    %c0_66 = arith.constant 0 : index
    %91 = vector.load %arg15[%c0_65, %c0_66] : memref<64x256xbf16, #tpu.memory_space<vmem>>, vector<64x256xbf16>
    %cst_67 = arith.constant dense<0.000000e+00> : vector<16x256xf32>
    %92 = tpu.matmul %1, %91, %cst_67 {dimension_numbers = #tpu.dot_dimension_numbers<[1], [0], [0], [1], [0, 0, 1, 1], [], []>} : vector<16x64xbf16>, vector<64x256xbf16>, vector<16x256xf32> -> vector<16x256xf32>
    %c0_68 = arith.constant 0 : index
    %c0_69 = arith.constant 0 : index
    %93 = vector.load %arg14[%c0_68, %c0_69] : memref<32x16xbf16, #tpu.memory_space<vmem>>, vector<32x16xbf16>
    %94 = arith.truncf %92 : vector<16x256xf32> to vector<16x256xbf16>
    %cst_70 = arith.constant dense<0.000000e+00> : vector<32x256xf32>
    %95 = tpu.matmul %93, %94, %cst_70 {dimension_numbers = #tpu.dot_dimension_numbers<[1], [0], [0], [1], [0, 0, 1, 1], [], []>} : vector<32x16xbf16>, vector<16x256xbf16>, vector<32x256xf32> -> vector<32x256xf32>
    %96 = arith.addf %90, %95 : vector<32x256xf32>
    %c0_71 = arith.constant 0 : index
    %c0_72 = arith.constant 0 : index
    %97 = vector.load %arg16[%c0_71, %c0_72] : memref<1x256xf32, #tpu.memory_space<vmem>>, vector<1x256xf32>
    %98 = vector.broadcast %97 : vector<1x256xf32> to vector<32x256xf32>
    %99 = arith.addf %96, %98 : vector<32x256xf32>
    %c0_73 = arith.constant 0 : index
    %c0_74 = arith.constant 0 : index
    %c0_75 = arith.constant 0 : index
    %100 = vector.load %arg17[%c0_73, %c0_74, %c0_75] : memref<1x32x256xf32, #tpu.memory_space<vmem>>, vector<1x32x256xf32>
    %101 = vector.shape_cast %100 : vector<1x32x256xf32> to vector<32x256xf32>
    %102 = vector.shape_cast %99 : vector<32x256xf32> to vector<1x32x256xf32>
    tpu.vector_store %arg17[%c0_73, %c0_74, %c0_75], %102 {strides = array<i32>} : memref<1x32x256xf32, #tpu.memory_space<vmem>>, vector<1x32x256xf32>,
    return
  }
  func.func @transform_0(%arg0: i32) -> (i32, i32, i32) {
    %c0_i32 = arith.constant 0 : i32
    %c0_i32_0 = arith.constant 0 : i32
    %c0_i32_1 = arith.constant 0 : i32
    return %arg0, %c0_i32, %c0_i32_0 : i32, i32, i32
  }
  func.func @transform_1(%arg0: i32) -> (i32, i32) {
    %c0_i32 = arith.constant 0 : i32
    %c0_i32_0 = arith.constant 0 : i32
    %c0_i32_1 = arith.constant 0 : i32
    return %c0_i32, %c0_i32_0 : i32, i32
  }
  func.func @transform_2(%arg0: i32) -> (i32, i32) {
    %c0_i32 = arith.constant 0 : i32
    %c0_i32_0 = arith.constant 0 : i32
    %c0_i32_1 = arith.constant 0 : i32
    return %c0_i32, %c0_i32_0 : i32, i32
  }
  func.func @transform_3(%arg0: i32) -> (i32, i32, i32) {
    %c0_i32 = arith.constant 0 : i32
    %c0_i32_0 = arith.constant 0 : i32
    %c0_i32_1 = arith.constant 0 : i32
    %c0_i32_2 = arith.constant 0 : i32
    return %c0_i32, %c0_i32_0, %c0_i32_1 : i32, i32, i32
  }
  func.func @transform_4(%arg0: i32) -> (i32, i32) {
    %c0_i32 = arith.constant 0 : i32
    %c0_i32_0 = arith.constant 0 : i32
    %c0_i32_1 = arith.constant 0 : i32
    return %c0_i32, %c0_i32_0 : i32, i32
  }
  func.func @transform_5(%arg0: i32) -> (i32, i32) {
    %c0_i32 = arith.constant 0 : i32
    %c0_i32_0 = arith.constant 0 : i32
    %c0_i32_1 = arith.constant 0 : i32
    return %c0_i32, %c0_i32_0 : i32, i32
  }
  func.func @transform_6(%arg0: i32) -> (i32, i32) {
    %c0_i32 = arith.constant 0 : i32
    %c0_i32_0 = arith.constant 0 : i32
    %c0_i32_1 = arith.constant 0 : i32
    return %c0_i32, %c0_i32_0 : i32, i32
  }
  func.func @transform_7(%arg0: i32) -> (i32, i32, i32) {
    %c0_i32 = arith.constant 0 : i32
    %c0_i32_0 = arith.constant 0 : i32
    %c0_i32_1 = arith.constant 0 : i32
    %c0_i32_2 = arith.constant 0 : i32
    return %c0_i32, %c0_i32_0, %c0_i32_1 : i32, i32, i32
  }
  func.func @transform_8(%arg0: i32) -> (i32, i32) {
    %c0_i32 = arith.constant 0 : i32
    %c0_i32_0 = arith.constant 0 : i32
    %c0_i32_1 = arith.constant 0 : i32
    return %c0_i32, %c0_i32_0 : i32, i32
  }
  func.func @transform_9(%arg0: i32) -> (i32, i32) {
    %c0_i32 = arith.constant 0 : i32
    %c0_i32_0 = arith.constant 0 : i32
    %c0_i32_1 = arith.constant 0 : i32
    return %c0_i32, %c0_i32_0 : i32, i32
  }
  func.func @transform_10(%arg0: i32) -> (i32, i32) {
    %c0_i32 = arith.constant 0 : i32
    %c0_i32_0 = arith.constant 0 : i32
    %c0_i32_1 = arith.constant 0 : i32
    return %c0_i32, %c0_i32_0 : i32, i32
  }
  func.func @transform_11(%arg0: i32) -> (i32, i32, i32) {
    %c0_i32 = arith.constant 0 : i32
    %c0_i32_0 = arith.constant 0 : i32
    %c0_i32_1 = arith.constant 0 : i32
    %c0_i32_2 = arith.constant 0 : i32
    return %c0_i32, %c0_i32_0, %c0_i32_1 : i32, i32, i32
  }
  func.func @transform_12(%arg0: i32) -> (i32, i32) {
    %c0_i32 = arith.constant 0 : i32
    %c0_i32_0 = arith.constant 0 : i32
    %c0_i32_1 = arith.constant 0 : i32
    return %c0_i32, %c0_i32_0 : i32, i32
  }
  func.func @transform_13(%arg0: i32) -> (i32, i32) {
    %c0_i32 = arith.constant 0 : i32
    %c0_i32_0 = arith.constant 0 : i32
    %c0_i32_1 = arith.constant 0 : i32
    return %c0_i32, %c0_i32_0 : i32, i32
  }
  func.func @transform_14(%arg0: i32) -> (i32, i32) {
    %c0_i32 = arith.constant 0 : i32
    %c0_i32_0 = arith.constant 0 : i32
    %c0_i32_1 = arith.constant 0 : i32
    return %c0_i32, %c0_i32_0 : i32, i32
  }
  func.func @transform_15(%arg0: i32) -> (i32, i32) {
    %c0_i32 = arith.constant 0 : i32
    %c0_i32_0 = arith.constant 0 : i32
    %c0_i32_1 = arith.constant 0 : i32
    return %c0_i32, %c0_i32_0 : i32, i32
  }
  func.func @transform_16(%arg0: i32) -> (i32, i32, i32) {
    %c0_i32 = arith.constant 0 : i32
    %c0_i32_0 = arith.constant 0 : i32
    %c0_i32_1 = arith.constant 0 : i32
    return %arg0, %c0_i32, %c0_i32_0 : i32, i32, i32
  }
}

</mosaic_0001>

<llo_original>
// kernel: tpu_custom_call.1
$region0: #{tpu_custom_call.1}
  #allocation0 [shape = 'u32[]', space=smem, size = 0x4, offset = 0x4, fixed_abs, tag = 'smem constant byte address 0x4 - core index']
  #allocation1 [shape = 'u32[144,128]{1,0:T(1,128)}', space=vmem, size = 0x12000, scoped, tag = 'internal scratch']
  %s0 = inlined_call_operand.hbm [shape: bf16[2,16,64], index: 0, kind: input, shape index: {}]
  %s1 = inlined_call_operand.hbm [shape: bf16[18,16], index: 1, kind: input, shape index: {}]
  %s2 = inlined_call_operand.hbm [shape: bf16[64,72], index: 2, kind: input, shape index: {}]
  %s3 = inlined_call_operand.hbm [shape: bf16[3,72,128], index: 3, kind: input, shape index: {}]
  %s4 = inlined_call_operand.hbm [shape: f32[1,128], index: 4, kind: input, shape index: {}]
  %s5 = inlined_call_operand.hbm [shape: bf16[34,16], index: 5, kind: input, shape index: {}]
  %s6 = inlined_call_operand.hbm [shape: bf16[128,272], index: 6, kind: input, shape index: {}]
  %s7 = inlined_call_operand.hbm [shape: bf16[3,272,256], index: 7, kind: input, shape index: {}]
  %s8 = inlined_call_operand.hbm [shape: f32[1,256], index: 8, kind: input, shape index: {}]
  %s9 = inlined_call_operand.hbm [shape: bf16[34,32], index: 9, kind: input, shape index: {}]
  %s10 = inlined_call_operand.hbm [shape: bf16[256,272], index: 10, kind: input, shape index: {}]
  %s11 = inlined_call_operand.hbm [shape: bf16[3,272,256], index: 11, kind: input, shape index: {}]
  %s12 = inlined_call_operand.hbm [shape: f32[1,256], index: 12, kind: input, shape index: {}]
  %s13 = inlined_call_operand.hbm [shape: bf16[32,16], index: 13, kind: input, shape index: {}]
  %s14 = inlined_call_operand.hbm [shape: bf16[64,256], index: 14, kind: input, shape index: {}]
  %s15 = inlined_call_operand.hbm [shape: f32[1,256], index: 15, kind: input, shape index: {}]
  %s16 = inlined_call_operand.hbm [shape: f32[2,32,256], index: 16, kind: output, shape index: {}]
  %s17 = sld [smem:[#allocation0]]
  $region161: #{tpu_custom_call.1} parent=0
    _
  %s19 = ssub.s32 1, %s17
  %s20 = scalar_select 0, %s19, %s17
  $region1: #{tpu_custom_call.1} parent=0
    #allocation2 [shape = 'u8[8192]{0}', space=vmem, size = 0x2000, scoped, tag = 'input window, operand 0']
    #allocation3 [shape = 's32[2]{0}', space=sflag, size = 0x8, scoped, tag = 'scoped memory for tpu_custom_call.1']
    #allocation4 [shape = 's32[2]{0}', space=sflag, size = 0x8, scoped, tag = 'scoped memory for tpu_custom_call.1']
    #allocation5 [shape = 'u8[6144]{0}', space=vmem, size = 0x1800, scoped, tag = 'input window, operand 1, single buffered']
    #allocation6 [shape = 's32[1]{0}', space=sflag, size = 0x4, scoped, tag = 'scoped memory for tpu_custom_call.1']
    #allocation7 [shape = 'u8[16384]{0}', space=vmem, size = 0x4000, scoped, tag = 'input window, operand 2, single buffered']
    #allocation8 [shape = 'u8[55296]{0}', space=vmem, size = 0xd800, scoped, tag = 'input window, operand 3, single buffered']
    #allocation9 [shape = 's32[1]{0}', space=sflag, size = 0x4, scoped, tag = 'scoped memory for tpu_custom_call.1']
    #allocation10 [shape = 'u8[512]{0}', space=vmem, size = 0x400, scoped, tag = 'input window, operand 4, single buffered']
    #allocation11 [shape = 'u8[10240]{0}', space=vmem, size = 0x2800, scoped, tag = 'input window, operand 5, single buffered']
    #allocation12 [shape = 's32[1]{0}', space=sflag, size = 0x4, scoped, tag = 'scoped memory for tpu_custom_call.1']
    #allocation13 [shape = 'u8[98304]{0}', space=vmem, size = 0x18000, scoped, tag = 'input window, operand 6, single buffered']
    #allocation14 [shape = 'u8[417792]{0}', space=vmem, size = 0x66000, scoped, tag = 'input window, operand 7, single buffered']
    #allocation15 [shape = 's32[1]{0}', space=sflag, size = 0x4, scoped, tag = 'scoped memory for tpu_custom_call.1']
    #allocation16 [shape = 'u8[1024]{0}', space=vmem, size = 0x400, scoped, tag = 'input window, operand 8, single buffered']
    #allocation17 [shape = 'u8[10240]{0}', space=vmem, size = 0x2800, scoped, tag = 'input window, operand 9, single buffered']
    #allocation18 [shape = 's32[1]{0}', space=sflag, size = 0x4, scoped, tag = 'scoped memory for tpu_custom_call.1']
    #allocation19 [shape = 'u8[196608]{0}', space=vmem, size = 0x30000, scoped, tag = 'input window, operand 10, single buffered']
    #allocation20 [shape = 'u8[417792]{0}', space=vmem, size = 0x66000, scoped, tag = 'input window, operand 11, single buffered']
    #allocation21 [shape = 's32[1]{0}', space=sflag, size = 0x4, scoped, tag = 'scoped memory for tpu_custom_call.1']
    #allocation22 [shape = 'u8[1024]{0}', space=vmem, size = 0x400, scoped, tag = 'input window, operand 12, single buffered']
    #allocation23 [shape = 'u8[8192]{0}', space=vmem, size = 0x2000, scoped, tag = 'input window, operand 13, single buffered']
    #allocation24 [shape = 's32[1]{0}', space=sflag, size = 0x4, scoped, tag = 'scoped memory for tpu_custom_call.1']
    #allocation25 [shape = 'u8[32768]{0}', space=vmem, size = 0x8000, scoped, tag = 'input window, operand 14, single buffered']
    #allocation26 [shape = 'u8[1024]{0}', space=vmem, size = 0x400, scoped, tag = 'input window, operand 15, single buffered']
    #allocation27 [shape = 's32[1]{0}', space=sflag, size = 0x4, scoped, tag = 'scoped memory for tpu_custom_call.1']
    #allocation28 [shape = 'u8[65536]{0}', space=vmem, size = 0x10000, scoped, tag = 'output window, operand 0']
    %21 = vsyncpa [#allocation3], 0
    %s22 = scalar_lea.sflag [#allocation3], 1
    %23 = vsyncpa %s22, 0
    %24 = vsyncpa [#allocation6], 0
    %25 = vsyncpa [#allocation9], 0
    %26 = vsyncpa [#allocation12], 0
    %27 = vsyncpa [#allocation15], 0
    %28 = vsyncpa [#allocation18], 0
    %29 = vsyncpa [#allocation21], 0
    %30 = vsyncpa [#allocation24], 0
    %31 = vsyncpa [#allocation27], 0
    %32 = vsyncpa [#allocation4], 0
    %s33 = scalar_lea.sflag [#allocation4], 1
    %34 = vsyncpa %s33, 0
    loop: start=0, step=1, limit=4
    $region2: #{tpu_custom_call.1} parent=1 // loop_pre_header
      _
    $region3: #{tpu_custom_call.1} parent=1 // loop_header
      %s36 = sphi 0, %s40
      %p37 = scmp.ge.s32.totalorder %s36, 4
      %s46 = sphi 0, %s48
      %s49 = sphi 0, %s46
      %s50 = sphi 0, %s49
      %s66 = sphi 0, %s50
      %s70 = sphi 0, %s70
      %s72 = sphi 0, %s70
      %s73 = sphi 0, %s72
      %s87 = sphi 0, %s73
      %s91 = sphi 0, %s91
      %s93 = sphi 0, %s91
      %s94 = sphi 0, %s93
      %s108 = sphi 0, %s94
      %s112 = sphi 0, %s112
      %s114 = sphi 0, %s112
      %s115 = sphi 0, %s114
      %s129 = sphi 0, %s115
      %s133 = sphi 0, %s133
      %s135 = sphi 0, %s133
      %s136 = sphi 0, %s135
      %s150 = sphi 0, %s136
      %s154 = sphi 0, %s154
      %s156 = sphi 0, %s154
      %s157 = sphi 0, %s156
      %s171 = sphi 0, %s157
      %s175 = sphi 0, %s175
      %s177 = sphi 0, %s175
      %s178 = sphi 0, %s177
      %s192 = sphi 0, %s178
      %s196 = sphi 0, %s196
      %s198 = sphi 0, %s196
      %s199 = sphi 0, %s198
      %s213 = sphi 0, %s199
      %s217 = sphi 0, %s217
      %s219 = sphi 0, %s217
      %s220 = sphi 0, %s219
      %s234 = sphi 0, %s220
      %s238 = sphi 0, %s238
      %s240 = sphi 0, %s238
      %s241 = sphi 0, %s240
      %s255 = sphi 0, %s241
      %s259 = sphi 0, %s259
      %s261 = sphi 0, %s259
      %s262 = sphi 0, %s261
      %s276 = sphi 0, %s262
      %s280 = sphi 0, %s280
      %s282 = sphi 0, %s280
      %s283 = sphi 0, %s282
      %s297 = sphi 0, %s283
      %s301 = sphi 0, %s301
      %s303 = sphi 0, %s301
      %s304 = sphi 0, %s303
      %s318 = sphi 0, %s304
      %s322 = sphi 0, %s322
      %s324 = sphi 0, %s322
      %s325 = sphi 0, %s324
      %s339 = sphi 0, %s325
      %s343 = sphi 0, %s343
      %s345 = sphi 0, %s343
      %s346 = sphi 0, %s345
      %s360 = sphi 0, %s346
      %s364 = sphi 0, %s364
      %s366 = sphi 0, %s364
      %s367 = sphi 0, %s366
      %s381 = sphi 0, %s367
      %s387 = sphi 0, %s389
      %s390 = sphi 0, %s387
      %s391 = sphi 0, %s390
      %s407 = sphi 0, %s391
    $region4: #{tpu_custom_call.1} parent=1 // loop_header_branch
      %39 = sbr.rel (%p37) target = $region8
    $region5: #{tpu_custom_call.1} parent=1 // loop_body
      %s41 = ssub.s32 %s36, 1
      %s42 = ssub.s32 %s36, 2
      %s43 = sadd.s32 %s36, 1
      %s44 = ssub.s32 %s36, %s43
      %p45 = scmp.eq.s32.totalorder %s44, 0
      %s47 = sadd.s32 %s46, 1
      %s48 = scalar_select %p45, %s46, %s47
      %p51 = pneg %p45
      %p52 = scmp.eq.s32.totalorder %s36, 1
      %p53 = por %p51, %p52
      %p54 = scmp.ne.s32.totalorder %s46, %s49
      %p55 = scmp.eq.s32.totalorder %s36, 0
      %p56 = por %p54, %p55
      %p57 = scmp.ne.s32.totalorder %s46, %s49
      %p58 = scmp.eq.s32.totalorder %s41, 1
      %p59 = por %p57, %p58
      %p60 = scmp.ne.s32.totalorder %s49, %s50
      %p61 = scmp.eq.s32.totalorder %s41, 0
      %p62 = por %p60, %p61
      %p63 = scmp.ne.s32.totalorder %s49, %s50
      %p64 = scmp.eq.s32.totalorder %s42, 1
      %p65 = por %p63, %p64
      %p67 = scmp.ne.s32.totalorder %s50, %s66
      %p68 = scmp.eq.s32.totalorder %s42, 0
      %p69 = por %p67, %p68
      %s71 = sadd.s32 %s70, 1
      %p74 = scmp.eq.s32.totalorder %s36, 1
      %p75 = scmp.ne.s32.totalorder %s70, %s72
      %p76 = scmp.eq.s32.totalorder %s36, 0
      %p77 = por %p75, %p76
      %p78 = scmp.ne.s32.totalorder %s70, %s72
      %p79 = scmp.eq.s32.totalorder %s41, 1
      %p80 = por %p78, %p79
      %p81 = scmp.ne.s32.totalorder %s72, %s73
      %p82 = scmp.eq.s32.totalorder %s41, 0
      %p83 = por %p81, %p82
      %p84 = scmp.ne.s32.totalorder %s72, %s73
      %p85 = scmp.eq.s32.totalorder %s42, 1
      %p86 = por %p84, %p85
      %p88 = scmp.ne.s32.totalorder %s73, %s87
      %p89 = scmp.eq.s32.totalorder %s42, 0
      %p90 = por %p88, %p89
      %s92 = sadd.s32 %s91, 1
      %p95 = scmp.eq.s32.totalorder %s36, 1
      %p96 = scmp.ne.s32.totalorder %s91, %s93
      %p97 = scmp.eq.s32.totalorder %s36, 0
      %p98 = por %p96, %p97
      %p99 = scmp.ne.s32.totalorder %s91, %s93
      %p100 = scmp.eq.s32.totalorder %s41, 1
      %p101 = por %p99, %p100
      %p102 = scmp.ne.s32.totalorder %s93, %s94
      %p103 = scmp.eq.s32.totalorder %s41, 0
      %p104 = por %p102, %p103
      %p105 = scmp.ne.s32.totalorder %s93, %s94
      %p106 = scmp.eq.s32.totalorder %s42, 1
      %p107 = por %p105, %p106
      %p109 = scmp.ne.s32.totalorder %s94, %s108
      %p110 = scmp.eq.s32.totalorder %s42, 0
      %p111 = por %p109, %p110
      %s113 = sadd.s32 %s112, 1
      %p116 = scmp.eq.s32.totalorder %s36, 1
      %p117 = scmp.ne.s32.totalorder %s112, %s114
      %p118 = scmp.eq.s32.totalorder %s36, 0
      %p119 = por %p117, %p118
      %p120 = scmp.ne.s32.totalorder %s112, %s114
      %p121 = scmp.eq.s32.totalorder %s41, 1
      %p122 = por %p120, %p121
      %p123 = scmp.ne.s32.totalorder %s114, %s115
      %p124 = scmp.eq.s32.totalorder %s41, 0
      %p125 = por %p123, %p124
      %p126 = scmp.ne.s32.totalorder %s114, %s115
      %p127 = scmp.eq.s32.totalorder %s42, 1
      %p128 = por %p126, %p127
      %p130 = scmp.ne.s32.totalorder %s115, %s129
      %p131 = scmp.eq.s32.totalorder %s42, 0
      %p132 = por %p130, %p131
      %s134 = sadd.s32 %s133, 1
      %p137 = scmp.eq.s32.totalorder %s36, 1
      %p138 = scmp.ne.s32.totalorder %s133, %s135
      %p139 = scmp.eq.s32.totalorder %s36, 0
      %p140 = por %p138, %p139
      %p141 = scmp.ne.s32.totalorder %s133, %s135
      %p142 = scmp.eq.s32.totalorder %s41, 1
      %p143 = por %p141, %p142
      %p144 = scmp.ne.s32.totalorder %s135, %s136
      %p145 = scmp.eq.s32.totalorder %s41, 0
      %p146 = por %p144, %p145
      %p147 = scmp.ne.s32.totalorder %s135, %s136
      %p148 = scmp.eq.s32.totalorder %s42, 1
      %p149 = por %p147, %p148
      %p151 = scmp.ne.s32.totalorder %s136, %s150
      %p152 = scmp.eq.s32.totalorder %s42, 0
      %p153 = por %p151, %p152
      %s155 = sadd.s32 %s154, 1
      %p158 = scmp.eq.s32.totalorder %s36, 1
      %p159 = scmp.ne.s32.totalorder %s154, %s156
      %p160 = scmp.eq.s32.totalorder %s36, 0
      %p161 = por %p159, %p160
      %p162 = scmp.ne.s32.totalorder %s154, %s156
      %p163 = scmp.eq.s32.totalorder %s41, 1
      %p164 = por %p162, %p163
      %p165 = scmp.ne.s32.totalorder %s156, %s157
      %p166 = scmp.eq.s32.totalorder %s41, 0
      %p167 = por %p165, %p166
      %p168 = scmp.ne.s32.totalorder %s156, %s157
      %p169 = scmp.eq.s32.totalorder %s42, 1
      %p170 = por %p168, %p169
      %p172 = scmp.ne.s32.totalorder %s157, %s171
      %p173 = scmp.eq.s32.totalorder %s42, 0
      %p174 = por %p172, %p173
      %s176 = sadd.s32 %s175, 1
      %p179 = scmp.eq.s32.totalorder %s36, 1
      %p180 = scmp.ne.s32.totalorder %s175, %s177
      %p181 = scmp.eq.s32.totalorder %s36, 0
      %p182 = por %p180, %p181
      %p183 = scmp.ne.s32.totalorder %s175, %s177
      %p184 = scmp.eq.s32.totalorder %s41, 1
      %p185 = por %p183, %p184
      %p186 = scmp.ne.s32.totalorder %s177, %s178
      %p187 = scmp.eq.s32.totalorder %s41, 0
      %p188 = por %p186, %p187
      %p189 = scmp.ne.s32.totalorder %s177, %s178
      %p190 = scmp.eq.s32.totalorder %s42, 1
      %p191 = por %p189, %p190
      %p193 = scmp.ne.s32.totalorder %s178, %s192
      %p194 = scmp.eq.s32.totalorder %s42, 0
      %p195 = por %p193, %p194
      %s197 = sadd.s32 %s196, 1
      %p200 = scmp.eq.s32.totalorder %s36, 1
      %p201 = scmp.ne.s32.totalorder %s196, %s198
      %p202 = scmp.eq.s32.totalorder %s36, 0
      %p203 = por %p201, %p202
      %p204 = scmp.ne.s32.totalorder %s196, %s198
      %p205 = scmp.eq.s32.totalorder %s41, 1
      %p206 = por %p204, %p205
      %p207 = scmp.ne.s32.totalorder %s198, %s199
      %p208 = scmp.eq.s32.totalorder %s41, 0
      %p209 = por %p207, %p208
      %p210 = scmp.ne.s32.totalorder %s198, %s199
      %p211 = scmp.eq.s32.totalorder %s42, 1
      %p212 = por %p210, %p211
      %p214 = scmp.ne.s32.totalorder %s199, %s213
      %p215 = scmp.eq.s32.totalorder %s42, 0
      %p216 = por %p214, %p215
      %s218 = sadd.s32 %s217, 1
      %p221 = scmp.eq.s32.totalorder %s36, 1
      %p222 = scmp.ne.s32.totalorder %s217, %s219
      %p223 = scmp.eq.s32.totalorder %s36, 0
      %p224 = por %p222, %p223
      %p225 = scmp.ne.s32.totalorder %s217, %s219
      %p226 = scmp.eq.s32.totalorder %s41, 1
      %p227 = por %p225, %p226
      %p228 = scmp.ne.s32.totalorder %s219, %s220
      %p229 = scmp.eq.s32.totalorder %s41, 0
      %p230 = por %p228, %p229
      %p231 = scmp.ne.s32.totalorder %s219, %s220
      %p232 = scmp.eq.s32.totalorder %s42, 1
      %p233 = por %p231, %p232
      %p235 = scmp.ne.s32.totalorder %s220, %s234
      %p236 = scmp.eq.s32.totalorder %s42, 0
      %p237 = por %p235, %p236
      %s239 = sadd.s32 %s238, 1
      %p242 = scmp.eq.s32.totalorder %s36, 1
      %p243 = scmp.ne.s32.totalorder %s238, %s240
      %p244 = scmp.eq.s32.totalorder %s36, 0
      %p245 = por %p243, %p244
      %p246 = scmp.ne.s32.totalorder %s238, %s240
      %p247 = scmp.eq.s32.totalorder %s41, 1
      %p248 = por %p246, %p247
      %p249 = scmp.ne.s32.totalorder %s240, %s241
      %p250 = scmp.eq.s32.totalorder %s41, 0
      %p251 = por %p249, %p250
      %p252 = scmp.ne.s32.totalorder %s240, %s241
      %p253 = scmp.eq.s32.totalorder %s42, 1
      %p254 = por %p252, %p253
      %p256 = scmp.ne.s32.totalorder %s241, %s255
      %p257 = scmp.eq.s32.totalorder %s42, 0
      %p258 = por %p256, %p257
      %s260 = sadd.s32 %s259, 1
      %p263 = scmp.eq.s32.totalorder %s36, 1
      %p264 = scmp.ne.s32.totalorder %s259, %s261
      %p265 = scmp.eq.s32.totalorder %s36, 0
      %p266 = por %p264, %p265
      %p267 = scmp.ne.s32.totalorder %s259, %s261
      %p268 = scmp.eq.s32.totalorder %s41, 1
      %p269 = por %p267, %p268
      %p270 = scmp.ne.s32.totalorder %s261, %s262
      %p271 = scmp.eq.s32.totalorder %s41, 0
      %p272 = por %p270, %p271
      %p273 = scmp.ne.s32.totalorder %s261, %s262
      %p274 = scmp.eq.s32.totalorder %s42, 1
      %p275 = por %p273, %p274
      %p277 = scmp.ne.s32.totalorder %s262, %s276
      %p278 = scmp.eq.s32.totalorder %s42, 0
      %p279 = por %p277, %p278
      %s281 = sadd.s32 %s280, 1
      %p284 = scmp.eq.s32.totalorder %s36, 1
      %p285 = scmp.ne.s32.totalorder %s280, %s282
      %p286 = scmp.eq.s32.totalorder %s36, 0
      %p287 = por %p285, %p286
      %p288 = scmp.ne.s32.totalorder %s280, %s282
      %p289 = scmp.eq.s32.totalorder %s41, 1
      %p290 = por %p288, %p289
      %p291 = scmp.ne.s32.totalorder %s282, %s283
      %p292 = scmp.eq.s32.totalorder %s41, 0
      %p293 = por %p291, %p292
      %p294 = scmp.ne.s32.totalorder %s282, %s283
      %p295 = scmp.eq.s32.totalorder %s42, 1
      %p296 = por %p294, %p295
      %p298 = scmp.ne.s32.totalorder %s283, %s297
      %p299 = scmp.eq.s32.totalorder %s42, 0
      %p300 = por %p298, %p299
      %s302 = sadd.s32 %s301, 1
      %p305 = scmp.eq.s32.totalorder %s36, 1
      %p306 = scmp.ne.s32.totalorder %s301, %s303
      %p307 = scmp.eq.s32.totalorder %s36, 0
      %p308 = por %p306, %p307
      %p309 = scmp.ne.s32.totalorder %s301, %s303
      %p310 = scmp.eq.s32.totalorder %s41, 1
      %p311 = por %p309, %p310
      %p312 = scmp.ne.s32.totalorder %s303, %s304
      %p313 = scmp.eq.s32.totalorder %s41, 0
      %p314 = por %p312, %p313
      %p315 = scmp.ne.s32.totalorder %s303, %s304
      %p316 = scmp.eq.s32.totalorder %s42, 1
      %p317 = por %p315, %p316
      %p319 = scmp.ne.s32.totalorder %s304, %s318
      %p320 = scmp.eq.s32.totalorder %s42, 0
      %p321 = por %p319, %p320
      %s323 = sadd.s32 %s322, 1
      %p326 = scmp.eq.s32.totalorder %s36, 1
      %p327 = scmp.ne.s32.totalorder %s322, %s324
      %p328 = scmp.eq.s32.totalorder %s36, 0
      %p329 = por %p327, %p328
      %p330 = scmp.ne.s32.totalorder %s322, %s324
      %p331 = scmp.eq.s32.totalorder %s41, 1
      %p332 = por %p330, %p331
      %p333 = scmp.ne.s32.totalorder %s324, %s325
      %p334 = scmp.eq.s32.totalorder %s41, 0
      %p335 = por %p333, %p334
      %p336 = scmp.ne.s32.totalorder %s324, %s325
      %p337 = scmp.eq.s32.totalorder %s42, 1
      %p338 = por %p336, %p337
      %p340 = scmp.ne.s32.totalorder %s325, %s339
      %p341 = scmp.eq.s32.totalorder %s42, 0
      %p342 = por %p340, %p341
      %s344 = sadd.s32 %s343, 1
      %p347 = scmp.eq.s32.totalorder %s36, 1
      %p348 = scmp.ne.s32.totalorder %s343, %s345
      %p349 = scmp.eq.s32.totalorder %s36, 0
      %p350 = por %p348, %p349
      %p351 = scmp.ne.s32.totalorder %s343, %s345
      %p352 = scmp.eq.s32.totalorder %s41, 1
      %p353 = por %p351, %p352
      %p354 = scmp.ne.s32.totalorder %s345, %s346
      %p355 = scmp.eq.s32.totalorder %s41, 0
      %p356 = por %p354, %p355
      %p357 = scmp.ne.s32.totalorder %s345, %s346
      %p358 = scmp.eq.s32.totalorder %s42, 1
      %p359 = por %p357, %p358
      %p361 = scmp.ne.s32.totalorder %s346, %s360
      %p362 = scmp.eq.s32.totalorder %s42, 0
      %p363 = por %p361, %p362
      %s365 = sadd.s32 %s364, 1
      %p368 = scmp.eq.s32.totalorder %s36, 1
      %p369 = scmp.ne.s32.totalorder %s364, %s366
      %p370 = scmp.eq.s32.totalorder %s36, 0
      %p371 = por %p369, %p370
      %p372 = scmp.ne.s32.totalorder %s364, %s366
      %p373 = scmp.eq.s32.totalorder %s41, 1
      %p374 = por %p372, %p373
      %p375 = scmp.ne.s32.totalorder %s366, %s367
      %p376 = scmp.eq.s32.totalorder %s41, 0
      %p377 = por %p375, %p376
      %p378 = scmp.ne.s32.totalorder %s366, %s367
      %p379 = scmp.eq.s32.totalorder %s42, 1
      %p380 = por %p378, %p379
      %p382 = scmp.ne.s32.totalorder %s367, %s381
      %p383 = scmp.eq.s32.totalorder %s42, 0
      %p384 = por %p382, %p383
      %s385 = ssub.s32 %s36, %s43
      %p386 = scmp.eq.s32.totalorder %s385, 0
      %s388 = sadd.s32 %s387, 1
      %s389 = scalar_select %p386, %s387, %s388
      %p392 = pneg %p386
      %p393 = scmp.eq.s32.totalorder %s36, 1
      %p394 = por %p392, %p393
      %p395 = scmp.ne.s32.totalorder %s387, %s390
      %p396 = scmp.eq.s32.totalorder %s36, 0
      %p397 = por %p395, %p396
      %p398 = scmp.ne.s32.totalorder %s387, %s390
      %p399 = scmp.eq.s32.totalorder %s41, 1
      %p400 = por %p398, %p399
      %p401 = scmp.ne.s32.totalorder %s390, %s391
      %p402 = scmp.eq.s32.totalorder %s41, 0
      %p403 = por %p401, %p402
      %p404 = scmp.ne.s32.totalorder %s390, %s391
      %p405 = scmp.eq.s32.totalorder %s42, 1
      %p406 = por %p404, %p405
      %p408 = scmp.ne.s32.totalorder %s391, %s407
      %p409 = scmp.eq.s32.totalorder %s42, 0
      %p410 = por %p408, %p409
      %p411 = scmp.le.s32.totalorder 1, %s36
      %p412 = scmp.lt.s32.totalorder %s36, 3
      %p413 = pnand %p411, %p412
      %p414 = pneg %p413
      // Predicated region
      $region9: #{tpu_custom_call.1} parent=5 // pred_check
        _
      $region10: #{tpu_custom_call.1} parent=5 // pred_check_branch
        %416 = sbr.rel (%p413) target = $region12
      $region11: #{tpu_custom_call.1} parent=5 // pred_region
        %s417 = ssub.s32 %s36, 1
        // Predicated region
        $region13: #{tpu_custom_call.1} parent=11 // pred_check
          %p418 = pneg %p83
        $region14: #{tpu_custom_call.1} parent=11 // pred_check_branch
          %420 = sbr.rel (%p418) target = $region16
        $region15: #{tpu_custom_call.1} parent=11 // pred_region
          %s422 = ssub.s32 192, 192
          %423 = vsyncadd [#allocation6], %s422
          %s424 = sshll.u32 [#allocation5], 4
          %s425 = int_to_ptr.vmem [resolvable:$true] %s424
          %430 = dma.hbm_to_vmem [thread:$0]  %s1, 192, %s425, [#allocation6], 64, 64, 4
        $region16: #{tpu_custom_call.1} parent=11 // pred_fallthru
          _
        // Predicated region
        $region17: #{tpu_custom_call.1} parent=11 // pred_check
          %p431 = pneg %p104
        $region18: #{tpu_custom_call.1} parent=11 // pred_check_branch
          %433 = sbr.rel (%p431) target = $region20
        $region19: #{tpu_custom_call.1} parent=11 // pred_region
          %s435 = ssub.s32 512, 512
          %436 = vsyncadd [#allocation6], %s435
          %s437 = sshll.u32 [#allocation7], 4
          %s438 = int_to_ptr.vmem [resolvable:$true] %s437
          %443 = dma.hbm_to_vmem [thread:$0]  %s2, 512, %s438, [#allocation6], 64, 64, 4
        $region20: #{tpu_custom_call.1} parent=11 // pred_fallthru
          _
        // Predicated region
        $region21: #{tpu_custom_call.1} parent=11 // pred_check
          %p444 = pneg %p125
        $region22: #{tpu_custom_call.1} parent=11 // pred_check_branch
          %446 = sbr.rel (%p444) target = $region24
        $region23: #{tpu_custom_call.1} parent=11 // pred_region
          %s448 = ssub.s32 1728, 1728
          %449 = vsyncadd [#allocation9], %s448
          %s450 = sshll.u32 [#allocation8], 4
          %s451 = int_to_ptr.vmem [resolvable:$true] %s450
          %456 = dma.hbm_to_vmem [thread:$0]  %s3, 1728, %s451, [#allocation9], 64, 64, 4
        $region24: #{tpu_custom_call.1} parent=11 // pred_fallthru
          _
        // Predicated region
        $region25: #{tpu_custom_call.1} parent=11 // pred_check
          %p457 = pneg %p146
        $region26: #{tpu_custom_call.1} parent=11 // pred_check_branch
          %459 = sbr.rel (%p457) target = $region28
        $region27: #{tpu_custom_call.1} parent=11 // pred_region
          %s461 = ssub.s32 16, 16
          %462 = vsyncadd [#allocation9], %s461
          %s464 = sshll.u32 [#allocation10], 4
          %s465 = int_to_ptr.vmem [resolvable:$true] %s464
          %467 = dma.hbm_to_vmem [thread:$0]  %s4, 16, %s465, [#allocation9]
        $region28: #{tpu_custom_call.1} parent=11 // pred_fallthru
          _
        // Predicated region
        $region29: #{tpu_custom_call.1} parent=11 // pred_check
          %p468 = pneg %p167
        $region30: #{tpu_custom_call.1} parent=11 // pred_check_branch
          %470 = sbr.rel (%p468) target = $region32
        $region31: #{tpu_custom_call.1} parent=11 // pred_region
          %s472 = ssub.s32 320, 320
          %473 = vsyncadd [#allocation12], %s472
          %s474 = sshll.u32 [#allocation11], 4
          %s475 = int_to_ptr.vmem [resolvable:$true] %s474
          %480 = dma.hbm_to_vmem [thread:$0]  %s5, 320, %s475, [#allocation12], 64, 64, 4
        $region32: #{tpu_custom_call.1} parent=11 // pred_fallthru
          _
        // Predicated region
        $region33: #{tpu_custom_call.1} parent=11 // pred_check
          %p481 = pneg %p188
        $region34: #{tpu_custom_call.1} parent=11 // pred_check_branch
          %483 = sbr.rel (%p481) target = $region36
        $region35: #{tpu_custom_call.1} parent=11 // pred_region
          %s485 = ssub.s32 3072, 3072
          %486 = vsyncadd [#allocation12], %s485
          %s487 = sshll.u32 [#allocation13], 4
          %s488 = int_to_ptr.vmem [resolvable:$true] %s487
          %493 = dma.hbm_to_vmem [thread:$0]  %s6, 3072, %s488, [#allocation12], 192, 192, 12
        $region36: #{tpu_custom_call.1} parent=11 // pred_fallthru
          _
        // Predicated region
        $region37: #{tpu_custom_call.1} parent=11 // pred_check
          %p494 = pneg %p209
        $region38: #{tpu_custom_call.1} parent=11 // pred_check_branch
          %496 = sbr.rel (%p494) target = $region40
        $region39: #{tpu_custom_call.1} parent=11 // pred_region
          %s498 = ssub.s32 13056, 13056
          %499 = vsyncadd [#allocation15], %s498
          %s500 = sshll.u32 [#allocation14], 4
          %s501 = int_to_ptr.vmem [resolvable:$true] %s500
          %506 = dma.hbm_to_vmem [thread:$0]  %s7, 13056, %s501, [#allocation15], 128, 128, 8
        $region40: #{tpu_custom_call.1} parent=11 // pred_fallthru
          _
        // Predicated region
        $region41: #{tpu_custom_call.1} parent=11 // pred_check
          %p507 = pneg %p230
        $region42: #{tpu_custom_call.1} parent=11 // pred_check_branch
          %509 = sbr.rel (%p507) target = $region44
        $region43: #{tpu_custom_call.1} parent=11 // pred_region
          %s511 = ssub.s32 32, 32
          %512 = vsyncadd [#allocation15], %s511
          %s514 = sshll.u32 [#allocation16], 4
          %s515 = int_to_ptr.vmem [resolvable:$true] %s514
          %517 = dma.hbm_to_vmem [thread:$0]  %s8, 32, %s515, [#allocation15]
        $region44: #{tpu_custom_call.1} parent=11 // pred_fallthru
          _
        // Predicated region
        $region45: #{tpu_custom_call.1} parent=11 // pred_check
          %p518 = pneg %p251
        $region46: #{tpu_custom_call.1} parent=11 // pred_check_branch
          %520 = sbr.rel (%p518) target = $region48
        $region47: #{tpu_custom_call.1} parent=11 // pred_region
          %s522 = ssub.s32 320, 320
          %523 = vsyncadd [#allocation18], %s522
          %s524 = sshll.u32 [#allocation17], 4
          %s525 = int_to_ptr.vmem [resolvable:$true] %s524
          %530 = dma.hbm_to_vmem [thread:$0]  %s9, 320, %s525, [#allocation18], 64, 64, 4
        $region48: #{tpu_custom_call.1} parent=11 // pred_fallthru
          _
        // Predicated region
        $region49: #{tpu_custom_call.1} parent=11 // pred_check
          %p531 = pneg %p272
        $region50: #{tpu_custom_call.1} parent=11 // pred_check_branch
          %533 = sbr.rel (%p531) target = $region52
        $region51: #{tpu_custom_call.1} parent=11 // pred_region
          %s535 = ssub.s32 6144, 6144
          %536 = vsyncadd [#allocation18], %s535
          %s537 = sshll.u32 [#allocation19], 4
          %s538 = int_to_ptr.vmem [resolvable:$true] %s537
          %543 = dma.hbm_to_vmem [thread:$0]  %s10, 6144, %s538, [#allocation18], 192, 192, 12
        $region52: #{tpu_custom_call.1} parent=11 // pred_fallthru
          _
        // Predicated region
        $region53: #{tpu_custom_call.1} parent=11 // pred_check
          %p544 = pneg %p293
        $region54: #{tpu_custom_call.1} parent=11 // pred_check_branch
          %546 = sbr.rel (%p544) target = $region56
        $region55: #{tpu_custom_call.1} parent=11 // pred_region
          %s548 = ssub.s32 13056, 13056
          %549 = vsyncadd [#allocation21], %s548
          %s550 = sshll.u32 [#allocation20], 4
          %s551 = int_to_ptr.vmem [resolvable:$true] %s550
          %556 = dma.hbm_to_vmem [thread:$0]  %s11, 13056, %s551, [#allocation21], 128, 128, 8
        $region56: #{tpu_custom_call.1} parent=11 // pred_fallthru
          _
        // Predicated region
        $region57: #{tpu_custom_call.1} parent=11 // pred_check
          %p557 = pneg %p314
        $region58: #{tpu_custom_call.1} parent=11 // pred_check_branch
          %559 = sbr.rel (%p557) target = $region60
        $region59: #{tpu_custom_call.1} parent=11 // pred_region
          %s561 = ssub.s32 32, 32
          %562 = vsyncadd [#allocation21], %s561
          %s564 = sshll.u32 [#allocation22], 4
          %s565 = int_to_ptr.vmem [resolvable:$true] %s564
          %567 = dma.hbm_to_vmem [thread:$0]  %s12, 32, %s565, [#allocation21]
        $region60: #{tpu_custom_call.1} parent=11 // pred_fallthru
          _
        // Predicated region
        $region61: #{tpu_custom_call.1} parent=11 // pred_check
          %p568 = pneg %p335
        $region62: #{tpu_custom_call.1} parent=11 // pred_check_branch
          %570 = sbr.rel (%p568) target = $region64
        $region63: #{tpu_custom_call.1} parent=11 // pred_region
          %s572 = ssub.s32 256, 256
          %573 = vsyncadd [#allocation24], %s572
          %s574 = sshll.u32 [#allocation23], 4
          %s575 = int_to_ptr.vmem [resolvable:$true] %s574
          %580 = dma.hbm_to_vmem [thread:$0]  %s13, 256, %s575, [#allocation24], 64, 64, 4
        $region64: #{tpu_custom_call.1} parent=11 // pred_fallthru
          _
        // Predicated region
        $region65: #{tpu_custom_call.1} parent=11 // pred_check
          %p581 = pneg %p356
        $region66: #{tpu_custom_call.1} parent=11 // pred_check_branch
          %583 = sbr.rel (%p581) target = $region68
        $region67: #{tpu_custom_call.1} parent=11 // pred_region
          %s585 = ssub.s32 1024, 1024
          %586 = vsyncadd [#allocation24], %s585
          %s587 = sshll.u32 [#allocation25], 4
          %s588 = int_to_ptr.vmem [resolvable:$true] %s587
          %593 = dma.hbm_to_vmem [thread:$0]  %s14, 1024, %s588, [#allocation24], 128, 128, 8
        $region68: #{tpu_custom_call.1} parent=11 // pred_fallthru
          _
        // Predicated region
        $region69: #{tpu_custom_call.1} parent=11 // pred_check
          %p594 = pneg %p377
        $region70: #{tpu_custom_call.1} parent=11 // pred_check_branch
          %596 = sbr.rel (%p594) target = $region72
        $region71: #{tpu_custom_call.1} parent=11 // pred_region
          %s598 = ssub.s32 32, 32
          %599 = vsyncadd [#allocation27], %s598
          %s601 = sshll.u32 [#allocation26], 4
          %s602 = int_to_ptr.vmem [resolvable:$true] %s601
          %604 = dma.hbm_to_vmem [thread:$0]  %s15, 32, %s602, [#allocation27]
        $region72: #{tpu_custom_call.1} parent=11 // pred_fallthru
          _
      $region12: #{tpu_custom_call.1} parent=5 // pred_fallthru
        _
      %p605 = scmp.lt.s32.totalorder %s36, 2
      // Predicated region
      $region73: #{tpu_custom_call.1} parent=5 // pred_check
        %p606 = pneg %p605
      $region74: #{tpu_custom_call.1} parent=5 // pred_check_branch
        %608 = sbr.rel (%p606) target = $region76
      $region75: #{tpu_custom_call.1} parent=5 // pred_region
        // Predicated region
        $region77: #{tpu_custom_call.1} parent=75 // pred_check
          %p609 = pneg %p56
        $region78: #{tpu_custom_call.1} parent=75 // pred_check_branch
          %611 = sbr.rel (%p609) target = $region80
        $region79: #{tpu_custom_call.1} parent=75 // pred_region
          %s612 = sand.u32 %s46, 1
          %s613 = scalar_lea.sflag [#allocation3], %s612
          %s614 = sand.u32 %s46, 1
          %s615 = smul.addr %s614, 8
          %s616 = scalar_lea.vmem [#allocation2], %s615
          %s618 = ssub.s32 128, 128
          %619 = vsyncadd %s613, %s618
          %s620 = smul.addr %s36, 2
          %s621 = smul.addr %s620, 64
          %s622 = scalar_lea.hbm %s0, %s621
          %s623 = sshll.u32 %s616, 4
          %s624 = int_to_ptr.vmem [resolvable:$true] %s623
          %629 = dma.hbm_to_vmem [thread:$0]  %s622, 128, %s624, %s613, 64, 64, 4
        $region80: #{tpu_custom_call.1} parent=75 // pred_fallthru
          _
      $region76: #{tpu_custom_call.1} parent=5 // pred_fallthru
        _
      %p630 = scmp.le.s32.totalorder 1, %s36
      %p631 = scmp.lt.s32.totalorder %s36, 3
      %p632 = pnand %p630, %p631
      %p633 = pneg %p632
      // Predicated region
      $region81: #{tpu_custom_call.1} parent=5 // pred_check
        _
      $region82: #{tpu_custom_call.1} parent=5 // pred_check_branch
        %635 = sbr.rel (%p632) target = $region84
      $region83: #{tpu_custom_call.1} parent=5 // pred_region
        %s636 = ssub.s32 %s36, 1
        %s637 = sand.u32 %s49, 1
        %s638 = scalar_lea.sflag [#allocation3], %s637
        %s639 = sand.u32 %s49, 1
        %s640 = smul.addr %s639, 8
        %s641 = scalar_lea.vmem [#allocation2], %s640
        // Predicated region
        $region85: #{tpu_custom_call.1} parent=83 // pred_check
          %p642 = pneg %p62
        $region86: #{tpu_custom_call.1} parent=83 // pred_check_branch
          %644 = sbr.rel (%p642) target = $region88
        $region87: #{tpu_custom_call.1} parent=83 // pred_region
          %645 = dma.done %s638, 128
        $region88: #{tpu_custom_call.1} parent=83 // pred_fallthru
          _
        // Predicated region
        $region89: #{tpu_custom_call.1} parent=83 // pred_check
          %p646 = pneg %p83
        $region90: #{tpu_custom_call.1} parent=83 // pred_check_branch
          %648 = sbr.rel (%p646) target = $region92
        $region91: #{tpu_custom_call.1} parent=83 // pred_region
          %649 = dma.done [#allocation6], 192
        $region92: #{tpu_custom_call.1} parent=83 // pred_fallthru
          _
        // Predicated region
        $region93: #{tpu_custom_call.1} parent=83 // pred_check
          %p650 = pneg %p104
        $region94: #{tpu_custom_call.1} parent=83 // pred_check_branch
          %652 = sbr.rel (%p650) target = $region96
        $region95: #{tpu_custom_call.1} parent=83 // pred_region
          %653 = dma.done [#allocation6], 512
        $region96: #{tpu_custom_call.1} parent=83 // pred_fallthru
          _
        // Predicated region
        $region97: #{tpu_custom_call.1} parent=83 // pred_check
          %p654 = pneg %p125
        $region98: #{tpu_custom_call.1} parent=83 // pred_check_branch
          %656 = sbr.rel (%p654) target = $region100
        $region99: #{tpu_custom_call.1} parent=83 // pred_region
          %657 = dma.done [#allocation9], 1728
        $region100: #{tpu_custom_call.1} parent=83 // pred_fallthru
          _
        // Predicated region
        $region101: #{tpu_custom_call.1} parent=83 // pred_check
          %p658 = pneg %p146
        $region102: #{tpu_custom_call.1} parent=83 // pred_check_branch
          %660 = sbr.rel (%p658) target = $region104
        $region103: #{tpu_custom_call.1} parent=83 // pred_region
          %661 = dma.done [#allocation9], 16
        $region104: #{tpu_custom_call.1} parent=83 // pred_fallthru
          _
        // Predicated region
        $region105: #{tpu_custom_call.1} parent=83 // pred_check
          %p662 = pneg %p167
        $region106: #{tpu_custom_call.1} parent=83 // pred_check_branch
          %664 = sbr.rel (%p662) target = $region108
        $region107: #{tpu_custom_call.1} parent=83 // pred_region
          %665 = dma.done [#allocation12], 320
        $region108: #{tpu_custom_call.1} parent=83 // pred_fallthru
          _
        // Predicated region
        $region109: #{tpu_custom_call.1} parent=83 // pred_check
          %p666 = pneg %p188
        $region110: #{tpu_custom_call.1} parent=83 // pred_check_branch
          %668 = sbr.rel (%p666) target = $region112
        $region111: #{tpu_custom_call.1} parent=83 // pred_region
          %669 = dma.done [#allocation12], 3072
        $region112: #{tpu_custom_call.1} parent=83 // pred_fallthru
          _
        // Predicated region
        $region113: #{tpu_custom_call.1} parent=83 // pred_check
          %p670 = pneg %p209
        $region114: #{tpu_custom_call.1} parent=83 // pred_check_branch
          %672 = sbr.rel (%p670) target = $region116
        $region115: #{tpu_custom_call.1} parent=83 // pred_region
          %673 = dma.done [#allocation15], 13056
        $region116: #{tpu_custom_call.1} parent=83 // pred_fallthru
          _
        // Predicated region
        $region117: #{tpu_custom_call.1} parent=83 // pred_check
          %p674 = pneg %p230
        $region118: #{tpu_custom_call.1} parent=83 // pred_check_branch
          %676 = sbr.rel (%p674) target = $region120
        $region119: #{tpu_custom_call.1} parent=83 // pred_region
          %677 = dma.done [#allocation15], 32
        $region120: #{tpu_custom_call.1} parent=83 // pred_fallthru
          _
        // Predicated region
        $region121: #{tpu_custom_call.1} parent=83 // pred_check
          %p678 = pneg %p251
        $region122: #{tpu_custom_call.1} parent=83 // pred_check_branch
          %680 = sbr.rel (%p678) target = $region124
        $region123: #{tpu_custom_call.1} parent=83 // pred_region
          %681 = dma.done [#allocation18], 320
        $region124: #{tpu_custom_call.1} parent=83 // pred_fallthru
          _
        // Predicated region
        $region125: #{tpu_custom_call.1} parent=83 // pred_check
          %p682 = pneg %p272
        $region126: #{tpu_custom_call.1} parent=83 // pred_check_branch
          %684 = sbr.rel (%p682) target = $region128
        $region127: #{tpu_custom_call.1} parent=83 // pred_region
          %685 = dma.done [#allocation18], 6144
        $region128: #{tpu_custom_call.1} parent=83 // pred_fallthru
          _
        // Predicated region
        $region129: #{tpu_custom_call.1} parent=83 // pred_check
          %p686 = pneg %p293
        $region130: #{tpu_custom_call.1} parent=83 // pred_check_branch
          %688 = sbr.rel (%p686) target = $region132
        $region131: #{tpu_custom_call.1} parent=83 // pred_region
          %689 = dma.done [#allocation21], 13056
        $region132: #{tpu_custom_call.1} parent=83 // pred_fallthru
          _
        // Predicated region
        $region133: #{tpu_custom_call.1} parent=83 // pred_check
          %p690 = pneg %p314
        $region134: #{tpu_custom_call.1} parent=83 // pred_check_branch
          %692 = sbr.rel (%p690) target = $region136
        $region135: #{tpu_custom_call.1} parent=83 // pred_region
          %693 = dma.done [#allocation21], 32
        $region136: #{tpu_custom_call.1} parent=83 // pred_fallthru
          _
        // Predicated region
        $region137: #{tpu_custom_call.1} parent=83 // pred_check
          %p694 = pneg %p335
        $region138: #{tpu_custom_call.1} parent=83 // pred_check_branch
          %696 = sbr.rel (%p694) target = $region140
        $region139: #{tpu_custom_call.1} parent=83 // pred_region
          %697 = dma.done [#allocation24], 256
        $region140: #{tpu_custom_call.1} parent=83 // pred_fallthru
          _
        // Predicated region
        $region141: #{tpu_custom_call.1} parent=83 // pred_check
          %p698 = pneg %p356
        $region142: #{tpu_custom_call.1} parent=83 // pred_check_branch
          %700 = sbr.rel (%p698) target = $region144
        $region143: #{tpu_custom_call.1} parent=83 // pred_region
          %701 = dma.done [#allocation24], 1024
        $region144: #{tpu_custom_call.1} parent=83 // pred_fallthru
          _
        // Predicated region
        $region145: #{tpu_custom_call.1} parent=83 // pred_check
          %p702 = pneg %p377
        $region146: #{tpu_custom_call.1} parent=83 // pred_check_branch
          %704 = sbr.rel (%p702) target = $region148
        $region147: #{tpu_custom_call.1} parent=83 // pred_region
          %705 = dma.done [#allocation27], 32
        $region148: #{tpu_custom_call.1} parent=83 // pred_fallthru
          _
        %s706 = sand.u32 %s49, 1
        %s707 = scalar_lea.sflag [#allocation3], %s706
        %s708 = sand.u32 %s49, 1
        %s709 = smul.addr %s708, 8
        %s710 = scalar_lea.vmem [#allocation2], %s709
        %p711 = pneg %p62
        %p712 = pneg %p59
        %p713 = pneg %p83
        %p714 = pneg %p80
        %p715 = pneg %p104
        %p716 = pneg %p101
        %p717 = pneg %p125
        %p718 = pneg %p122
        %p719 = pneg %p146
        %p720 = pneg %p143
        %p721 = pneg %p167
        %p722 = pneg %p164
        %p723 = pneg %p188
        %p724 = pneg %p185
        %p725 = pneg %p209
        %p726 = pneg %p206
        %p727 = pneg %p230
        %p728 = pneg %p227
        %p729 = pneg %p251
        %p730 = pneg %p248
        %p731 = pneg %p272
        %p732 = pneg %p269
        %p733 = pneg %p293
        %p734 = pneg %p290
        %p735 = pneg %p314
        %p736 = pneg %p311
        %p737 = pneg %p335
        %p738 = pneg %p332
        %p739 = pneg %p356
        %p740 = pneg %p353
        %p741 = pneg %p377
        %p742 = pneg %p374
        %p743 = pneg %p403
        %p744 = pneg %p400
        %s745 = sand.u32 %s390, 1
        %s746 = scalar_lea.sflag [#allocation4], %s745
        %s747 = sand.u32 %s390, 1
        %s748 = smul.addr %s747, 64
        %s749 = scalar_lea.vmem [#allocation28], %s748
        %v751 = vld [vmem:[%s641] sm:$0xf]
        %v752 = vld [vmem:[%s641 + $0x4] sm:$0xf]
        %v753 = vld [vmem:[#allocation7] sm:$0xf]
        %v754 = vld [vmem:[#allocation7 + $0x4] sm:$0xf]
        %v755 = vld [vmem:[#allocation7 + $0x8] sm:$0xf]
        %v756 = vld [vmem:[#allocation7 + $0xc] sm:$0xf]
        %v757 = vld [vmem:[#allocation7 + $0x10] sm:$0xf]
        %v758 = vld [vmem:[#allocation7 + $0x14] sm:$0xf]
        %v759 = vld [vmem:[#allocation7 + $0x18] sm:$0xf]
        %v760 = vld [vmem:[#allocation7 + $0x1c] sm:$0xf]
        %v763 = vunpack.c.l.b16 %v751
        %v764 = vunpack.c.l.b16 %v752
        %v765 = vpack.c.b16 %v764, %v763
        %v774 = vunpack.c.l.b16 %v753
        %v775 = vunpack.c.l.b16 %v754
        %v776 = vunpack.c.l.b16 %v755
        %v777 = vunpack.c.l.b16 %v756
        %v778 = vunpack.c.l.b16 %v757
        %v779 = vunpack.c.l.b16 %v758
        %v780 = vunpack.c.l.b16 %v759
        %v781 = vunpack.c.l.b16 %v760
        %v782 = vpack.c.b16 %v775, %v774
        %v783 = vpack.c.b16 %v777, %v776
        %v784 = vpack.c.b16 %v779, %v778
        %v785 = vpack.c.b16 %v781, %v780
        %vm790 = vcmask 523264
        %v792 = vsel %vm790, %v765, 0
        %794 = vmatprep.subr.bf16.mxu0 0
        %795 = vmatpush1.bf16.msra.mxu0 %v782
        %796 = vmatprep.subr.bf16.mxu0 0
        %797 = vmatpush1.bf16.msra.mxu0 %v783
        %798 = vmatprep.subr.bf16.mxu0 0
        %799 = vmatpush1.bf16.msra.mxu0 %v784
        %800 = vmatprep.subr.bf16.mxu0 0
        %801 = vmatpush1.bf16.msra.mxu0 %v785
        %802 = vmatprep.subr.bf16.mxu0 0
        %803 = vmatpush1.bf16.msra.mxu0 0
        %804 = vmatprep.subr.bf16.mxu0 0
        %805 = vmatpush1.bf16.msra.mxu0 0
        %806 = vmatprep.subr.bf16.mxu0 0
        %807 = vmatpush1.bf16.msra.mxu0 0
        %808 = vmatprep.subr.bf16.mxu0 0
        %809 = vmatpush1.bf16.msra.mxu0 0
        %810 = vmatprep.subr.bf16.mxu0 0
        %811 = vmatpush1.bf16.msra.mxu0 0
        %812 = vmatprep.subr.bf16.mxu0 0
        %813 = vmatpush1.bf16.msra.mxu0 0
        %814 = vmatprep.subr.bf16.mxu0 0
        %815 = vmatpush1.bf16.msra.mxu0 0
        %816 = vmatprep.subr.bf16.mxu0 0
        %817 = vmatpush1.bf16.msra.mxu0 0
        %818 = vmatprep.subr.bf16.mxu0 0
        %819 = vmatpush1.bf16.msra.mxu0 0
        %820 = vmatprep.subr.bf16.mxu0 0
        %821 = vmatpush1.bf16.msra.mxu0 0
        %822 = vmatprep.subr.bf16.mxu0 0
        %823 = vmatpush1.bf16.msra.mxu0 0
        %824 = vmatprep.subr.bf16.mxu0 0
        %825 = vmatpush1.bf16.msra.mxu0 0
        %826 = vmatprep.mubr.bf16.mxu0 0
        %827 = vmatmul.mubr.bf16.gmra.mrb[0].mxu0 %v792
        %v828 = vpop.f32.mrb[0].mxu0
        %v829 = vadd.f32 0.0, %v828
        %v830 = vpop.f32.mrb[0].mxu0
        %v831 = vpop.f32.mrb[0].mxu0
        %v832 = vadd.f32 0.0, %v831
        %v833 = vpop.f32.mrb[0].mxu0
        %834 = vdwg.mxu0
        %v835 = vld [vmem:[#allocation5] sm:$0xf]
        %v836 = vld [vmem:[#allocation5 + $0x4] sm:$0xf]
        %v837 = vld [vmem:[#allocation5 + $0x8] sm:$0x1]
        %v838 = vpack.c.bf16 %v832, %v829
        %v842 = vunpack.c.l.b16 %v835
        %v843 = vunpack.c.l.b16 %v836
        %v844 = vunpack.c.l.b16 %v837
        %v845 = vpack.c.b16 %v843, %v842
        %v846 = vpack.c.b16 %v844, %v844
        %vm847 = vcmask 130048
        %v849 = vsel %vm847, %v845, 0
        %v852 = vsel %vm847, %v846, 0
        %854 = vmatprep.subr.bf16.mxu0 0
        %855 = vmatpush1.bf16.msra.mxu0 %v838
        %856 = vmatprep.subr.bf16.mxu0 0
        %857 = vmatpush1.bf16.msra.mxu0 0
        %858 = vmatprep.subr.bf16.mxu0 0
        %859 = vmatpush1.bf16.msra.mxu0 0
        %860 = vmatprep.subr.bf16.mxu0 0
        %861 = vmatpush1.bf16.msra.mxu0 0
        %862 = vmatprep.subr.bf16.mxu0 0
        %863 = vmatpush1.bf16.msra.mxu0 0
        %864 = vmatprep.subr.bf16.mxu0 0
        %865 = vmatpush1.bf16.msra.mxu0 0
        %866 = vmatprep.subr.bf16.mxu0 0
        %867 = vmatpush1.bf16.msra.mxu0 0
        %868 = vmatprep.subr.bf16.mxu0 0
        %869 = vmatpush1.bf16.msra.mxu0 0
        %870 = vmatprep.subr.bf16.mxu0 0
        %871 = vmatpush1.bf16.msra.mxu0 0
        %872 = vmatprep.subr.bf16.mxu0 0
        %873 = vmatpush1.bf16.msra.mxu0 0
        %874 = vmatprep.subr.bf16.mxu0 0
        %875 = vmatpush1.bf16.msra.mxu0 0
        %876 = vmatprep.subr.bf16.mxu0 0
        %877 = vmatpush1.bf16.msra.mxu0 0
        %878 = vmatprep.subr.bf16.mxu0 0
        %879 = vmatpush1.bf16.msra.mxu0 0
        %880 = vmatprep.subr.bf16.mxu0 0
        %881 = vmatpush1.bf16.msra.mxu0 0
        %882 = vmatprep.subr.bf16.mxu0 0
        %883 = vmatpush1.bf16.msra.mxu0 0
        %884 = vmatprep.subr.bf16.mxu0 0
        %885 = vmatpush1.bf16.msra.mxu0 0
        %886 = vmatprep.mubr.bf16.mxu0 0
        %887 = vmatmul.mubr.bf16.gmra.mrb[0].mxu0 %v849
        %v888 = vpop.f32.mrb[0].mxu0
        %v889 = vadd.f32 0.0, %v888
        %v890 = vpop.f32.mrb[0].mxu0
        %v891 = vpop.f32.mrb[0].mxu0
        %v892 = vadd.f32 0.0, %v891
        %v893 = vpop.f32.mrb[0].mxu0
        %894 = vmatprep.mubr.bf16.mxu0 0
        %895 = vmatmul.mubr.bf16.gmra.mrb[0].mxu0 %v852
        %v896 = vpop.f32.mrb[0].mxu0
        %v897 = vadd.f32 0.0, %v896
        %v898 = vpop.f32.mrb[0].mxu0
        %v899 = vpop.f32.mrb[0].mxu0
        %v900 = vpop.f32.mrb[0].mxu0
        %901 = vdwg.mxu0
        %v902 = vpack.c.bf16 %v892, %v889
        %v903 = vld [vmem:[#allocation8] sm:$0xf]
        %v904 = vld [vmem:[#allocation8 + $0x4] sm:$0xf]
        %v905 = vld [vmem:[#allocation8 + $0x8] sm:$0xf]
        %v906 = vld [vmem:[#allocation8 + $0xc] sm:$0xf]
        %v907 = vld [vmem:[#allocation8 + $0x10] sm:$0xf]
        %v908 = vld [vmem:[#allocation8 + $0x14] sm:$0xf]
        %v909 = vld [vmem:[#allocation8 + $0x18] sm:$0xf]
        %v910 = vld [vmem:[#allocation8 + $0x1c] sm:$0xf]
        %v911 = vld [vmem:[#allocation8 + $0x20] sm:$0xf]
        %v912 = vpack.c.bf16 %v897, %v897
        %s913 = scalar_lea.vmem [#allocation8], 36
        %v914 = vld [vmem:[%s913] sm:$0xf]
        %v915 = vld [vmem:[%s913 + $0x4] sm:$0xf]
        %v916 = vld [vmem:[%s913 + $0x8] sm:$0xf]
        %v917 = vld [vmem:[%s913 + $0xc] sm:$0xf]
        %v918 = vld [vmem:[%s913 + $0x10] sm:$0xf]
        %v919 = vld [vmem:[%s913 + $0x14] sm:$0xf]
        %v920 = vld [vmem:[%s913 + $0x18] sm:$0xf]
        %v921 = vld [vmem:[%s913 + $0x1c] sm:$0xf]
        %v922 = vld [vmem:[%s913 + $0x20] sm:$0xf]
        %vm923 = vsmask.f32 7424
        %v925 = vshrl.u32 %v902, 16
        %v927 = vshll.u32 %v902, 16
        %v929 = vrot.slane %v927, 1
        %v930 = vor.u32 %v925, %v929
        %v932 = vshll.u32 %v912, 16
        %v934 = vrot.slane %v932, 1
        %v935 = vsel %vm923, %v930, %v934
        %v945 = vunpack.c.l.b16 %v914
        %v946 = vunpack.c.l.b16 %v915
        %v947 = vunpack.c.l.b16 %v916
        %v948 = vunpack.c.l.b16 %v917
        %v949 = vunpack.c.l.b16 %v918
        %v950 = vunpack.c.l.b16 %v919
        %v951 = vunpack.c.l.b16 %v920
        %v952 = vunpack.c.l.b16 %v921
        %v953 = vunpack.c.l.b16 %v922
        %v954 = vpack.c.b16 %v946, %v945
        %v955 = vpack.c.b16 %v948, %v947
        %v956 = vpack.c.b16 %v950, %v949
        %v957 = vpack.c.b16 %v952, %v951
        %v958 = vpack.c.b16 %v953, %v953
        %vm963 = vcmask 588800
        %v965 = vsel %vm963, %v935, 0
        %vm967 = vcmask 1043456
        %v969 = vsel %vm967, %v958, 0
        %971 = vmatprep.subr.bf16.mxu0 0
        %972 = vmatpush1.bf16.msra.mxu0 %v954
        %973 = vmatprep.subr.bf16.mxu0 0
        %974 = vmatpush1.bf16.msra.mxu0 %v955
        %975 = vmatprep.subr.bf16.mxu0 0
        %976 = vmatpush1.bf16.msra.mxu0 %v956
        %977 = vmatprep.subr.bf16.mxu0 0
        %978 = vmatpush1.bf16.msra.mxu0 %v957
        %979 = vmatprep.subr.bf16.mxu0 0
        %980 = vmatpush1.bf16.msra.mxu0 %v969
        %981 = vmatprep.subr.bf16.mxu0 0
        %982 = vmatpush1.bf16.msra.mxu0 0
        %983 = vmatprep.subr.bf16.mxu0 0
        %984 = vmatpush1.bf16.msra.mxu0 0
        %985 = vmatprep.subr.bf16.mxu0 0
        %986 = vmatpush1.bf16.msra.mxu0 0
        %987 = vmatprep.subr.bf16.mxu0 0
        %988 = vmatpush1.bf16.msra.mxu0 0
        %989 = vmatprep.subr.bf16.mxu0 0
        %990 = vmatpush1.bf16.msra.mxu0 0
        %991 = vmatprep.subr.bf16.mxu0 0
        %992 = vmatpush1.bf16.msra.mxu0 0
        %993 = vmatprep.subr.bf16.mxu0 0
        %994 = vmatpush1.bf16.msra.mxu0 0
        %995 = vmatprep.subr.bf16.mxu0 0
        %996 = vmatpush1.bf16.msra.mxu0 0
        %997 = vmatprep.subr.bf16.mxu0 0
        %998 = vmatpush1.bf16.msra.mxu0 0
        %999 = vmatprep.subr.bf16.mxu0 0
        %1000 = vmatpush1.bf16.msra.mxu0 0
        %1001 = vmatprep.subr.bf16.mxu0 0
        %1002 = vmatpush1.bf16.msra.mxu0 0
        %1003 = vmatprep.mubr.bf16.mxu0 0
        %1004 = vmatmul.mubr.bf16.gmra.mrb[0].mxu0 %v965
        %v1005 = vpop.f32.mrb[0].mxu0
        %v1006 = vadd.f32 0.0, %v1005
        %v1007 = vpop.f32.mrb[0].mxu0
        %v1008 = vpop.f32.mrb[0].mxu0
        %v1009 = vadd.f32 0.0, %v1008
        %v1010 = vpop.f32.mrb[0].mxu0
        %1011 = vdwg.mxu0
        %v1021 = vunpack.c.l.b16 %v903
        %v1022 = vunpack.c.l.b16 %v904
        %v1023 = vunpack.c.l.b16 %v905
        %v1024 = vunpack.c.l.b16 %v906
        %v1025 = vunpack.c.l.b16 %v907
        %v1026 = vunpack.c.l.b16 %v908
        %v1027 = vunpack.c.l.b16 %v909
        %v1028 = vunpack.c.l.b16 %v910
        %v1029 = vunpack.c.l.b16 %v911
        %v1030 = vpack.c.b16 %v1022, %v1021
        %v1031 = vpack.c.b16 %v1024, %v1023
        %v1032 = vpack.c.b16 %v1026, %v1025
        %v1033 = vpack.c.b16 %v1028, %v1027
        %v1034 = vpack.c.b16 %v1029, %v1029
        %v1039 = vsel %vm963, %v902, 0
        %v1042 = vsel %vm967, %v1034, 0
        %1044 = vmatprep.subr.bf16.mxu0 0
        %1045 = vmatpush1.bf16.msra.mxu0 %v1030
        %1046 = vmatprep.subr.bf16.mxu0 0
        %1047 = vmatpush1.bf16.msra.mxu0 %v1031
        %1048 = vmatprep.subr.bf16.mxu0 0
        %1049 = vmatpush1.bf16.msra.mxu0 %v1032
        %1050 = vmatprep.subr.bf16.mxu0 0
        %1051 = vmatpush1.bf16.msra.mxu0 %v1033
        %1052 = vmatprep.subr.bf16.mxu0 0
        %1053 = vmatpush1.bf16.msra.mxu0 %v1042
        %1054 = vmatprep.subr.bf16.mxu0 0
        %1055 = vmatpush1.bf16.msra.mxu0 0
        %1056 = vmatprep.subr.bf16.mxu0 0
        %1057 = vmatpush1.bf16.msra.mxu0 0
        %1058 = vmatprep.subr.bf16.mxu0 0
        %1059 = vmatpush1.bf16.msra.mxu0 0
        %1060 = vmatprep.subr.bf16.mxu0 0
        %1061 = vmatpush1.bf16.msra.mxu0 0
        %1062 = vmatprep.subr.bf16.mxu0 0
        %1063 = vmatpush1.bf16.msra.mxu0 0
        %1064 = vmatprep.subr.bf16.mxu0 0
        %1065 = vmatpush1.bf16.msra.mxu0 0
        %1066 = vmatprep.subr.bf16.mxu0 0
        %1067 = vmatpush1.bf16.msra.mxu0 0
        %1068 = vmatprep.subr.bf16.mxu0 0
        %1069 = vmatpush1.bf16.msra.mxu0 0
        %1070 = vmatprep.subr.bf16.mxu0 0
        %1071 = vmatpush1.bf16.msra.mxu0 0
        %1072 = vmatprep.subr.bf16.mxu0 0
        %1073 = vmatpush1.bf16.msra.mxu0 0
        %1074 = vmatprep.subr.bf16.mxu0 0
        %1075 = vmatpush1.bf16.msra.mxu0 0
        %1076 = vmatprep.mubr.bf16.mxu0 0
        %1077 = vmatmul.mubr.bf16.gmra.mrb[0].mxu0 %v1039
        %v1078 = vpop.f32.mrb[0].mxu0
        %v1079 = vadd.f32 %v1006, %v1078
        %v1080 = vpop.f32.mrb[0].mxu0
        %v1081 = vpop.f32.mrb[0].mxu0
        %v1082 = vadd.f32 %v1009, %v1081
        %v1083 = vpop.f32.mrb[0].mxu0
        %1084 = vdwg.mxu0
        %s1085 = scalar_lea.vmem [#allocation8], 72
        %v1086 = vld [vmem:[%s1085] sm:$0xf]
        %v1087 = vld [vmem:[%s1085 + $0x4] sm:$0xf]
        %v1088 = vld [vmem:[%s1085 + $0x8] sm:$0xf]
        %v1089 = vld [vmem:[%s1085 + $0xc] sm:$0xf]
        %v1090 = vld [vmem:[%s1085 + $0x10] sm:$0xf]
        %v1091 = vld [vmem:[%s1085 + $0x14] sm:$0xf]
        %v1092 = vld [vmem:[%s1085 + $0x18] sm:$0xf]
        %v1093 = vld [vmem:[%s1085 + $0x1c] sm:$0xf]
        %v1094 = vld [vmem:[%s1085 + $0x20] sm:$0xf]
        %vm1097 = vcmask 1046528
        %v1098 = vrot.slane %v902, 1
        %v1099 = vrot.slane %v912, 1
        %v1100 = vsel %vm1097, %v1098, %v1099
        %v1110 = vunpack.c.l.b16 %v1086
        %v1111 = vunpack.c.l.b16 %v1087
        %v1112 = vunpack.c.l.b16 %v1088
        %v1113 = vunpack.c.l.b16 %v1089
        %v1114 = vunpack.c.l.b16 %v1090
        %v1115 = vunpack.c.l.b16 %v1091
        %v1116 = vunpack.c.l.b16 %v1092
        %v1117 = vunpack.c.l.b16 %v1093
        %v1118 = vunpack.c.l.b16 %v1094
        %v1119 = vpack.c.b16 %v1111, %v1110
        %v1120 = vpack.c.b16 %v1113, %v1112
        %v1121 = vpack.c.b16 %v1115, %v1114
        %v1122 = vpack.c.b16 %v1117, %v1116
        %v1123 = vpack.c.b16 %v1118, %v1118
        %v1129 = vsel %vm963, %v1100, 0
        %v1132 = vsel %vm967, %v1123, 0
        %1134 = vmatprep.subr.bf16.mxu0 0
        %1135 = vmatpush1.bf16.msra.mxu0 %v1119
        %1136 = vmatprep.subr.bf16.mxu0 0
        %1137 = vmatpush1.bf16.msra.mxu0 %v1120
        %1138 = vmatprep.subr.bf16.mxu0 0
        %1139 = vmatpush1.bf16.msra.mxu0 %v1121
        %1140 = vmatprep.subr.bf16.mxu0 0
        %1141 = vmatpush1.bf16.msra.mxu0 %v1122
        %1142 = vmatprep.subr.bf16.mxu0 0
        %1143 = vmatpush1.bf16.msra.mxu0 %v1132
        %1144 = vmatprep.subr.bf16.mxu0 0
        %1145 = vmatpush1.bf16.msra.mxu0 0
        %1146 = vmatprep.subr.bf16.mxu0 0
        %1147 = vmatpush1.bf16.msra.mxu0 0
        %1148 = vmatprep.subr.bf16.mxu0 0
        %1149 = vmatpush1.bf16.msra.mxu0 0
        %1150 = vmatprep.subr.bf16.mxu0 0
        %1151 = vmatpush1.bf16.msra.mxu0 0
        %1152 = vmatprep.subr.bf16.mxu0 0
        %1153 = vmatpush1.bf16.msra.mxu0 0
        %1154 = vmatprep.subr.bf16.mxu0 0
        %1155 = vmatpush1.bf16.msra.mxu0 0
        %1156 = vmatprep.subr.bf16.mxu0 0
        %1157 = vmatpush1.bf16.msra.mxu0 0
        %1158 = vmatprep.subr.bf16.mxu0 0
        %1159 = vmatpush1.bf16.msra.mxu0 0
        %1160 = vmatprep.subr.bf16.mxu0 0
        %1161 = vmatpush1.bf16.msra.mxu0 0
        %1162 = vmatprep.subr.bf16.mxu0 0
        %1163 = vmatpush1.bf16.msra.mxu0 0
        %1164 = vmatprep.subr.bf16.mxu0 0
        %1165 = vmatpush1.bf16.msra.mxu0 0
        %1166 = vmatprep.mubr.bf16.mxu0 0
        %1167 = vmatmul.mubr.bf16.gmra.mrb[0].mxu0 %v1129
        %v1168 = vpop.f32.mrb[0].mxu0
        %v1169 = vadd.f32 0.0, %v1168
        %v1170 = vpop.f32.mrb[0].mxu0
        %v1171 = vpop.f32.mrb[0].mxu0
        %v1172 = vadd.f32 0.0, %v1171
        %v1173 = vpop.f32.mrb[0].mxu0
        %1174 = vdwg.mxu0
        %v1175 = vadd.f32 %v1079, %v1169
        %v1176 = vadd.f32 %v1082, %v1172
        %v1177 = vld [vmem:[#allocation10] sm:$0x1]
        %v1179 = vlaneseq
        %v1180 = vshrl.u32 %v1179, 7
        %v1181 = vsub.s32 0, %v1180
        %v1182 = vrot.slane %v1177, %v1181
        %v1184 = vadd.f32 %v1175, %v1182
        %v1185 = vadd.f32 %v1176, %v1182
        %v1186 = vmax.f32 %v1184, 0.0
        %v1187 = vmax.f32 %v1185, 0.0
        %v1188 = vpack.c.bf16 %v1187, %v1186
        %v1189 = vld [vmem:[#allocation13] sm:$0xff]
        %v1190 = vld [vmem:[#allocation13 + $0x8] sm:$0xf]
        %v1191 = vld [vmem:[#allocation13 + $0xc] sm:$0xff]
        %v1192 = vld [vmem:[#allocation13 + $0x14] sm:$0xf]
        %v1193 = vld [vmem:[#allocation13 + $0x18] sm:$0xff]
        %v1194 = vld [vmem:[#allocation13 + $0x20] sm:$0xf]
        %v1195 = vld [vmem:[#allocation13 + $0x24] sm:$0xff]
        %v1196 = vld [vmem:[#allocation13 + $0x2c] sm:$0xf]
        %v1197 = vld [vmem:[#allocation13 + $0x30] sm:$0xff]
        %v1198 = vld [vmem:[#allocation13 + $0x38] sm:$0xf]
        %v1199 = vld [vmem:[#allocation13 + $0x3c] sm:$0xff]
        %v1200 = vld [vmem:[#allocation13 + $0x44] sm:$0xf]
        %v1201 = vld [vmem:[#allocation13 + $0x48] sm:$0xff]
        %v1202 = vld [vmem:[#allocation13 + $0x50] sm:$0xf]
        %v1203 = vld [vmem:[#allocation13 + $0x54] sm:$0xff]
        %v1204 = vld [vmem:[#allocation13 + $0x5c] sm:$0xf]
        %v1205 = vld [vmem:[#allocation13 + $0x60] sm:$0xff]
        %v1206 = vld [vmem:[#allocation13 + $0x68] sm:$0xf]
        %v1207 = vld [vmem:[#allocation13 + $0x6c] sm:$0xff]
        %v1208 = vld [vmem:[#allocation13 + $0x74] sm:$0xf]
        %v1209 = vld [vmem:[#allocation13 + $0x78] sm:$0xff]
        %v1210 = vld [vmem:[#allocation13 + $0x80] sm:$0xf]
        %v1211 = vld [vmem:[#allocation13 + $0x84] sm:$0xff]
        %v1212 = vld [vmem:[#allocation13 + $0x8c] sm:$0xf]
        %v1213 = vld [vmem:[#allocation13 + $0x90] sm:$0xff]
        %v1214 = vld [vmem:[#allocation13 + $0x98] sm:$0xf]
        %v1215 = vld [vmem:[#allocation13 + $0x9c] sm:$0xff]
        %v1216 = vld [vmem:[#allocation13 + $0xa4] sm:$0xf]
        %v1217 = vld [vmem:[#allocation13 + $0xa8] sm:$0xff]
        %v1218 = vld [vmem:[#allocation13 + $0xb0] sm:$0xf]
        %v1219 = vld [vmem:[#allocation13 + $0xb4] sm:$0xff]
        %v1220 = vld [vmem:[#allocation13 + $0xbc] sm:$0xf]
        %v1253 = vunpack.c.l.b16 %v1189
        %v1254 = vunpack.c.h.b16 %v1189
        %v1255 = vunpack.c.l.b16 %v1190
        %v1256 = vunpack.c.l.b16 %v1191
        %v1257 = vunpack.c.h.b16 %v1191
        %v1258 = vunpack.c.l.b16 %v1192
        %v1259 = vunpack.c.l.b16 %v1193
        %v1260 = vunpack.c.h.b16 %v1193
        %v1261 = vunpack.c.l.b16 %v1194
        %v1262 = vunpack.c.l.b16 %v1195
        %v1263 = vunpack.c.h.b16 %v1195
        %v1264 = vunpack.c.l.b16 %v1196
        %v1265 = vunpack.c.l.b16 %v1197
        %v1266 = vunpack.c.h.b16 %v1197
        %v1267 = vunpack.c.l.b16 %v1198
        %v1268 = vunpack.c.l.b16 %v1199
        %v1269 = vunpack.c.h.b16 %v1199
        %v1270 = vunpack.c.l.b16 %v1200
        %v1271 = vunpack.c.l.b16 %v1201
        %v1272 = vunpack.c.h.b16 %v1201
        %v1273 = vunpack.c.l.b16 %v1202
        %v1274 = vunpack.c.l.b16 %v1203
        %v1275 = vunpack.c.h.b16 %v1203
        %v1276 = vunpack.c.l.b16 %v1204
        %v1277 = vunpack.c.l.b16 %v1205
        %v1278 = vunpack.c.h.b16 %v1205
        %v1279 = vunpack.c.l.b16 %v1206
        %v1280 = vunpack.c.l.b16 %v1207
        %v1281 = vunpack.c.h.b16 %v1207
        %v1282 = vunpack.c.l.b16 %v1208
        %v1283 = vunpack.c.l.b16 %v1209
        %v1284 = vunpack.c.h.b16 %v1209
        %v1285 = vunpack.c.l.b16 %v1210
        %v1286 = vunpack.c.l.b16 %v1211
        %v1287 = vunpack.c.h.b16 %v1211
        %v1288 = vunpack.c.l.b16 %v1212
        %v1289 = vunpack.c.l.b16 %v1213
        %v1290 = vunpack.c.h.b16 %v1213
        %v1291 = vunpack.c.l.b16 %v1214
        %v1292 = vunpack.c.l.b16 %v1215
        %v1293 = vunpack.c.h.b16 %v1215
        %v1294 = vunpack.c.l.b16 %v1216
        %v1295 = vunpack.c.l.b16 %v1217
        %v1296 = vunpack.c.h.b16 %v1217
        %v1297 = vunpack.c.l.b16 %v1218
        %v1298 = vunpack.c.l.b16 %v1219
        %v1299 = vunpack.c.h.b16 %v1219
        %v1300 = vunpack.c.l.b16 %v1220
        %v1301 = vpack.c.b16 %v1256, %v1253
        %v1302 = vpack.c.b16 %v1257, %v1254
        %v1303 = vpack.c.b16 %v1258, %v1255
        %v1304 = vpack.c.b16 %v1262, %v1259
        %v1305 = vpack.c.b16 %v1263, %v1260
        %v1306 = vpack.c.b16 %v1264, %v1261
        %v1307 = vpack.c.b16 %v1268, %v1265
        %v1308 = vpack.c.b16 %v1269, %v1266
        %v1309 = vpack.c.b16 %v1270, %v1267
        %v1310 = vpack.c.b16 %v1274, %v1271
        %v1311 = vpack.c.b16 %v1275, %v1272
        %v1312 = vpack.c.b16 %v1276, %v1273
        %v1313 = vpack.c.b16 %v1280, %v1277
        %v1314 = vpack.c.b16 %v1281, %v1278
        %v1315 = vpack.c.b16 %v1282, %v1279
        %v1316 = vpack.c.b16 %v1286, %v1283
        %v1317 = vpack.c.b16 %v1287, %v1284
        %v1318 = vpack.c.b16 %v1288, %v1285
        %v1319 = vpack.c.b16 %v1292, %v1289
        %v1320 = vpack.c.b16 %v1293, %v1290
        %v1321 = vpack.c.b16 %v1294, %v1291
        %v1322 = vpack.c.b16 %v1298, %v1295
        %v1323 = vpack.c.b16 %v1299, %v1296
        %v1324 = vpack.c.b16 %v1300, %v1297
        %1349 = vmatprep.subr.bf16.mxu0 %v1302
        %1350 = vmatpush1.bf16.msra.mxu0 %v1301
        %1351 = vmatprep.subr.bf16.mxu0 %v1305
        %1352 = vmatpush1.bf16.msra.mxu0 %v1304
        %1353 = vmatprep.subr.bf16.mxu0 %v1308
        %1354 = vmatpush1.bf16.msra.mxu0 %v1307
        %1355 = vmatprep.subr.bf16.mxu0 %v1311
        %1356 = vmatpush1.bf16.msra.mxu0 %v1310
        %1357 = vmatprep.subr.bf16.mxu0 %v1314
        %1358 = vmatpush1.bf16.msra.mxu0 %v1313
        %1359 = vmatprep.subr.bf16.mxu0 %v1317
        %1360 = vmatpush1.bf16.msra.mxu0 %v1316
        %1361 = vmatprep.subr.bf16.mxu0 %v1320
        %1362 = vmatpush1.bf16.msra.mxu0 %v1319
        %1363 = vmatprep.subr.bf16.mxu0 %v1323
        %1364 = vmatpush1.bf16.msra.mxu0 %v1322
        %1365 = vmatprep.subr.bf16.mxu0 0
        %1366 = vmatpush1.bf16.msra.mxu0 0
        %1367 = vmatprep.subr.bf16.mxu0 0
        %1368 = vmatpush1.bf16.msra.mxu0 0
        %1369 = vmatprep.subr.bf16.mxu0 0
        %1370 = vmatpush1.bf16.msra.mxu0 0
        %1371 = vmatprep.subr.bf16.mxu0 0
        %1372 = vmatpush1.bf16.msra.mxu0 0
        %1373 = vmatprep.subr.bf16.mxu0 0
        %1374 = vmatpush1.bf16.msra.mxu0 0
        %1375 = vmatprep.subr.bf16.mxu0 0
        %1376 = vmatpush1.bf16.msra.mxu0 0
        %1377 = vmatprep.subr.bf16.mxu0 0
        %1378 = vmatpush1.bf16.msra.mxu0 0
        %1379 = vmatprep.subr.bf16.mxu0 0
        %1380 = vmatpush1.bf16.msra.mxu0 0
        %1381 = vmatprep.mubr.bf16.mxu0 0
        %1382 = vmatmul.mubr.bf16.gmra.mrb[0].mxu0 %v1188
        %v1383 = vpop.f32.mrb[0].mxu0
        %v1384 = vadd.f32 0.0, %v1383
        %v1385 = vpop.f32.mrb[0].mxu0
        %v1386 = vadd.f32 0.0, %v1385
        %v1387 = vpop.f32.mrb[0].mxu0
        %v1388 = vadd.f32 0.0, %v1387
        %v1389 = vpop.f32.mrb[0].mxu0
        %v1390 = vadd.f32 0.0, %v1389
        %1391 = vdwg.mxu0
        %1392 = vmatprep.subr.bf16.mxu0 0
        %1393 = vmatpush1.bf16.msra.mxu0 %v1303
        %1394 = vmatprep.subr.bf16.mxu0 0
        %1395 = vmatpush1.bf16.msra.mxu0 %v1306
        %1396 = vmatprep.subr.bf16.mxu0 0
        %1397 = vmatpush1.bf16.msra.mxu0 %v1309
        %1398 = vmatprep.subr.bf16.mxu0 0
        %1399 = vmatpush1.bf16.msra.mxu0 %v1312
        %1400 = vmatprep.subr.bf16.mxu0 0
        %1401 = vmatpush1.bf16.msra.mxu0 %v1315
        %1402 = vmatprep.subr.bf16.mxu0 0
        %1403 = vmatpush1.bf16.msra.mxu0 %v1318
        %1404 = vmatprep.subr.bf16.mxu0 0
        %1405 = vmatpush1.bf16.msra.mxu0 %v1321
        %1406 = vmatprep.subr.bf16.mxu0 0
        %1407 = vmatpush1.bf16.msra.mxu0 %v1324
        %1408 = vmatprep.subr.bf16.mxu0 0
        %1409 = vmatpush1.bf16.msra.mxu0 0
        %1410 = vmatprep.subr.bf16.mxu0 0
        %1411 = vmatpush1.bf16.msra.mxu0 0
        %1412 = vmatprep.subr.bf16.mxu0 0
        %1413 = vmatpush1.bf16.msra.mxu0 0
        %1414 = vmatprep.subr.bf16.mxu0 0
        %1415 = vmatpush1.bf16.msra.mxu0 0
        %1416 = vmatprep.subr.bf16.mxu0 0
        %1417 = vmatpush1.bf16.msra.mxu0 0
        %1418 = vmatprep.subr.bf16.mxu0 0
        %1419 = vmatpush1.bf16.msra.mxu0 0
        %1420 = vmatprep.subr.bf16.mxu0 0
        %1421 = vmatpush1.bf16.msra.mxu0 0
        %1422 = vmatprep.subr.bf16.mxu0 0
        %1423 = vmatpush1.bf16.msra.mxu0 0
        %1424 = vmatprep.mubr.bf16.mxu0 0
        %1425 = vmatmul.mubr.bf16.gmra.mrb[0].mxu0 %v1188
        %v1426 = vpop.f32.mrb[0].mxu0
        %v1427 = vadd.f32 0.0, %v1426
        %v1428 = vpop.f32.mrb[0].mxu0
        %v1429 = vpop.f32.mrb[0].mxu0
        %v1430 = vadd.f32 0.0, %v1429
        %v1431 = vpop.f32.mrb[0].mxu0
        %1432 = vdwg.mxu0
        %v1433 = vld [vmem:[#allocation11] sm:$0xf]
        %v1434 = vld [vmem:[#allocation11 + $0x4] sm:$0xf]
        %v1435 = vld [vmem:[#allocation11 + $0x8] sm:$0xf]
        %v1436 = vld [vmem:[#allocation11 + $0xc] sm:$0xf]
        %v1437 = vld [vmem:[#allocation11 + $0x10] sm:$0x1]
        %v1438 = vpack.c.bf16 %v1388, %v1384
        %v1439 = vpack.c.bf16 %v1390, %v1386
        %v1440 = vpack.c.bf16 %v1430, %v1427
        %v1446 = vunpack.c.l.b16 %v1433
        %v1447 = vunpack.c.l.b16 %v1434
        %v1448 = vunpack.c.l.b16 %v1435
        %v1449 = vunpack.c.l.b16 %v1436
        %v1450 = vunpack.c.l.b16 %v1437
        %v1451 = vpack.c.b16 %v1447, %v1446
        %v1452 = vpack.c.b16 %v1449, %v1448
        %v1453 = vpack.c.b16 %v1450, %v1450
        %v1455 = vsel %vm847, %v1451, 0
        %v1458 = vsel %vm847, %v1452, 0
        %v1461 = vsel %vm847, %v1453, 0
        %1463 = vmatprep.subr.bf16.mxu0 %v1439
        %1464 = vmatpush1.bf16.msra.mxu0 %v1438
        %1465 = vmatprep.subr.bf16.mxu0 0
        %1466 = vmatpush1.bf16.msra.mxu0 0
        %1467 = vmatprep.subr.bf16.mxu0 0
        %1468 = vmatpush1.bf16.msra.mxu0 0
        %1469 = vmatprep.subr.bf16.mxu0 0
        %1470 = vmatpush1.bf16.msra.mxu0 0
        %1471 = vmatprep.subr.bf16.mxu0 0
        %1472 = vmatpush1.bf16.msra.mxu0 0
        %1473 = vmatprep.subr.bf16.mxu0 0
        %1474 = vmatpush1.bf16.msra.mxu0 0
        %1475 = vmatprep.subr.bf16.mxu0 0
        %1476 = vmatpush1.bf16.msra.mxu0 0
        %1477 = vmatprep.subr.bf16.mxu0 0
        %1478 = vmatpush1.bf16.msra.mxu0 0
        %1479 = vmatprep.subr.bf16.mxu0 0
        %1480 = vmatpush1.bf16.msra.mxu0 0
        %1481 = vmatprep.subr.bf16.mxu0 0
        %1482 = vmatpush1.bf16.msra.mxu0 0
        %1483 = vmatprep.subr.bf16.mxu0 0
        %1484 = vmatpush1.bf16.msra.mxu0 0
        %1485 = vmatprep.subr.bf16.mxu0 0
        %1486 = vmatpush1.bf16.msra.mxu0 0
        %1487 = vmatprep.subr.bf16.mxu0 0
        %1488 = vmatpush1.bf16.msra.mxu0 0
        %1489 = vmatprep.subr.bf16.mxu0 0
        %1490 = vmatpush1.bf16.msra.mxu0 0
        %1491 = vmatprep.subr.bf16.mxu0 0
        %1492 = vmatpush1.bf16.msra.mxu0 0
        %1493 = vmatprep.subr.bf16.mxu0 0
        %1494 = vmatpush1.bf16.msra.mxu0 0
        %1495 = vmatprep.mubr.bf16.mxu0 0
        %1496 = vmatmul.mubr.bf16.gmra.mrb[0].mxu0 %v1455
        %v1497 = vpop.f32.mrb[0].mxu0
        %v1498 = vadd.f32 0.0, %v1497
        %v1499 = vpop.f32.mrb[0].mxu0
        %v1500 = vadd.f32 0.0, %v1499
        %v1501 = vpop.f32.mrb[0].mxu0
        %v1502 = vadd.f32 0.0, %v1501
        %v1503 = vpop.f32.mrb[0].mxu0
        %v1504 = vadd.f32 0.0, %v1503
        %1505 = vmatprep.mubr.bf16.mxu0 0
        %1506 = vmatmul.mubr.bf16.gmra.mrb[0].mxu0 %v1458
        %v1507 = vpop.f32.mrb[0].mxu0
        %v1508 = vadd.f32 0.0, %v1507
        %v1509 = vpop.f32.mrb[0].mxu0
        %v1510 = vadd.f32 0.0, %v1509
        %v1511 = vpop.f32.mrb[0].mxu0
        %v1512 = vadd.f32 0.0, %v1511
        %v1513 = vpop.f32.mrb[0].mxu0
        %v1514 = vadd.f32 0.0, %v1513
        %1515 = vmatprep.mubr.bf16.mxu0 0
        %1516 = vmatmul.mubr.bf16.gmra.mrb[0].mxu0 %v1461
        %v1517 = vpop.f32.mrb[0].mxu0
        %v1518 = vadd.f32 0.0, %v1517
        %v1519 = vpop.f32.mrb[0].mxu0
        %v1520 = vadd.f32 0.0, %v1519
        %v1521 = vpop.f32.mrb[0].mxu0
        %v1522 = vpop.f32.mrb[0].mxu0
        %1523 = vdwg.mxu0
        %1524 = vmatprep.subr.bf16.mxu0 0
        %1525 = vmatpush1.bf16.msra.mxu0 %v1440
        %1526 = vmatprep.subr.bf16.mxu0 0
        %1527 = vmatpush1.bf16.msra.mxu0 0
        %1528 = vmatprep.subr.bf16.mxu0 0
        %1529 = vmatpush1.bf16.msra.mxu0 0
        %1530 = vmatprep.subr.bf16.mxu0 0
        %1531 = vmatpush1.bf16.msra.mxu0 0
        %1532 = vmatprep.subr.bf16.mxu0 0
        %1533 = vmatpush1.bf16.msra.mxu0 0
        %1534 = vmatprep.subr.bf16.mxu0 0
        %1535 = vmatpush1.bf16.msra.mxu0 0
        %1536 = vmatprep.subr.bf16.mxu0 0
        %1537 = vmatpush1.bf16.msra.mxu0 0
        %1538 = vmatprep.subr.bf16.mxu0 0
        %1539 = vmatpush1.bf16.msra.mxu0 0
        %1540 = vmatprep.subr.bf16.mxu0 0
        %1541 = vmatpush1.bf16.msra.mxu0 0
        %1542 = vmatprep.subr.bf16.mxu0 0
        %1543 = vmatpush1.bf16.msra.mxu0 0
        %1544 = vmatprep.subr.bf16.mxu0 0
        %1545 = vmatpush1.bf16.msra.mxu0 0
        %1546 = vmatprep.subr.bf16.mxu0 0
        %1547 = vmatpush1.bf16.msra.mxu0 0
        %1548 = vmatprep.subr.bf16.mxu0 0
        %1549 = vmatpush1.bf16.msra.mxu0 0
        %1550 = vmatprep.subr.bf16.mxu0 0
        %1551 = vmatpush1.bf16.msra.mxu0 0
        %1552 = vmatprep.subr.bf16.mxu0 0
        %1553 = vmatpush1.bf16.msra.mxu0 0
        %1554 = vmatprep.subr.bf16.mxu0 0
        %1555 = vmatpush1.bf16.msra.mxu0 0
        %1556 = vmatprep.mubr.bf16.mxu0 0
        %1557 = vmatmul.mubr.bf16.gmra.mrb[0].mxu0 %v1455
        %v1558 = vpop.f32.mrb[0].mxu0
        %v1559 = vadd.f32 0.0, %v1558
        %v1560 = vpop.f32.mrb[0].mxu0
        %v1561 = vpop.f32.mrb[0].mxu0
        %v1562 = vadd.f32 0.0, %v1561
        %v1563 = vpop.f32.mrb[0].mxu0
        %1564 = vmatprep.mubr.bf16.mxu0 0
        %1565 = vmatmul.mubr.bf16.gmra.mrb[0].mxu0 %v1458
        %v1566 = vpop.f32.mrb[0].mxu0
        %v1567 = vadd.f32 0.0, %v1566
        %v1568 = vpop.f32.mrb[0].mxu0
        %v1569 = vpop.f32.mrb[0].mxu0
        %v1570 = vadd.f32 0.0, %v1569
        %v1571 = vpop.f32.mrb[0].mxu0
        %1572 = vmatprep.mubr.bf16.mxu0 0
        %1573 = vmatmul.mubr.bf16.gmra.mrb[0].mxu0 %v1461
        %v1574 = vpop.f32.mrb[0].mxu0
        %v1575 = vadd.f32 0.0, %v1574
        %v1576 = vpop.f32.mrb[0].mxu0
        %v1577 = vpop.f32.mrb[0].mxu0
        %v1578 = vpop.f32.mrb[0].mxu0
        %1579 = vdwg.mxu0
        %v1580 = vpack.c.bf16 %v1502, %v1498
        %v1581 = vpack.c.bf16 %v1504, %v1500
        %v1582 = vpack.c.bf16 %v1562, %v1559
        %v1583 = vpack.c.bf16 %v1512, %v1508
        %v1584 = vpack.c.bf16 %v1514, %v1510
        %v1585 = vpack.c.bf16 %v1570, %v1567
        %v1586 = vld [vmem:[#allocation14] sm:$0xff]
        %v1587 = vld [vmem:[#allocation14 + $0x8] sm:$0xff]
        %v1588 = vld [vmem:[#allocation14 + $0x10] sm:$0xff]
        %v1589 = vld [vmem:[#allocation14 + $0x18] sm:$0xff]
        %v1590 = vld [vmem:[#allocation14 + $0x20] sm:$0xff]
        %v1591 = vld [vmem:[#allocation14 + $0x28] sm:$0xff]
        %v1592 = vld [vmem:[#allocation14 + $0x30] sm:$0xff]
        %v1593 = vld [vmem:[#allocation14 + $0x38] sm:$0xff]
        %v1594 = vld [vmem:[#allocation14 + $0x40] sm:$0xff]
        %v1595 = vld [vmem:[#allocation14 + $0x48] sm:$0xff]
        %v1596 = vld [vmem:[#allocation14 + $0x50] sm:$0xff]
        %v1597 = vld [vmem:[#allocation14 + $0x58] sm:$0xff]
        %v1598 = vld [vmem:[#allocation14 + $0x60] sm:$0xff]
        %v1599 = vld [vmem:[#allocation14 + $0x68] sm:$0xff]
        %v1600 = vld [vmem:[#allocation14 + $0x70] sm:$0xff]
        %v1601 = vld [vmem:[#allocation14 + $0x78] sm:$0xff]
        %v1602 = vld [vmem:[#allocation14 + $0x80] sm:$0xff]
        %v1603 = vld [vmem:[#allocation14 + $0x88] sm:$0xff]
        %v1604 = vld [vmem:[#allocation14 + $0x90] sm:$0xff]
        %v1605 = vld [vmem:[#allocation14 + $0x98] sm:$0xff]
        %v1606 = vld [vmem:[#allocation14 + $0xa0] sm:$0xff]
        %v1607 = vld [vmem:[#allocation14 + $0xa8] sm:$0xff]
        %v1608 = vld [vmem:[#allocation14 + $0xb0] sm:$0xff]
        %v1609 = vld [vmem:[#allocation14 + $0xb8] sm:$0xff]
        %v1610 = vld [vmem:[#allocation14 + $0xc0] sm:$0xff]
        %v1611 = vld [vmem:[#allocation14 + $0xc8] sm:$0xff]
        %v1612 = vld [vmem:[#allocation14 + $0xd0] sm:$0xff]
        %v1613 = vld [vmem:[#allocation14 + $0xd8] sm:$0xff]
        %v1614 = vld [vmem:[#allocation14 + $0xe0] sm:$0xff]
        %v1615 = vld [vmem:[#allocation14 + $0xe8] sm:$0xff]
        %v1616 = vld [vmem:[#allocation14 + $0xf0] sm:$0xff]
        %v1617 = vld [vmem:[#allocation14 + $0xf8] sm:$0xff]
        %v1618 = vld [vmem:[#allocation14 + $0x100] sm:$0xff]
        %v1619 = vld [vmem:[#allocation14 + $0x108] sm:$0xff]
        %v1620 = vpack.c.bf16 %v1518, %v1518
        %v1621 = vpack.c.bf16 %v1520, %v1520
        %v1622 = vpack.c.bf16 %v1575, %v1575
        %s1623 = scalar_lea.vmem [#allocation14], 272
        %v1624 = vld [vmem:[%s1623] sm:$0xff]
        %v1625 = vld [vmem:[%s1623 + $0x8] sm:$0xff]
        %v1626 = vld [vmem:[%s1623 + $0x10] sm:$0xff]
        %v1627 = vld [vmem:[%s1623 + $0x18] sm:$0xff]
        %v1628 = vld [vmem:[%s1623 + $0x20] sm:$0xff]
        %v1629 = vld [vmem:[%s1623 + $0x28] sm:$0xff]
        %v1630 = vld [vmem:[%s1623 + $0x30] sm:$0xff]
        %v1631 = vld [vmem:[%s1623 + $0x38] sm:$0xff]
        %v1632 = vld [vmem:[%s1623 + $0x40] sm:$0xff]
        %v1633 = vld [vmem:[%s1623 + $0x48] sm:$0xff]
        %v1634 = vld [vmem:[%s1623 + $0x50] sm:$0xff]
        %v1635 = vld [vmem:[%s1623 + $0x58] sm:$0xff]
        %v1636 = vld [vmem:[%s1623 + $0x60] sm:$0xff]
        %v1637 = vld [vmem:[%s1623 + $0x68] sm:$0xff]
        %v1638 = vld [vmem:[%s1623 + $0x70] sm:$0xff]
        %v1639 = vld [vmem:[%s1623 + $0x78] sm:$0xff]
        %v1640 = vld [vmem:[%s1623 + $0x80] sm:$0xff]
        %v1641 = vld [vmem:[%s1623 + $0x88] sm:$0xff]
        %v1642 = vld [vmem:[%s1623 + $0x90] sm:$0xff]
        %v1643 = vld [vmem:[%s1623 + $0x98] sm:$0xff]
        %v1644 = vld [vmem:[%s1623 + $0xa0] sm:$0xff]
        %v1645 = vld [vmem:[%s1623 + $0xa8] sm:$0xff]
        %v1646 = vld [vmem:[%s1623 + $0xb0] sm:$0xff]
        %v1647 = vld [vmem:[%s1623 + $0xb8] sm:$0xff]
        %v1648 = vld [vmem:[%s1623 + $0xc0] sm:$0xff]
        %v1649 = vld [vmem:[%s1623 + $0xc8] sm:$0xff]
        %v1650 = vld [vmem:[%s1623 + $0xd0] sm:$0xff]
        %v1651 = vld [vmem:[%s1623 + $0xd8] sm:$0xff]
        %v1652 = vld [vmem:[%s1623 + $0xe0] sm:$0xff]
        %v1653 = vld [vmem:[%s1623 + $0xe8] sm:$0xff]
        %v1654 = vld [vmem:[%s1623 + $0xf0] sm:$0xff]
        %v1655 = vld [vmem:[%s1623 + $0xf8] sm:$0xff]
        %v1656 = vld [vmem:[%s1623 + $0x100] sm:$0xff]
        %v1657 = vld [vmem:[%s1623 + $0x108] sm:$0xff]
        %v1659 = vshrl.u32 %v1580, 16
        %v1661 = vshll.u32 %v1580, 16
        %v1663 = vrot.slane %v1661, 1
        %v1664 = vor.u32 %v1659, %v1663
        %v1666 = vshll.u32 %v1583, 16
        %v1668 = vrot.slane %v1666, 1
        %v1669 = vsel %vm923, %v1664, %v1668
        %v1671 = vshrl.u32 %v1581, 16
        %v1673 = vshll.u32 %v1581, 16
        %v1675 = vrot.slane %v1673, 1
        %v1676 = vor.u32 %v1671, %v1675
        %v1678 = vshll.u32 %v1584, 16
        %v1680 = vrot.slane %v1678, 1
        %v1681 = vsel %vm923, %v1676, %v1680
        %v1683 = vshrl.u32 %v1582, 16
        %v1685 = vshll.u32 %v1582, 16
        %v1687 = vrot.slane %v1685, 1
        %v1688 = vor.u32 %v1683, %v1687
        %v1690 = vshll.u32 %v1585, 16
        %v1692 = vrot.slane %v1690, 1
        %v1693 = vsel %vm923, %v1688, %v1692
        %v1694 = vshrl.u32 %v1583, 16
        %v1696 = vor.u32 %v1694, %v1668
        %v1698 = vshll.u32 %v1620, 16
        %v1700 = vrot.slane %v1698, 1
        %v1701 = vsel %vm923, %v1696, %v1700
        %v1702 = vshrl.u32 %v1584, 16
        %v1704 = vor.u32 %v1702, %v1680
        %v1706 = vshll.u32 %v1621, 16
        %v1708 = vrot.slane %v1706, 1
        %v1709 = vsel %vm923, %v1704, %v1708
        %v1710 = vshrl.u32 %v1585, 16
        %v1712 = vor.u32 %v1710, %v1692
        %v1714 = vshll.u32 %v1622, 16
        %v1716 = vrot.slane %v1714, 1
        %v1717 = vsel %vm923, %v1712, %v1716
        %v1756 = vunpack.c.l.b16 %v1624
        %v1757 = vunpack.c.h.b16 %v1624
        %v1758 = vunpack.c.l.b16 %v1625
        %v1759 = vunpack.c.h.b16 %v1625
        %v1760 = vunpack.c.l.b16 %v1626
        %v1761 = vunpack.c.h.b16 %v1626
        %v1762 = vunpack.c.l.b16 %v1627
        %v1763 = vunpack.c.h.b16 %v1627
        %v1764 = vunpack.c.l.b16 %v1628
        %v1765 = vunpack.c.h.b16 %v1628
        %v1766 = vunpack.c.l.b16 %v1629
        %v1767 = vunpack.c.h.b16 %v1629
        %v1768 = vunpack.c.l.b16 %v1630
        %v1769 = vunpack.c.h.b16 %v1630
        %v1770 = vunpack.c.l.b16 %v1631
        %v1771 = vunpack.c.h.b16 %v1631
        %v1772 = vunpack.c.l.b16 %v1632
        %v1773 = vunpack.c.h.b16 %v1632
        %v1774 = vunpack.c.l.b16 %v1633
        %v1775 = vunpack.c.h.b16 %v1633
        %v1776 = vunpack.c.l.b16 %v1634
        %v1777 = vunpack.c.h.b16 %v1634
        %v1778 = vunpack.c.l.b16 %v1635
        %v1779 = vunpack.c.h.b16 %v1635
        %v1780 = vunpack.c.l.b16 %v1636
        %v1781 = vunpack.c.h.b16 %v1636
        %v1782 = vunpack.c.l.b16 %v1637
        %v1783 = vunpack.c.h.b16 %v1637
        %v1784 = vunpack.c.l.b16 %v1638
        %v1785 = vunpack.c.h.b16 %v1638
        %v1786 = vunpack.c.l.b16 %v1639
        %v1787 = vunpack.c.h.b16 %v1639
        %v1788 = vunpack.c.l.b16 %v1640
        %v1789 = vunpack.c.h.b16 %v1640
        %v1790 = vunpack.c.l.b16 %v1641
        %v1791 = vunpack.c.h.b16 %v1641
        %v1792 = vunpack.c.l.b16 %v1642
        %v1793 = vunpack.c.h.b16 %v1642
        %v1794 = vunpack.c.l.b16 %v1643
        %v1795 = vunpack.c.h.b16 %v1643
        %v1796 = vunpack.c.l.b16 %v1644
        %v1797 = vunpack.c.h.b16 %v1644
        %v1798 = vunpack.c.l.b16 %v1645
        %v1799 = vunpack.c.h.b16 %v1645
        %v1800 = vunpack.c.l.b16 %v1646
        %v1801 = vunpack.c.h.b16 %v1646
        %v1802 = vunpack.c.l.b16 %v1647
        %v1803 = vunpack.c.h.b16 %v1647
        %v1804 = vunpack.c.l.b16 %v1648
        %v1805 = vunpack.c.h.b16 %v1648
        %v1806 = vunpack.c.l.b16 %v1649
        %v1807 = vunpack.c.h.b16 %v1649
        %v1808 = vunpack.c.l.b16 %v1650
        %v1809 = vunpack.c.h.b16 %v1650
        %v1810 = vunpack.c.l.b16 %v1651
        %v1811 = vunpack.c.h.b16 %v1651
        %v1812 = vunpack.c.l.b16 %v1652
        %v1813 = vunpack.c.h.b16 %v1652
        %v1814 = vunpack.c.l.b16 %v1653
        %v1815 = vunpack.c.h.b16 %v1653
        %v1816 = vunpack.c.l.b16 %v1654
        %v1817 = vunpack.c.h.b16 %v1654
        %v1818 = vunpack.c.l.b16 %v1655
        %v1819 = vunpack.c.h.b16 %v1655
        %v1820 = vunpack.c.l.b16 %v1656
        %v1821 = vunpack.c.h.b16 %v1656
        %v1822 = vunpack.c.l.b16 %v1657
        %v1823 = vunpack.c.h.b16 %v1657
        %v1824 = vpack.c.b16 %v1758, %v1756
        %v1825 = vpack.c.b16 %v1759, %v1757
        %v1826 = vpack.c.b16 %v1762, %v1760
        %v1827 = vpack.c.b16 %v1763, %v1761
        %v1828 = vpack.c.b16 %v1766, %v1764
        %v1829 = vpack.c.b16 %v1767, %v1765
        %v1830 = vpack.c.b16 %v1770, %v1768
        %v1831 = vpack.c.b16 %v1771, %v1769
        %v1832 = vpack.c.b16 %v1774, %v1772
        %v1833 = vpack.c.b16 %v1775, %v1773
        %v1834 = vpack.c.b16 %v1778, %v1776
        %v1835 = vpack.c.b16 %v1779, %v1777
        %v1836 = vpack.c.b16 %v1782, %v1780
        %v1837 = vpack.c.b16 %v1783, %v1781
        %v1838 = vpack.c.b16 %v1786, %v1784
        %v1839 = vpack.c.b16 %v1787, %v1785
        %v1840 = vpack.c.b16 %v1790, %v1788
        %v1841 = vpack.c.b16 %v1791, %v1789
        %v1842 = vpack.c.b16 %v1794, %v1792
        %v1843 = vpack.c.b16 %v1795, %v1793
        %v1844 = vpack.c.b16 %v1798, %v1796
        %v1845 = vpack.c.b16 %v1799, %v1797
        %v1846 = vpack.c.b16 %v1802, %v1800
        %v1847 = vpack.c.b16 %v1803, %v1801
        %v1848 = vpack.c.b16 %v1806, %v1804
        %v1849 = vpack.c.b16 %v1807, %v1805
        %v1850 = vpack.c.b16 %v1810, %v1808
        %v1851 = vpack.c.b16 %v1811, %v1809
        %v1852 = vpack.c.b16 %v1814, %v1812
        %v1853 = vpack.c.b16 %v1815, %v1813
        %v1854 = vpack.c.b16 %v1818, %v1816
        %v1855 = vpack.c.b16 %v1819, %v1817
        %v1856 = vpack.c.b16 %v1822, %v1820
        %v1857 = vpack.c.b16 %v1823, %v1821
        %v1893 = vsel %vm847, %v1693, 0
        %v1896 = vsel %vm847, %v1717, 0
        %1898 = vmatprep.subr.bf16.mxu0 %v1825
        %1899 = vmatpush1.bf16.msra.mxu0 %v1824
        %1900 = vmatprep.subr.bf16.mxu0 %v1827
        %1901 = vmatpush1.bf16.msra.mxu0 %v1826
        %1902 = vmatprep.subr.bf16.mxu0 %v1829
        %1903 = vmatpush1.bf16.msra.mxu0 %v1828
        %1904 = vmatprep.subr.bf16.mxu0 %v1831
        %1905 = vmatpush1.bf16.msra.mxu0 %v1830
        %1906 = vmatprep.subr.bf16.mxu0 %v1833
        %1907 = vmatpush1.bf16.msra.mxu0 %v1832
        %1908 = vmatprep.subr.bf16.mxu0 %v1835
        %1909 = vmatpush1.bf16.msra.mxu0 %v1834
        %1910 = vmatprep.subr.bf16.mxu0 %v1837
        %1911 = vmatpush1.bf16.msra.mxu0 %v1836
        %1912 = vmatprep.subr.bf16.mxu0 %v1839
        %1913 = vmatpush1.bf16.msra.mxu0 %v1838
        %1914 = vmatprep.subr.bf16.mxu0 %v1841
        %1915 = vmatpush1.bf16.msra.mxu0 %v1840
        %1916 = vmatprep.subr.bf16.mxu0 %v1843
        %1917 = vmatpush1.bf16.msra.mxu0 %v1842
        %1918 = vmatprep.subr.bf16.mxu0 %v1845
        %1919 = vmatpush1.bf16.msra.mxu0 %v1844
        %1920 = vmatprep.subr.bf16.mxu0 %v1847
        %1921 = vmatpush1.bf16.msra.mxu0 %v1846
        %1922 = vmatprep.subr.bf16.mxu0 %v1849
        %1923 = vmatpush1.bf16.msra.mxu0 %v1848
        %1924 = vmatprep.subr.bf16.mxu0 %v1851
        %1925 = vmatpush1.bf16.msra.mxu0 %v1850
        %1926 = vmatprep.subr.bf16.mxu0 %v1853
        %1927 = vmatpush1.bf16.msra.mxu0 %v1852
        %1928 = vmatprep.subr.bf16.mxu0 %v1855
        %1929 = vmatpush1.bf16.msra.mxu0 %v1854
        %1930 = vmatprep.mubr.bf16.mxu0 %v1681
        %1931 = vmatmul.mubr.bf16.gmra.mrb[0].mxu0 %v1669
        %v1932 = vpop.f32.mrb[0].mxu0
        %v1933 = vadd.f32 0.0, %v1932
        %v1934 = vpop.f32.mrb[0].mxu0
        %v1935 = vadd.f32 0.0, %v1934
        %v1936 = vpop.f32.mrb[0].mxu0
        %v1937 = vadd.f32 0.0, %v1936
        %v1938 = vpop.f32.mrb[0].mxu0
        %v1939 = vadd.f32 0.0, %v1938
        %1940 = vmatprep.mubr.bf16.mxu0 %v1709
        %1941 = vmatmul.mubr.bf16.gmra.mrb[0].mxu0 %v1701
        %v1942 = vpop.f32.mrb[0].mxu0
        %v1943 = vadd.f32 0.0, %v1942
        %v1944 = vpop.f32.mrb[0].mxu0
        %v1945 = vadd.f32 0.0, %v1944
        %v1946 = vpop.f32.mrb[0].mxu0
        %v1947 = vadd.f32 0.0, %v1946
        %v1948 = vpop.f32.mrb[0].mxu0
        %v1949 = vadd.f32 0.0, %v1948
        %1950 = vdwg.mxu0
        %1951 = vmatprep.subr.bf16.mxu0 %v1857
        %1952 = vmatpush1.bf16.msra.mxu0 %v1856
        %1953 = vmatprep.subr.bf16.mxu0 0
        %1954 = vmatpush1.bf16.msra.mxu0 0
        %1955 = vmatprep.subr.bf16.mxu0 0
        %1956 = vmatpush1.bf16.msra.mxu0 0
        %1957 = vmatprep.subr.bf16.mxu0 0
        %1958 = vmatpush1.bf16.msra.mxu0 0
        %1959 = vmatprep.subr.bf16.mxu0 0
        %1960 = vmatpush1.bf16.msra.mxu0 0
        %1961 = vmatprep.subr.bf16.mxu0 0
        %1962 = vmatpush1.bf16.msra.mxu0 0
        %1963 = vmatprep.subr.bf16.mxu0 0
        %1964 = vmatpush1.bf16.msra.mxu0 0
        %1965 = vmatprep.subr.bf16.mxu0 0
        %1966 = vmatpush1.bf16.msra.mxu0 0
        %1967 = vmatprep.subr.bf16.mxu0 0
        %1968 = vmatpush1.bf16.msra.mxu0 0
        %1969 = vmatprep.subr.bf16.mxu0 0
        %1970 = vmatpush1.bf16.msra.mxu0 0
        %1971 = vmatprep.subr.bf16.mxu0 0
        %1972 = vmatpush1.bf16.msra.mxu0 0
        %1973 = vmatprep.subr.bf16.mxu0 0
        %1974 = vmatpush1.bf16.msra.mxu0 0
        %1975 = vmatprep.subr.bf16.mxu0 0
        %1976 = vmatpush1.bf16.msra.mxu0 0
        %1977 = vmatprep.subr.bf16.mxu0 0
        %1978 = vmatpush1.bf16.msra.mxu0 0
        %1979 = vmatprep.subr.bf16.mxu0 0
        %1980 = vmatpush1.bf16.msra.mxu0 0
        %1981 = vmatprep.subr.bf16.mxu0 0
        %1982 = vmatpush1.bf16.msra.mxu0 0
        %1983 = vmatprep.mubr.bf16.mxu0 0
        %1984 = vmatmul.mubr.bf16.gmra.mrb[0].mxu0 %v1893
        %v1985 = vpop.f32.mrb[0].mxu0
        %v1986 = vadd.f32 %v1933, %v1985
        %v1987 = vpop.f32.mrb[0].mxu0
        %v1988 = vadd.f32 %v1935, %v1987
        %v1989 = vpop.f32.mrb[0].mxu0
        %v1990 = vadd.f32 %v1937, %v1989
        %v1991 = vpop.f32.mrb[0].mxu0
        %v1992 = vadd.f32 %v1939, %v1991
        %1993 = vmatprep.mubr.bf16.mxu0 0
        %1994 = vmatmul.mubr.bf16.gmra.mrb[0].mxu0 %v1896
        %v1995 = vpop.f32.mrb[0].mxu0
        %v1996 = vadd.f32 %v1943, %v1995
        %v1997 = vpop.f32.mrb[0].mxu0
        %v1998 = vadd.f32 %v1945, %v1997
        %v1999 = vpop.f32.mrb[0].mxu0
        %v2000 = vadd.f32 %v1947, %v1999
        %v2001 = vpop.f32.mrb[0].mxu0
        %v2002 = vadd.f32 %v1949, %v2001
        %2003 = vdwg.mxu0
        %v2038 = vunpack.c.l.b16 %v1586
        %v2039 = vunpack.c.h.b16 %v1586
        %v2040 = vunpack.c.l.b16 %v1587
        %v2041 = vunpack.c.h.b16 %v1587
        %v2042 = vunpack.c.l.b16 %v1588
        %v2043 = vunpack.c.h.b16 %v1588
        %v2044 = vunpack.c.l.b16 %v1589
        %v2045 = vunpack.c.h.b16 %v1589
        %v2046 = vunpack.c.l.b16 %v1590
        %v2047 = vunpack.c.h.b16 %v1590
        %v2048 = vunpack.c.l.b16 %v1591
        %v2049 = vunpack.c.h.b16 %v1591
        %v2050 = vunpack.c.l.b16 %v1592
        %v2051 = vunpack.c.h.b16 %v1592
        %v2052 = vunpack.c.l.b16 %v1593
        %v2053 = vunpack.c.h.b16 %v1593
        %v2054 = vunpack.c.l.b16 %v1594
        %v2055 = vunpack.c.h.b16 %v1594
        %v2056 = vunpack.c.l.b16 %v1595
        %v2057 = vunpack.c.h.b16 %v1595
        %v2058 = vunpack.c.l.b16 %v1596
        %v2059 = vunpack.c.h.b16 %v1596
        %v2060 = vunpack.c.l.b16 %v1597
        %v2061 = vunpack.c.h.b16 %v1597
        %v2062 = vunpack.c.l.b16 %v1598
        %v2063 = vunpack.c.h.b16 %v1598
        %v2064 = vunpack.c.l.b16 %v1599
        %v2065 = vunpack.c.h.b16 %v1599
        %v2066 = vunpack.c.l.b16 %v1600
        %v2067 = vunpack.c.h.b16 %v1600
        %v2068 = vunpack.c.l.b16 %v1601
        %v2069 = vunpack.c.h.b16 %v1601
        %v2070 = vunpack.c.l.b16 %v1602
        %v2071 = vunpack.c.h.b16 %v1602
        %v2072 = vunpack.c.l.b16 %v1603
        %v2073 = vunpack.c.h.b16 %v1603
        %v2074 = vunpack.c.l.b16 %v1604
        %v2075 = vunpack.c.h.b16 %v1604
        %v2076 = vunpack.c.l.b16 %v1605
        %v2077 = vunpack.c.h.b16 %v1605
        %v2078 = vunpack.c.l.b16 %v1606
        %v2079 = vunpack.c.h.b16 %v1606
        %v2080 = vunpack.c.l.b16 %v1607
        %v2081 = vunpack.c.h.b16 %v1607
        %v2082 = vunpack.c.l.b16 %v1608
        %v2083 = vunpack.c.h.b16 %v1608
        %v2084 = vunpack.c.l.b16 %v1609
        %v2085 = vunpack.c.h.b16 %v1609
        %v2086 = vunpack.c.l.b16 %v1610
        %v2087 = vunpack.c.h.b16 %v1610
        %v2088 = vunpack.c.l.b16 %v1611
        %v2089 = vunpack.c.h.b16 %v1611
        %v2090 = vunpack.c.l.b16 %v1612
        %v2091 = vunpack.c.h.b16 %v1612
        %v2092 = vunpack.c.l.b16 %v1613
        %v2093 = vunpack.c.h.b16 %v1613
        %v2094 = vunpack.c.l.b16 %v1614
        %v2095 = vunpack.c.h.b16 %v1614
        %v2096 = vunpack.c.l.b16 %v1615
        %v2097 = vunpack.c.h.b16 %v1615
        %v2098 = vunpack.c.l.b16 %v1616
        %v2099 = vunpack.c.h.b16 %v1616
        %v2100 = vunpack.c.l.b16 %v1617
        %v2101 = vunpack.c.h.b16 %v1617
        %v2102 = vunpack.c.l.b16 %v1618
        %v2103 = vunpack.c.h.b16 %v1618
        %v2104 = vunpack.c.l.b16 %v1619
        %v2105 = vunpack.c.h.b16 %v1619
        %v2106 = vpack.c.b16 %v2040, %v2038
        %v2107 = vpack.c.b16 %v2041, %v2039
        %v2108 = vpack.c.b16 %v2044, %v2042
        %v2109 = vpack.c.b16 %v2045, %v2043
        %v2110 = vpack.c.b16 %v2048, %v2046
        %v2111 = vpack.c.b16 %v2049, %v2047
        %v2112 = vpack.c.b16 %v2052, %v2050
        %v2113 = vpack.c.b16 %v2053, %v2051
        %v2114 = vpack.c.b16 %v2056, %v2054
        %v2115 = vpack.c.b16 %v2057, %v2055
        %v2116 = vpack.c.b16 %v2060, %v2058
        %v2117 = vpack.c.b16 %v2061, %v2059
        %v2118 = vpack.c.b16 %v2064, %v2062
        %v2119 = vpack.c.b16 %v2065, %v2063
        %v2120 = vpack.c.b16 %v2068, %v2066
        %v2121 = vpack.c.b16 %v2069, %v2067
        %v2122 = vpack.c.b16 %v2072, %v2070
        %v2123 = vpack.c.b16 %v2073, %v2071
        %v2124 = vpack.c.b16 %v2076, %v2074
        %v2125 = vpack.c.b16 %v2077, %v2075
        %v2126 = vpack.c.b16 %v2080, %v2078
        %v2127 = vpack.c.b16 %v2081, %v2079
        %v2128 = vpack.c.b16 %v2084, %v2082
        %v2129 = vpack.c.b16 %v2085, %v2083
        %v2130 = vpack.c.b16 %v2088, %v2086
        %v2131 = vpack.c.b16 %v2089, %v2087
        %v2132 = vpack.c.b16 %v2092, %v2090
        %v2133 = vpack.c.b16 %v2093, %v2091
        %v2134 = vpack.c.b16 %v2096, %v2094
        %v2135 = vpack.c.b16 %v2097, %v2095
        %v2136 = vpack.c.b16 %v2100, %v2098
        %v2137 = vpack.c.b16 %v2101, %v2099
        %v2138 = vpack.c.b16 %v2104, %v2102
        %v2139 = vpack.c.b16 %v2105, %v2103
        %v2174 = vsel %vm847, %v1582, 0
        %v2176 = vsel %vm847, %v1585, 0
        %2178 = vmatprep.subr.bf16.mxu0 %v2107
        %2179 = vmatpush1.bf16.msra.mxu0 %v2106
        %2180 = vmatprep.subr.bf16.mxu0 %v2109
        %2181 = vmatpush1.bf16.msra.mxu0 %v2108
        %2182 = vmatprep.subr.bf16.mxu0 %v2111
        %2183 = vmatpush1.bf16.msra.mxu0 %v2110
        %2184 = vmatprep.subr.bf16.mxu0 %v2113
        %2185 = vmatpush1.bf16.msra.mxu0 %v2112
        %2186 = vmatprep.subr.bf16.mxu0 %v2115
        %2187 = vmatpush1.bf16.msra.mxu0 %v2114
        %2188 = vmatprep.subr.bf16.mxu0 %v2117
        %2189 = vmatpush1.bf16.msra.mxu0 %v2116
        %2190 = vmatprep.subr.bf16.mxu0 %v2119
        %2191 = vmatpush1.bf16.msra.mxu0 %v2118
        %2192 = vmatprep.subr.bf16.mxu0 %v2121
        %2193 = vmatpush1.bf16.msra.mxu0 %v2120
        %2194 = vmatprep.subr.bf16.mxu0 %v2123
        %2195 = vmatpush1.bf16.msra.mxu0 %v2122
        %2196 = vmatprep.subr.bf16.mxu0 %v2125
        %2197 = vmatpush1.bf16.msra.mxu0 %v2124
        %2198 = vmatprep.subr.bf16.mxu0 %v2127
        %2199 = vmatpush1.bf16.msra.mxu0 %v2126
        %2200 = vmatprep.subr.bf16.mxu0 %v2129
        %2201 = vmatpush1.bf16.msra.mxu0 %v2128
        %2202 = vmatprep.subr.bf16.mxu0 %v2131
        %2203 = vmatpush1.bf16.msra.mxu0 %v2130
        %2204 = vmatprep.subr.bf16.mxu0 %v2133
        %2205 = vmatpush1.bf16.msra.mxu0 %v2132
        %2206 = vmatprep.subr.bf16.mxu0 %v2135
        %2207 = vmatpush1.bf16.msra.mxu0 %v2134
        %2208 = vmatprep.subr.bf16.mxu0 %v2137
        %2209 = vmatpush1.bf16.msra.mxu0 %v2136
        %2210 = vmatprep.mubr.bf16.mxu0 %v1581
        %2211 = vmatmul.mubr.bf16.gmra.mrb[0].mxu0 %v1580
        %v2212 = vpop.f32.mrb[0].mxu0
        %v2213 = vadd.f32 %v1986, %v2212
        %v2214 = vpop.f32.mrb[0].mxu0
        %v2215 = vadd.f32 %v1988, %v2214
        %v2216 = vpop.f32.mrb[0].mxu0
        %v2217 = vadd.f32 %v1990, %v2216
        %v2218 = vpop.f32.mrb[0].mxu0
        %v2219 = vadd.f32 %v1992, %v2218
        %2220 = vmatprep.mubr.bf16.mxu0 %v1584
        %2221 = vmatmul.mubr.bf16.gmra.mrb[0].mxu0 %v1583
        %v2222 = vpop.f32.mrb[0].mxu0
        %v2223 = vadd.f32 %v1996, %v2222
        %v2224 = vpop.f32.mrb[0].mxu0
        %v2225 = vadd.f32 %v1998, %v2224
        %v2226 = vpop.f32.mrb[0].mxu0
        %v2227 = vadd.f32 %v2000, %v2226
        %v2228 = vpop.f32.mrb[0].mxu0
        %v2229 = vadd.f32 %v2002, %v2228
        %2230 = vdwg.mxu0
        %2231 = vmatprep.subr.bf16.mxu0 %v2139
        %2232 = vmatpush1.bf16.msra.mxu0 %v2138
        %2233 = vmatprep.subr.bf16.mxu0 0
        %2234 = vmatpush1.bf16.msra.mxu0 0
        %2235 = vmatprep.subr.bf16.mxu0 0
        %2236 = vmatpush1.bf16.msra.mxu0 0
        %2237 = vmatprep.subr.bf16.mxu0 0
        %2238 = vmatpush1.bf16.msra.mxu0 0
        %2239 = vmatprep.subr.bf16.mxu0 0
        %2240 = vmatpush1.bf16.msra.mxu0 0
        %2241 = vmatprep.subr.bf16.mxu0 0
        %2242 = vmatpush1.bf16.msra.mxu0 0
        %2243 = vmatprep.subr.bf16.mxu0 0
        %2244 = vmatpush1.bf16.msra.mxu0 0
        %2245 = vmatprep.subr.bf16.mxu0 0
        %2246 = vmatpush1.bf16.msra.mxu0 0
        %2247 = vmatprep.subr.bf16.mxu0 0
        %2248 = vmatpush1.bf16.msra.mxu0 0
        %2249 = vmatprep.subr.bf16.mxu0 0
        %2250 = vmatpush1.bf16.msra.mxu0 0
        %2251 = vmatprep.subr.bf16.mxu0 0
        %2252 = vmatpush1.bf16.msra.mxu0 0
        %2253 = vmatprep.subr.bf16.mxu0 0
        %2254 = vmatpush1.bf16.msra.mxu0 0
        %2255 = vmatprep.subr.bf16.mxu0 0
        %2256 = vmatpush1.bf16.msra.mxu0 0
        %2257 = vmatprep.subr.bf16.mxu0 0
        %2258 = vmatpush1.bf16.msra.mxu0 0
        %2259 = vmatprep.subr.bf16.mxu0 0
        %2260 = vmatpush1.bf16.msra.mxu0 0
        %2261 = vmatprep.subr.bf16.mxu0 0
        %2262 = vmatpush1.bf16.msra.mxu0 0
        %2263 = vmatprep.mubr.bf16.mxu0 0
        %2264 = vmatmul.mubr.bf16.gmra.mrb[0].mxu0 %v2174
        %v2265 = vpop.f32.mrb[0].mxu0
        %v2266 = vadd.f32 %v2213, %v2265
        %v2267 = vpop.f32.mrb[0].mxu0
        %v2268 = vadd.f32 %v2215, %v2267
        %v2269 = vpop.f32.mrb[0].mxu0
        %v2270 = vadd.f32 %v2217, %v2269
        %v2271 = vpop.f32.mrb[0].mxu0
        %v2272 = vadd.f32 %v2219, %v2271
        %2273 = vmatprep.mubr.bf16.mxu0 0
        %2274 = vmatmul.mubr.bf16.gmra.mrb[0].mxu0 %v2176
        %v2275 = vpop.f32.mrb[0].mxu0
        %v2276 = vadd.f32 %v2223, %v2275
        %v2277 = vpop.f32.mrb[0].mxu0
        %v2278 = vadd.f32 %v2225, %v2277
        %v2279 = vpop.f32.mrb[0].mxu0
        %v2280 = vadd.f32 %v2227, %v2279
        %v2281 = vpop.f32.mrb[0].mxu0
        %v2282 = vadd.f32 %v2229, %v2281
        %2283 = vdwg.mxu0
        %s2284 = scalar_lea.vmem [#allocation14], 544
        %v2285 = vld [vmem:[%s2284] sm:$0xff]
        %v2286 = vld [vmem:[%s2284 + $0x8] sm:$0xff]
        %v2287 = vld [vmem:[%s2284 + $0x10] sm:$0xff]
        %v2288 = vld [vmem:[%s2284 + $0x18] sm:$0xff]
        %v2289 = vld [vmem:[%s2284 + $0x20] sm:$0xff]
        %v2290 = vld [vmem:[%s2284 + $0x28] sm:$0xff]
        %v2291 = vld [vmem:[%s2284 + $0x30] sm:$0xff]
        %v2292 = vld [vmem:[%s2284 + $0x38] sm:$0xff]
        %v2293 = vld [vmem:[%s2284 + $0x40] sm:$0xff]
        %v2294 = vld [vmem:[%s2284 + $0x48] sm:$0xff]
        %v2295 = vld [vmem:[%s2284 + $0x50] sm:$0xff]
        %v2296 = vld [vmem:[%s2284 + $0x58] sm:$0xff]
        %v2297 = vld [vmem:[%s2284 + $0x60] sm:$0xff]
        %v2298 = vld [vmem:[%s2284 + $0x68] sm:$0xff]
        %v2299 = vld [vmem:[%s2284 + $0x70] sm:$0xff]
        %v2300 = vld [vmem:[%s2284 + $0x78] sm:$0xff]
        %v2301 = vld [vmem:[%s2284 + $0x80] sm:$0xff]
        %v2302 = vld [vmem:[%s2284 + $0x88] sm:$0xff]
        %v2303 = vld [vmem:[%s2284 + $0x90] sm:$0xff]
        %v2304 = vld [vmem:[%s2284 + $0x98] sm:$0xff]
        %v2305 = vld [vmem:[%s2284 + $0xa0] sm:$0xff]
        %v2306 = vld [vmem:[%s2284 + $0xa8] sm:$0xff]
        %v2307 = vld [vmem:[%s2284 + $0xb0] sm:$0xff]
        %v2308 = vld [vmem:[%s2284 + $0xb8] sm:$0xff]
        %v2309 = vld [vmem:[%s2284 + $0xc0] sm:$0xff]
        %v2310 = vld [vmem:[%s2284 + $0xc8] sm:$0xff]
        %v2311 = vld [vmem:[%s2284 + $0xd0] sm:$0xff]
        %v2312 = vld [vmem:[%s2284 + $0xd8] sm:$0xff]
        %v2313 = vld [vmem:[%s2284 + $0xe0] sm:$0xff]
        %v2314 = vld [vmem:[%s2284 + $0xe8] sm:$0xff]
        %v2315 = vld [vmem:[%s2284 + $0xf0] sm:$0xff]
        %v2316 = vld [vmem:[%s2284 + $0xf8] sm:$0xff]
        %v2317 = vld [vmem:[%s2284 + $0x100] sm:$0xff]
        %v2318 = vld [vmem:[%s2284 + $0x108] sm:$0xff]
        %v2328 = vrot.slane %v1580, 1
        %v2329 = vrot.slane %v1583, 1
        %v2330 = vsel %vm1097, %v2328, %v2329
        %v2331 = vrot.slane %v1581, 1
        %v2332 = vrot.slane %v1584, 1
        %v2333 = vsel %vm1097, %v2331, %v2332
        %v2334 = vrot.slane %v1582, 1
        %v2335 = vrot.slane %v1585, 1
        %v2336 = vsel %vm1097, %v2334, %v2335
        %v2337 = vrot.slane %v1620, 1
        %v2338 = vsel %vm1097, %v2329, %v2337
        %v2339 = vrot.slane %v1621, 1
        %v2340 = vsel %vm1097, %v2332, %v2339
        %v2341 = vrot.slane %v1622, 1
        %v2342 = vsel %vm1097, %v2335, %v2341
        %v2381 = vunpack.c.l.b16 %v2285
        %v2382 = vunpack.c.h.b16 %v2285
        %v2383 = vunpack.c.l.b16 %v2286
        %v2384 = vunpack.c.h.b16 %v2286
        %v2385 = vunpack.c.l.b16 %v2287
        %v2386 = vunpack.c.h.b16 %v2287
        %v2387 = vunpack.c.l.b16 %v2288
        %v2388 = vunpack.c.h.b16 %v2288
        %v2389 = vunpack.c.l.b16 %v2289
        %v2390 = vunpack.c.h.b16 %v2289
        %v2391 = vunpack.c.l.b16 %v2290
        %v2392 = vunpack.c.h.b16 %v2290
        %v2393 = vunpack.c.l.b16 %v2291
        %v2394 = vunpack.c.h.b16 %v2291
        %v2395 = vunpack.c.l.b16 %v2292
        %v2396 = vunpack.c.h.b16 %v2292
        %v2397 = vunpack.c.l.b16 %v2293
        %v2398 = vunpack.c.h.b16 %v2293
        %v2399 = vunpack.c.l.b16 %v2294
        %v2400 = vunpack.c.h.b16 %v2294
        %v2401 = vunpack.c.l.b16 %v2295
        %v2402 = vunpack.c.h.b16 %v2295
        %v2403 = vunpack.c.l.b16 %v2296
        %v2404 = vunpack.c.h.b16 %v2296
        %v2405 = vunpack.c.l.b16 %v2297
        %v2406 = vunpack.c.h.b16 %v2297
        %v2407 = vunpack.c.l.b16 %v2298
        %v2408 = vunpack.c.h.b16 %v2298
        %v2409 = vunpack.c.l.b16 %v2299
        %v2410 = vunpack.c.h.b16 %v2299
        %v2411 = vunpack.c.l.b16 %v2300
        %v2412 = vunpack.c.h.b16 %v2300
        %v2413 = vunpack.c.l.b16 %v2301
        %v2414 = vunpack.c.h.b16 %v2301
        %v2415 = vunpack.c.l.b16 %v2302
        %v2416 = vunpack.c.h.b16 %v2302
        %v2417 = vunpack.c.l.b16 %v2303
        %v2418 = vunpack.c.h.b16 %v2303
        %v2419 = vunpack.c.l.b16 %v2304
        %v2420 = vunpack.c.h.b16 %v2304
        %v2421 = vunpack.c.l.b16 %v2305
        %v2422 = vunpack.c.h.b16 %v2305
        %v2423 = vunpack.c.l.b16 %v2306
        %v2424 = vunpack.c.h.b16 %v2306
        %v2425 = vunpack.c.l.b16 %v2307
        %v2426 = vunpack.c.h.b16 %v2307
        %v2427 = vunpack.c.l.b16 %v2308
        %v2428 = vunpack.c.h.b16 %v2308
        %v2429 = vunpack.c.l.b16 %v2309
        %v2430 = vunpack.c.h.b16 %v2309
        %v2431 = vunpack.c.l.b16 %v2310
        %v2432 = vunpack.c.h.b16 %v2310
        %v2433 = vunpack.c.l.b16 %v2311
        %v2434 = vunpack.c.h.b16 %v2311
        %v2435 = vunpack.c.l.b16 %v2312
        %v2436 = vunpack.c.h.b16 %v2312
        %v2437 = vunpack.c.l.b16 %v2313
        %v2438 = vunpack.c.h.b16 %v2313
        %v2439 = vunpack.c.l.b16 %v2314
        %v2440 = vunpack.c.h.b16 %v2314
        %v2441 = vunpack.c.l.b16 %v2315
        %v2442 = vunpack.c.h.b16 %v2315
        %v2443 = vunpack.c.l.b16 %v2316
        %v2444 = vunpack.c.h.b16 %v2316
        %v2445 = vunpack.c.l.b16 %v2317
        %v2446 = vunpack.c.h.b16 %v2317
        %v2447 = vunpack.c.l.b16 %v2318
        %v2448 = vunpack.c.h.b16 %v2318
        %v2449 = vpack.c.b16 %v2383, %v2381
        %v2450 = vpack.c.b16 %v2384, %v2382
        %v2451 = vpack.c.b16 %v2387, %v2385
        %v2452 = vpack.c.b16 %v2388, %v2386
        %v2453 = vpack.c.b16 %v2391, %v2389
        %v2454 = vpack.c.b16 %v2392, %v2390
        %v2455 = vpack.c.b16 %v2395, %v2393
        %v2456 = vpack.c.b16 %v2396, %v2394
        %v2457 = vpack.c.b16 %v2399, %v2397
        %v2458 = vpack.c.b16 %v2400, %v2398
        %v2459 = vpack.c.b16 %v2403, %v2401
        %v2460 = vpack.c.b16 %v2404, %v2402
        %v2461 = vpack.c.b16 %v2407, %v2405
        %v2462 = vpack.c.b16 %v2408, %v2406
        %v2463 = vpack.c.b16 %v2411, %v2409
        %v2464 = vpack.c.b16 %v2412, %v2410
        %v2465 = vpack.c.b16 %v2415, %v2413
        %v2466 = vpack.c.b16 %v2416, %v2414
        %v2467 = vpack.c.b16 %v2419, %v2417
        %v2468 = vpack.c.b16 %v2420, %v2418
        %v2469 = vpack.c.b16 %v2423, %v2421
        %v2470 = vpack.c.b16 %v2424, %v2422
        %v2471 = vpack.c.b16 %v2427, %v2425
        %v2472 = vpack.c.b16 %v2428, %v2426
        %v2473 = vpack.c.b16 %v2431, %v2429
        %v2474 = vpack.c.b16 %v2432, %v2430
        %v2475 = vpack.c.b16 %v2435, %v2433
        %v2476 = vpack.c.b16 %v2436, %v2434
        %v2477 = vpack.c.b16 %v2439, %v2437
        %v2478 = vpack.c.b16 %v2440, %v2438
        %v2479 = vpack.c.b16 %v2443, %v2441
        %v2480 = vpack.c.b16 %v2444, %v2442
        %v2481 = vpack.c.b16 %v2447, %v2445
        %v2482 = vpack.c.b16 %v2448, %v2446
        %v2518 = vsel %vm847, %v2336, 0
        %v2521 = vsel %vm847, %v2342, 0
        %2523 = vmatprep.subr.bf16.mxu0 %v2450
        %2524 = vmatpush1.bf16.msra.mxu0 %v2449
        %2525 = vmatprep.subr.bf16.mxu0 %v2452
        %2526 = vmatpush1.bf16.msra.mxu0 %v2451
        %2527 = vmatprep.subr.bf16.mxu0 %v2454
        %2528 = vmatpush1.bf16.msra.mxu0 %v2453
        %2529 = vmatprep.subr.bf16.mxu0 %v2456
        %2530 = vmatpush1.bf16.msra.mxu0 %v2455
        %2531 = vmatprep.subr.bf16.mxu0 %v2458
        %2532 = vmatpush1.bf16.msra.mxu0 %v2457
        %2533 = vmatprep.subr.bf16.mxu0 %v2460
        %2534 = vmatpush1.bf16.msra.mxu0 %v2459
        %2535 = vmatprep.subr.bf16.mxu0 %v2462
        %2536 = vmatpush1.bf16.msra.mxu0 %v2461
        %2537 = vmatprep.subr.bf16.mxu0 %v2464
        %2538 = vmatpush1.bf16.msra.mxu0 %v2463
        %2539 = vmatprep.subr.bf16.mxu0 %v2466
        %2540 = vmatpush1.bf16.msra.mxu0 %v2465
        %2541 = vmatprep.subr.bf16.mxu0 %v2468
        %2542 = vmatpush1.bf16.msra.mxu0 %v2467
        %2543 = vmatprep.subr.bf16.mxu0 %v2470
        %2544 = vmatpush1.bf16.msra.mxu0 %v2469
        %2545 = vmatprep.subr.bf16.mxu0 %v2472
        %2546 = vmatpush1.bf16.msra.mxu0 %v2471
        %2547 = vmatprep.subr.bf16.mxu0 %v2474
        %2548 = vmatpush1.bf16.msra.mxu0 %v2473
        %2549 = vmatprep.subr.bf16.mxu0 %v2476
        %2550 = vmatpush1.bf16.msra.mxu0 %v2475
        %2551 = vmatprep.subr.bf16.mxu0 %v2478
        %2552 = vmatpush1.bf16.msra.mxu0 %v2477
        %2553 = vmatprep.subr.bf16.mxu0 %v2480
        %2554 = vmatpush1.bf16.msra.mxu0 %v2479
        %2555 = vmatprep.mubr.bf16.mxu0 %v2333
        %2556 = vmatmul.mubr.bf16.gmra.mrb[0].mxu0 %v2330
        %v2557 = vpop.f32.mrb[0].mxu0
        %v2558 = vadd.f32 0.0, %v2557
        %v2559 = vpop.f32.mrb[0].mxu0
        %v2560 = vadd.f32 0.0, %v2559
        %v2561 = vpop.f32.mrb[0].mxu0
        %v2562 = vadd.f32 0.0, %v2561
        %v2563 = vpop.f32.mrb[0].mxu0
        %v2564 = vadd.f32 0.0, %v2563
        %2565 = vmatprep.mubr.bf16.mxu0 %v2340
        %2566 = vmatmul.mubr.bf16.gmra.mrb[0].mxu0 %v2338
        %v2567 = vpop.f32.mrb[0].mxu0
        %v2568 = vadd.f32 0.0, %v2567
        %v2569 = vpop.f32.mrb[0].mxu0
        %v2570 = vadd.f32 0.0, %v2569
        %v2571 = vpop.f32.mrb[0].mxu0
        %v2572 = vadd.f32 0.0, %v2571
        %v2573 = vpop.f32.mrb[0].mxu0
        %v2574 = vadd.f32 0.0, %v2573
        %2575 = vdwg.mxu0
        %2576 = vmatprep.subr.bf16.mxu0 %v2482
        %2577 = vmatpush1.bf16.msra.mxu0 %v2481
        %2578 = vmatprep.subr.bf16.mxu0 0
        %2579 = vmatpush1.bf16.msra.mxu0 0
        %2580 = vmatprep.subr.bf16.mxu0 0
        %2581 = vmatpush1.bf16.msra.mxu0 0
        %2582 = vmatprep.subr.bf16.mxu0 0
        %2583 = vmatpush1.bf16.msra.mxu0 0
        %2584 = vmatprep.subr.bf16.mxu0 0
        %2585 = vmatpush1.bf16.msra.mxu0 0
        %2586 = vmatprep.subr.bf16.mxu0 0
        %2587 = vmatpush1.bf16.msra.mxu0 0
        %2588 = vmatprep.subr.bf16.mxu0 0
        %2589 = vmatpush1.bf16.msra.mxu0 0
        %2590 = vmatprep.subr.bf16.mxu0 0
        %2591 = vmatpush1.bf16.msra.mxu0 0
        %2592 = vmatprep.subr.bf16.mxu0 0
        %2593 = vmatpush1.bf16.msra.mxu0 0
        %2594 = vmatprep.subr.bf16.mxu0 0
        %2595 = vmatpush1.bf16.msra.mxu0 0
        %2596 = vmatprep.subr.bf16.mxu0 0
        %2597 = vmatpush1.bf16.msra.mxu0 0
        %2598 = vmatprep.subr.bf16.mxu0 0
        %2599 = vmatpush1.bf16.msra.mxu0 0
        %2600 = vmatprep.subr.bf16.mxu0 0
        %2601 = vmatpush1.bf16.msra.mxu0 0
        %2602 = vmatprep.subr.bf16.mxu0 0
        %2603 = vmatpush1.bf16.msra.mxu0 0
        %2604 = vmatprep.subr.bf16.mxu0 0
        %2605 = vmatpush1.bf16.msra.mxu0 0
        %2606 = vmatprep.subr.bf16.mxu0 0
        %2607 = vmatpush1.bf16.msra.mxu0 0
        %2608 = vmatprep.mubr.bf16.mxu0 0
        %2609 = vmatmul.mubr.bf16.gmra.mrb[0].mxu0 %v2518
        %v2610 = vpop.f32.mrb[0].mxu0
        %v2611 = vadd.f32 %v2558, %v2610
        %v2612 = vpop.f32.mrb[0].mxu0
        %v2613 = vadd.f32 %v2560, %v2612
        %v2614 = vpop.f32.mrb[0].mxu0
        %v2615 = vadd.f32 %v2562, %v2614
        %v2616 = vpop.f32.mrb[0].mxu0
        %v2617 = vadd.f32 %v2564, %v2616
        %2618 = vmatprep.mubr.bf16.mxu0 0
        %2619 = vmatmul.mubr.bf16.gmra.mrb[0].mxu0 %v2521
        %v2620 = vpop.f32.mrb[0].mxu0
        %v2621 = vadd.f32 %v2568, %v2620
        %v2622 = vpop.f32.mrb[0].mxu0
        %v2623 = vadd.f32 %v2570, %v2622
        %v2624 = vpop.f32.mrb[0].mxu0
        %v2625 = vadd.f32 %v2572, %v2624
        %v2626 = vpop.f32.mrb[0].mxu0
        %v2627 = vadd.f32 %v2574, %v2626
        %2628 = vdwg.mxu0
        %v2629 = vadd.f32 %v2266, %v2611
        %v2630 = vadd.f32 %v2268, %v2613
        %v2631 = vadd.f32 %v2270, %v2615
        %v2632 = vadd.f32 %v2272, %v2617
        %v2633 = vadd.f32 %v2276, %v2621
        %v2634 = vadd.f32 %v2278, %v2623
        %v2635 = vadd.f32 %v2280, %v2625
        %v2636 = vadd.f32 %v2282, %v2627
        %v2637 = vld [vmem:[#allocation16] sm:$0x3]
        %v2639 = vlaneseq
        %v2640 = vshrl.u32 %v2639, 7
        %v2641 = vsub.s32 0, %v2640
        %v2642 = vrot.slane %v2637, %v2641
        %v2643 = vlaneseq
        %v2644 = vshrl.u32 %v2643, 7
        %v2645 = vsub.s32 1, %v2644
        %v2646 = vrot.slane %v2637, %v2645
        %v2649 = vadd.f32 %v2629, %v2642
        %v2650 = vadd.f32 %v2630, %v2646
        %v2651 = vadd.f32 %v2631, %v2642
        %v2652 = vadd.f32 %v2632, %v2646
        %v2653 = vadd.f32 %v2633, %v2642
        %v2654 = vadd.f32 %v2634, %v2646
        %v2655 = vadd.f32 %v2635, %v2642
        %v2656 = vadd.f32 %v2636, %v2646
        %v2657 = vmax.f32 %v2649, 0.0
        %v2658 = vmax.f32 %v2650, 0.0
        %v2659 = vmax.f32 %v2651, 0.0
        %v2660 = vmax.f32 %v2652, 0.0
        %v2661 = vmax.f32 %v2653, 0.0
        %v2662 = vmax.f32 %v2654, 0.0
        %v2663 = vmax.f32 %v2655, 0.0
        %v2664 = vmax.f32 %v2656, 0.0
        %v2665 = vpack.c.bf16 %v2659, %v2657
        %v2666 = vpack.c.bf16 %v2660, %v2658
        %v2667 = vpack.c.bf16 %v2663, %v2661
        %v2668 = vpack.c.bf16 %v2664, %v2662
        %v2669 = vld [vmem:[#allocation19] sm:$0xff]
        %v2670 = vld [vmem:[#allocation19 + $0x8] sm:$0xf]
        %v2671 = vld [vmem:[#allocation19 + $0xc] sm:$0xff]
        %v2672 = vld [vmem:[#allocation19 + $0x14] sm:$0xf]
        %v2673 = vld [vmem:[#allocation19 + $0x18] sm:$0xff]
        %v2674 = vld [vmem:[#allocation19 + $0x20] sm:$0xf]
        %v2675 = vld [vmem:[#allocation19 + $0x24] sm:$0xff]
        %v2676 = vld [vmem:[#allocation19 + $0x2c] sm:$0xf]
        %v2677 = vld [vmem:[#allocation19 + $0x30] sm:$0xff]
        %v2678 = vld [vmem:[#allocation19 + $0x38] sm:$0xf]
        %v2679 = vld [vmem:[#allocation19 + $0x3c] sm:$0xff]
        %v2680 = vld [vmem:[#allocation19 + $0x44] sm:$0xf]
        %v2681 = vld [vmem:[#allocation19 + $0x48] sm:$0xff]
        %v2682 = vld [vmem:[#allocation19 + $0x50] sm:$0xf]
        %v2683 = vld [vmem:[#allocation19 + $0x54] sm:$0xff]
        %v2684 = vld [vmem:[#allocation19 + $0x5c] sm:$0xf]
        %v2685 = vld [vmem:[#allocation19 + $0x60] sm:$0xff]
        %v2686 = vld [vmem:[#allocation19 + $0x68] sm:$0xf]
        %v2687 = vld [vmem:[#allocation19 + $0x6c] sm:$0xff]
        %v2688 = vld [vmem:[#allocation19 + $0x74] sm:$0xf]
        %v2689 = vld [vmem:[#allocation19 + $0x78] sm:$0xff]
        %v2690 = vld [vmem:[#allocation19 + $0x80] sm:$0xf]
        %v2691 = vld [vmem:[#allocation19 + $0x84] sm:$0xff]
        %v2692 = vld [vmem:[#allocation19 + $0x8c] sm:$0xf]
        %v2693 = vld [vmem:[#allocation19 + $0x90] sm:$0xff]
        %v2694 = vld [vmem:[#allocation19 + $0x98] sm:$0xf]
        %v2695 = vld [vmem:[#allocation19 + $0x9c] sm:$0xff]
        %v2696 = vld [vmem:[#allocation19 + $0xa4] sm:$0xf]
        %v2697 = vld [vmem:[#allocation19 + $0xa8] sm:$0xff]
        %v2698 = vld [vmem:[#allocation19 + $0xb0] sm:$0xf]
        %v2699 = vld [vmem:[#allocation19 + $0xb4] sm:$0xff]
        %v2700 = vld [vmem:[#allocation19 + $0xbc] sm:$0xf]
        %v2701 = vld [vmem:[#allocation19 + $0xc0] sm:$0xff]
        %v2702 = vld [vmem:[#allocation19 + $0xc8] sm:$0xf]
        %v2703 = vld [vmem:[#allocation19 + $0xcc] sm:$0xff]
        %v2704 = vld [vmem:[#allocation19 + $0xd4] sm:$0xf]
        %v2705 = vld [vmem:[#allocation19 + $0xd8] sm:$0xff]
        %v2706 = vld [vmem:[#allocation19 + $0xe0] sm:$0xf]
        %v2707 = vld [vmem:[#allocation19 + $0xe4] sm:$0xff]
        %v2708 = vld [vmem:[#allocation19 + $0xec] sm:$0xf]
        %v2709 = vld [vmem:[#allocation19 + $0xf0] sm:$0xff]
        %v2710 = vld [vmem:[#allocation19 + $0xf8] sm:$0xf]
        %v2711 = vld [vmem:[#allocation19 + $0xfc] sm:$0xff]
        %v2712 = vld [vmem:[#allocation19 + $0x104] sm:$0xf]
        %v2713 = vld [vmem:[#allocation19 + $0x108] sm:$0xff]
        %v2714 = vld [vmem:[#allocation19 + $0x110] sm:$0xf]
        %v2715 = vld [vmem:[#allocation19 + $0x114] sm:$0xff]
        %v2716 = vld [vmem:[#allocation19 + $0x11c] sm:$0xf]
        %v2717 = vld [vmem:[#allocation19 + $0x120] sm:$0xff]
        %v2718 = vld [vmem:[#allocation19 + $0x128] sm:$0xf]
        %v2719 = vld [vmem:[#allocation19 + $0x12c] sm:$0xff]
        %v2720 = vld [vmem:[#allocation19 + $0x134] sm:$0xf]
        %v2721 = vld [vmem:[#allocation19 + $0x138] sm:$0xff]
        %v2722 = vld [vmem:[#allocation19 + $0x140] sm:$0xf]
        %v2723 = vld [vmem:[#allocation19 + $0x144] sm:$0xff]
        %v2724 = vld [vmem:[#allocation19 + $0x14c] sm:$0xf]
        %v2725 = vld [vmem:[#allocation19 + $0x150] sm:$0xff]
        %v2726 = vld [vmem:[#allocation19 + $0x158] sm:$0xf]
        %v2727 = vld [vmem:[#allocation19 + $0x15c] sm:$0xff]
        %v2728 = vld [vmem:[#allocation19 + $0x164] sm:$0xf]
        %v2729 = vld [vmem:[#allocation19 + $0x168] sm:$0xff]
        %v2730 = vld [vmem:[#allocation19 + $0x170] sm:$0xf]
        %v2731 = vld [vmem:[#allocation19 + $0x174] sm:$0xff]
        %v2732 = vld [vmem:[#allocation19 + $0x17c] sm:$0xf]
        %v2797 = vunpack.c.l.b16 %v2669
        %v2798 = vunpack.c.h.b16 %v2669
        %v2799 = vunpack.c.l.b16 %v2670
        %v2800 = vunpack.c.l.b16 %v2671
        %v2801 = vunpack.c.h.b16 %v2671
        %v2802 = vunpack.c.l.b16 %v2672
        %v2803 = vunpack.c.l.b16 %v2673
        %v2804 = vunpack.c.h.b16 %v2673
        %v2805 = vunpack.c.l.b16 %v2674
        %v2806 = vunpack.c.l.b16 %v2675
        %v2807 = vunpack.c.h.b16 %v2675
        %v2808 = vunpack.c.l.b16 %v2676
        %v2809 = vunpack.c.l.b16 %v2677
        %v2810 = vunpack.c.h.b16 %v2677
        %v2811 = vunpack.c.l.b16 %v2678
        %v2812 = vunpack.c.l.b16 %v2679
        %v2813 = vunpack.c.h.b16 %v2679
        %v2814 = vunpack.c.l.b16 %v2680
        %v2815 = vunpack.c.l.b16 %v2681
        %v2816 = vunpack.c.h.b16 %v2681
        %v2817 = vunpack.c.l.b16 %v2682
        %v2818 = vunpack.c.l.b16 %v2683
        %v2819 = vunpack.c.h.b16 %v2683
        %v2820 = vunpack.c.l.b16 %v2684
        %v2821 = vunpack.c.l.b16 %v2685
        %v2822 = vunpack.c.h.b16 %v2685
        %v2823 = vunpack.c.l.b16 %v2686
        %v2824 = vunpack.c.l.b16 %v2687
        %v2825 = vunpack.c.h.b16 %v2687
        %v2826 = vunpack.c.l.b16 %v2688
        %v2827 = vunpack.c.l.b16 %v2689
        %v2828 = vunpack.c.h.b16 %v2689
        %v2829 = vunpack.c.l.b16 %v2690
        %v2830 = vunpack.c.l.b16 %v2691
        %v2831 = vunpack.c.h.b16 %v2691
        %v2832 = vunpack.c.l.b16 %v2692
        %v2833 = vunpack.c.l.b16 %v2693
        %v2834 = vunpack.c.h.b16 %v2693
        %v2835 = vunpack.c.l.b16 %v2694
        %v2836 = vunpack.c.l.b16 %v2695
        %v2837 = vunpack.c.h.b16 %v2695
        %v2838 = vunpack.c.l.b16 %v2696
        %v2839 = vunpack.c.l.b16 %v2697
        %v2840 = vunpack.c.h.b16 %v2697
        %v2841 = vunpack.c.l.b16 %v2698
        %v2842 = vunpack.c.l.b16 %v2699
        %v2843 = vunpack.c.h.b16 %v2699
        %v2844 = vunpack.c.l.b16 %v2700
        %v2845 = vunpack.c.l.b16 %v2701
        %v2846 = vunpack.c.h.b16 %v2701
        %v2847 = vunpack.c.l.b16 %v2702
        %v2848 = vunpack.c.l.b16 %v2703
        %v2849 = vunpack.c.h.b16 %v2703
        %v2850 = vunpack.c.l.b16 %v2704
        %v2851 = vunpack.c.l.b16 %v2705
        %v2852 = vunpack.c.h.b16 %v2705
        %v2853 = vunpack.c.l.b16 %v2706
        %v2854 = vunpack.c.l.b16 %v2707
        %v2855 = vunpack.c.h.b16 %v2707
        %v2856 = vunpack.c.l.b16 %v2708
        %v2857 = vunpack.c.l.b16 %v2709
        %v2858 = vunpack.c.h.b16 %v2709
        %v2859 = vunpack.c.l.b16 %v2710
        %v2860 = vunpack.c.l.b16 %v2711
        %v2861 = vunpack.c.h.b16 %v2711
        %v2862 = vunpack.c.l.b16 %v2712
        %v2863 = vunpack.c.l.b16 %v2713
        %v2864 = vunpack.c.h.b16 %v2713
        %v2865 = vunpack.c.l.b16 %v2714
        %v2866 = vunpack.c.l.b16 %v2715
        %v2867 = vunpack.c.h.b16 %v2715
        %v2868 = vunpack.c.l.b16 %v2716
        %v2869 = vunpack.c.l.b16 %v2717
        %v2870 = vunpack.c.h.b16 %v2717
        %v2871 = vunpack.c.l.b16 %v2718
        %v2872 = vunpack.c.l.b16 %v2719
        %v2873 = vunpack.c.h.b16 %v2719
        %v2874 = vunpack.c.l.b16 %v2720
        %v2875 = vunpack.c.l.b16 %v2721
        %v2876 = vunpack.c.h.b16 %v2721
        %v2877 = vunpack.c.l.b16 %v2722
        %v2878 = vunpack.c.l.b16 %v2723
        %v2879 = vunpack.c.h.b16 %v2723
        %v2880 = vunpack.c.l.b16 %v2724
        %v2881 = vunpack.c.l.b16 %v2725
        %v2882 = vunpack.c.h.b16 %v2725
        %v2883 = vunpack.c.l.b16 %v2726
        %v2884 = vunpack.c.l.b16 %v2727
        %v2885 = vunpack.c.h.b16 %v2727
        %v2886 = vunpack.c.l.b16 %v2728
        %v2887 = vunpack.c.l.b16 %v2729
        %v2888 = vunpack.c.h.b16 %v2729
        %v2889 = vunpack.c.l.b16 %v2730
        %v2890 = vunpack.c.l.b16 %v2731
        %v2891 = vunpack.c.h.b16 %v2731
        %v2892 = vunpack.c.l.b16 %v2732
        %v2893 = vpack.c.b16 %v2800, %v2797
        %v2894 = vpack.c.b16 %v2801, %v2798
        %v2895 = vpack.c.b16 %v2802, %v2799
        %v2896 = vpack.c.b16 %v2806, %v2803
        %v2897 = vpack.c.b16 %v2807, %v2804
        %v2898 = vpack.c.b16 %v2808, %v2805
        %v2899 = vpack.c.b16 %v2812, %v2809
        %v2900 = vpack.c.b16 %v2813, %v2810
        %v2901 = vpack.c.b16 %v2814, %v2811
        %v2902 = vpack.c.b16 %v2818, %v2815
        %v2903 = vpack.c.b16 %v2819, %v2816
        %v2904 = vpack.c.b16 %v2820, %v2817
        %v2905 = vpack.c.b16 %v2824, %v2821
        %v2906 = vpack.c.b16 %v2825, %v2822
        %v2907 = vpack.c.b16 %v2826, %v2823
        %v2908 = vpack.c.b16 %v2830, %v2827
        %v2909 = vpack.c.b16 %v2831, %v2828
        %v2910 = vpack.c.b16 %v2832, %v2829
        %v2911 = vpack.c.b16 %v2836, %v2833
        %v2912 = vpack.c.b16 %v2837, %v2834
        %v2913 = vpack.c.b16 %v2838, %v2835
        %v2914 = vpack.c.b16 %v2842, %v2839
        %v2915 = vpack.c.b16 %v2843, %v2840
        %v2916 = vpack.c.b16 %v2844, %v2841
        %v2917 = vpack.c.b16 %v2848, %v2845
        %v2918 = vpack.c.b16 %v2849, %v2846
        %v2919 = vpack.c.b16 %v2850, %v2847
        %v2920 = vpack.c.b16 %v2854, %v2851
        %v2921 = vpack.c.b16 %v2855, %v2852
        %v2922 = vpack.c.b16 %v2856, %v2853
        %v2923 = vpack.c.b16 %v2860, %v2857
        %v2924 = vpack.c.b16 %v2861, %v2858
        %v2925 = vpack.c.b16 %v2862, %v2859
        %v2926 = vpack.c.b16 %v2866, %v2863
        %v2927 = vpack.c.b16 %v2867, %v2864
        %v2928 = vpack.c.b16 %v2868, %v2865
        %v2929 = vpack.c.b16 %v2872, %v2869
        %v2930 = vpack.c.b16 %v2873, %v2870
        %v2931 = vpack.c.b16 %v2874, %v2871
        %v2932 = vpack.c.b16 %v2878, %v2875
        %v2933 = vpack.c.b16 %v2879, %v2876
        %v2934 = vpack.c.b16 %v2880, %v2877
        %v2935 = vpack.c.b16 %v2884, %v2881
        %v2936 = vpack.c.b16 %v2885, %v2882
        %v2937 = vpack.c.b16 %v2886, %v2883
        %v2938 = vpack.c.b16 %v2890, %v2887
        %v2939 = vpack.c.b16 %v2891, %v2888
        %v2940 = vpack.c.b16 %v2892, %v2889
        %2989 = vmatprep.subr.bf16.mxu0 %v2894
        %2990 = vmatpush1.bf16.msra.mxu0 %v2893
        %2991 = vmatprep.subr.bf16.mxu0 %v2897
        %2992 = vmatpush1.bf16.msra.mxu0 %v2896
        %2993 = vmatprep.subr.bf16.mxu0 %v2900
        %2994 = vmatpush1.bf16.msra.mxu0 %v2899
        %2995 = vmatprep.subr.bf16.mxu0 %v2903
        %2996 = vmatpush1.bf16.msra.mxu0 %v2902
        %2997 = vmatprep.subr.bf16.mxu0 %v2906
        %2998 = vmatpush1.bf16.msra.mxu0 %v2905
        %2999 = vmatprep.subr.bf16.mxu0 %v2909
        %3000 = vmatpush1.bf16.msra.mxu0 %v2908
        %3001 = vmatprep.subr.bf16.mxu0 %v2912
        %3002 = vmatpush1.bf16.msra.mxu0 %v2911
        %3003 = vmatprep.subr.bf16.mxu0 %v2915
        %3004 = vmatpush1.bf16.msra.mxu0 %v2914
        %3005 = vmatprep.subr.bf16.mxu0 %v2918
        %3006 = vmatpush1.bf16.msra.mxu0 %v2917
        %3007 = vmatprep.subr.bf16.mxu0 %v2921
        %3008 = vmatpush1.bf16.msra.mxu0 %v2920
        %3009 = vmatprep.subr.bf16.mxu0 %v2924
        %3010 = vmatpush1.bf16.msra.mxu0 %v2923
        %3011 = vmatprep.subr.bf16.mxu0 %v2927
        %3012 = vmatpush1.bf16.msra.mxu0 %v2926
        %3013 = vmatprep.subr.bf16.mxu0 %v2930
        %3014 = vmatpush1.bf16.msra.mxu0 %v2929
        %3015 = vmatprep.subr.bf16.mxu0 %v2933
        %3016 = vmatpush1.bf16.msra.mxu0 %v2932
        %3017 = vmatprep.subr.bf16.mxu0 %v2936
        %3018 = vmatpush1.bf16.msra.mxu0 %v2935
        %3019 = vmatprep.subr.bf16.mxu0 %v2939
        %3020 = vmatpush1.bf16.msra.mxu0 %v2938
        %3021 = vmatprep.mubr.bf16.mxu0 %v2666
        %3022 = vmatmul.mubr.bf16.gmra.mrb[0].mxu0 %v2665
        %v3023 = vpop.f32.mrb[0].mxu0
        %v3024 = vadd.f32 0.0, %v3023
        %v3025 = vpop.f32.mrb[0].mxu0
        %v3026 = vadd.f32 0.0, %v3025
        %v3027 = vpop.f32.mrb[0].mxu0
        %v3028 = vadd.f32 0.0, %v3027
        %v3029 = vpop.f32.mrb[0].mxu0
        %v3030 = vadd.f32 0.0, %v3029
        %3031 = vmatprep.mubr.bf16.mxu0 %v2668
        %3032 = vmatmul.mubr.bf16.gmra.mrb[0].mxu0 %v2667
        %v3033 = vpop.f32.mrb[0].mxu0
        %v3034 = vadd.f32 0.0, %v3033
        %v3035 = vpop.f32.mrb[0].mxu0
        %v3036 = vadd.f32 0.0, %v3035
        %v3037 = vpop.f32.mrb[0].mxu0
        %v3038 = vadd.f32 0.0, %v3037
        %v3039 = vpop.f32.mrb[0].mxu0
        %v3040 = vadd.f32 0.0, %v3039
        %3041 = vdwg.mxu0
        %3042 = vmatprep.subr.bf16.mxu0 0
        %3043 = vmatpush1.bf16.msra.mxu0 %v2895
        %3044 = vmatprep.subr.bf16.mxu0 0
        %3045 = vmatpush1.bf16.msra.mxu0 %v2898
        %3046 = vmatprep.subr.bf16.mxu0 0
        %3047 = vmatpush1.bf16.msra.mxu0 %v2901
        %3048 = vmatprep.subr.bf16.mxu0 0
        %3049 = vmatpush1.bf16.msra.mxu0 %v2904
        %3050 = vmatprep.subr.bf16.mxu0 0
        %3051 = vmatpush1.bf16.msra.mxu0 %v2907
        %3052 = vmatprep.subr.bf16.mxu0 0
        %3053 = vmatpush1.bf16.msra.mxu0 %v2910
        %3054 = vmatprep.subr.bf16.mxu0 0
        %3055 = vmatpush1.bf16.msra.mxu0 %v2913
        %3056 = vmatprep.subr.bf16.mxu0 0
        %3057 = vmatpush1.bf16.msra.mxu0 %v2916
        %3058 = vmatprep.subr.bf16.mxu0 0
        %3059 = vmatpush1.bf16.msra.mxu0 %v2919
        %3060 = vmatprep.subr.bf16.mxu0 0
        %3061 = vmatpush1.bf16.msra.mxu0 %v2922
        %3062 = vmatprep.subr.bf16.mxu0 0
        %3063 = vmatpush1.bf16.msra.mxu0 %v2925
        %3064 = vmatprep.subr.bf16.mxu0 0
        %3065 = vmatpush1.bf16.msra.mxu0 %v2928
        %3066 = vmatprep.subr.bf16.mxu0 0
        %3067 = vmatpush1.bf16.msra.mxu0 %v2931
        %3068 = vmatprep.subr.bf16.mxu0 0
        %3069 = vmatpush1.bf16.msra.mxu0 %v2934
        %3070 = vmatprep.subr.bf16.mxu0 0
        %3071 = vmatpush1.bf16.msra.mxu0 %v2937
        %3072 = vmatprep.subr.bf16.mxu0 0
        %3073 = vmatpush1.bf16.msra.mxu0 %v2940
        %3074 = vmatprep.mubr.bf16.mxu0 %v2666
        %3075 = vmatmul.mubr.bf16.gmra.mrb[0].mxu0 %v2665
        %v3076 = vpop.f32.mrb[0].mxu0
        %v3077 = vadd.f32 0.0, %v3076
        %v3078 = vpop.f32.mrb[0].mxu0
        %v3079 = vpop.f32.mrb[0].mxu0
        %v3080 = vadd.f32 0.0, %v3079
        %v3081 = vpop.f32.mrb[0].mxu0
        %3082 = vmatprep.mubr.bf16.mxu0 %v2668
        %3083 = vmatmul.mubr.bf16.gmra.mrb[0].mxu0 %v2667
        %v3084 = vpop.f32.mrb[0].mxu0
        %v3085 = vadd.f32 0.0, %v3084
        %v3086 = vpop.f32.mrb[0].mxu0
        %v3087 = vpop.f32.mrb[0].mxu0
        %v3088 = vadd.f32 0.0, %v3087
        %v3089 = vpop.f32.mrb[0].mxu0
        %3090 = vdwg.mxu0
        %v3091 = vld [vmem:[#allocation17] sm:$0xf]
        %v3092 = vld [vmem:[#allocation17 + $0x4] sm:$0xf]
        %v3093 = vld [vmem:[#allocation17 + $0x8] sm:$0xf]
        %v3094 = vld [vmem:[#allocation17 + $0xc] sm:$0xf]
        %v3095 = vld [vmem:[#allocation17 + $0x10] sm:$0x1]
        %v3096 = vpack.c.bf16 %v3028, %v3024
        %v3097 = vpack.c.bf16 %v3030, %v3026
        %v3098 = vpack.c.bf16 %v3080, %v3077
        %v3099 = vpack.c.bf16 %v3038, %v3034
        %v3100 = vpack.c.bf16 %v3040, %v3036
        %v3101 = vpack.c.bf16 %v3088, %v3085
        %v3107 = vunpack.c.l.b16 %v3091
        %v3108 = vunpack.c.l.b16 %v3092
        %v3109 = vunpack.c.l.b16 %v3093
        %v3110 = vunpack.c.l.b16 %v3094
        %v3111 = vunpack.c.l.b16 %v3095
        %v3112 = vpack.c.b16 %v3108, %v3107
        %v3113 = vpack.c.b16 %v3110, %v3109
        %v3114 = vpack.c.b16 %v3111, %v3111
        %vm3115 = vcmask 261120
        %v3117 = vsel %vm3115, %v3112, 0
        %v3120 = vsel %vm3115, %v3113, 0
        %v3123 = vsel %vm3115, %v3114, 0
        %3125 = vmatprep.subr.bf16.mxu0 %v3097
        %3126 = vmatpush1.bf16.msra.mxu0 %v3096
        %3127 = vmatprep.subr.bf16.mxu0 %v3100
        %3128 = vmatpush1.bf16.msra.mxu0 %v3099
        %3129 = vmatprep.subr.bf16.mxu0 0
        %3130 = vmatpush1.bf16.msra.mxu0 0
        %3131 = vmatprep.subr.bf16.mxu0 0
        %3132 = vmatpush1.bf16.msra.mxu0 0
        %3133 = vmatprep.subr.bf16.mxu0 0
        %3134 = vmatpush1.bf16.msra.mxu0 0
        %3135 = vmatprep.subr.bf16.mxu0 0
        %3136 = vmatpush1.bf16.msra.mxu0 0
        %3137 = vmatprep.subr.bf16.mxu0 0
        %3138 = vmatpush1.bf16.msra.mxu0 0
        %3139 = vmatprep.subr.bf16.mxu0 0
        %3140 = vmatpush1.bf16.msra.mxu0 0
        %3141 = vmatprep.subr.bf16.mxu0 0
        %3142 = vmatpush1.bf16.msra.mxu0 0
        %3143 = vmatprep.subr.bf16.mxu0 0
        %3144 = vmatpush1.bf16.msra.mxu0 0
        %3145 = vmatprep.subr.bf16.mxu0 0
        %3146 = vmatpush1.bf16.msra.mxu0 0
        %3147 = vmatprep.subr.bf16.mxu0 0
        %3148 = vmatpush1.bf16.msra.mxu0 0
        %3149 = vmatprep.subr.bf16.mxu0 0
        %3150 = vmatpush1.bf16.msra.mxu0 0
        %3151 = vmatprep.subr.bf16.mxu0 0
        %3152 = vmatpush1.bf16.msra.mxu0 0
        %3153 = vmatprep.subr.bf16.mxu0 0
        %3154 = vmatpush1.bf16.msra.mxu0 0
        %3155 = vmatprep.subr.bf16.mxu0 0
        %3156 = vmatpush1.bf16.msra.mxu0 0
        %3157 = vmatprep.mubr.bf16.mxu0 0
        %3158 = vmatmul.mubr.bf16.gmra.mrb[0].mxu0 %v3117
        %v3159 = vpop.f32.mrb[0].mxu0
        %v3160 = vadd.f32 0.0, %v3159
        %v3161 = vpop.f32.mrb[0].mxu0
        %v3162 = vadd.f32 0.0, %v3161
        %v3163 = vpop.f32.mrb[0].mxu0
        %v3164 = vadd.f32 0.0, %v3163
        %v3165 = vpop.f32.mrb[0].mxu0
        %v3166 = vadd.f32 0.0, %v3165
        %3167 = vmatprep.mubr.bf16.mxu0 0
        %3168 = vmatmul.mubr.bf16.gmra.mrb[0].mxu0 %v3120
        %v3169 = vpop.f32.mrb[0].mxu0
        %v3170 = vadd.f32 0.0, %v3169
        %v3171 = vpop.f32.mrb[0].mxu0
        %v3172 = vadd.f32 0.0, %v3171
        %v3173 = vpop.f32.mrb[0].mxu0
        %v3174 = vadd.f32 0.0, %v3173
        %v3175 = vpop.f32.mrb[0].mxu0
        %v3176 = vadd.f32 0.0, %v3175
        %3177 = vmatprep.mubr.bf16.mxu0 0
        %3178 = vmatmul.mubr.bf16.gmra.mrb[0].mxu0 %v3123
        %v3179 = vpop.f32.mrb[0].mxu0
        %v3180 = vadd.f32 0.0, %v3179
        %v3181 = vpop.f32.mrb[0].mxu0
        %v3182 = vadd.f32 0.0, %v3181
        %v3183 = vpop.f32.mrb[0].mxu0
        %v3184 = vpop.f32.mrb[0].mxu0
        %3185 = vdwg.mxu0
        %3186 = vmatprep.subr.bf16.mxu0 0
        %3187 = vmatpush1.bf16.msra.mxu0 %v3098
        %3188 = vmatprep.subr.bf16.mxu0 0
        %3189 = vmatpush1.bf16.msra.mxu0 %v3101
        %3190 = vmatprep.subr.bf16.mxu0 0
        %3191 = vmatpush1.bf16.msra.mxu0 0
        %3192 = vmatprep.subr.bf16.mxu0 0
        %3193 = vmatpush1.bf16.msra.mxu0 0
        %3194 = vmatprep.subr.bf16.mxu0 0
        %3195 = vmatpush1.bf16.msra.mxu0 0
        %3196 = vmatprep.subr.bf16.mxu0 0
        %3197 = vmatpush1.bf16.msra.mxu0 0
        %3198 = vmatprep.subr.bf16.mxu0 0
        %3199 = vmatpush1.bf16.msra.mxu0 0
        %3200 = vmatprep.subr.bf16.mxu0 0
        %3201 = vmatpush1.bf16.msra.mxu0 0
        %3202 = vmatprep.subr.bf16.mxu0 0
        %3203 = vmatpush1.bf16.msra.mxu0 0
        %3204 = vmatprep.subr.bf16.mxu0 0
        %3205 = vmatpush1.bf16.msra.mxu0 0
        %3206 = vmatprep.subr.bf16.mxu0 0
        %3207 = vmatpush1.bf16.msra.mxu0 0
        %3208 = vmatprep.subr.bf16.mxu0 0
        %3209 = vmatpush1.bf16.msra.mxu0 0
        %3210 = vmatprep.subr.bf16.mxu0 0
        %3211 = vmatpush1.bf16.msra.mxu0 0
        %3212 = vmatprep.subr.bf16.mxu0 0
        %3213 = vmatpush1.bf16.msra.mxu0 0
        %3214 = vmatprep.subr.bf16.mxu0 0
        %3215 = vmatpush1.bf16.msra.mxu0 0
        %3216 = vmatprep.subr.bf16.mxu0 0
        %3217 = vmatpush1.bf16.msra.mxu0 0
        %3218 = vmatprep.mubr.bf16.mxu0 0
        %3219 = vmatmul.mubr.bf16.gmra.mrb[0].mxu0 %v3117
        %v3220 = vpop.f32.mrb[0].mxu0
        %v3221 = vadd.f32 0.0, %v3220
        %v3222 = vpop.f32.mrb[0].mxu0
        %v3223 = vpop.f32.mrb[0].mxu0
        %v3224 = vadd.f32 0.0, %v3223
        %v3225 = vpop.f32.mrb[0].mxu0
        %3226 = vmatprep.mubr.bf16.mxu0 0
        %3227 = vmatmul.mubr.bf16.gmra.mrb[0].mxu0 %v3120
        %v3228 = vpop.f32.mrb[0].mxu0
        %v3229 = vadd.f32 0.0, %v3228
        %v3230 = vpop.f32.mrb[0].mxu0
        %v3231 = vpop.f32.mrb[0].mxu0
        %v3232 = vadd.f32 0.0, %v3231
        %v3233 = vpop.f32.mrb[0].mxu0
        %3234 = vmatprep.mubr.bf16.mxu0 0
        %3235 = vmatmul.mubr.bf16.gmra.mrb[0].mxu0 %v3123
        %v3236 = vpop.f32.mrb[0].mxu0
        %v3237 = vadd.f32 0.0, %v3236
        %v3238 = vpop.f32.mrb[0].mxu0
        %v3239 = vpop.f32.mrb[0].mxu0
        %v3240 = vpop.f32.mrb[0].mxu0
        %3241 = vdwg.mxu0
        %v3242 = vpack.c.bf16 %v3164, %v3160
        %v3243 = vpack.c.bf16 %v3166, %v3162
        %v3244 = vpack.c.bf16 %v3224, %v3221
        %v3245 = vpack.c.bf16 %v3174, %v3170
        %v3246 = vpack.c.bf16 %v3176, %v3172
        %v3247 = vpack.c.bf16 %v3232, %v3229
        %v3248 = vld [vmem:[#allocation20] sm:$0xff]
        %v3249 = vld [vmem:[#allocation20 + $0x8] sm:$0xff]
        %v3250 = vld [vmem:[#allocation20 + $0x10] sm:$0xff]
        %v3251 = vld [vmem:[#allocation20 + $0x18] sm:$0xff]
        %v3252 = vld [vmem:[#allocation20 + $0x20] sm:$0xff]
        %v3253 = vld [vmem:[#allocation20 + $0x28] sm:$0xff]
        %v3254 = vld [vmem:[#allocation20 + $0x30] sm:$0xff]
        %v3255 = vld [vmem:[#allocation20 + $0x38] sm:$0xff]
        %v3256 = vld [vmem:[#allocation20 + $0x40] sm:$0xff]
        %v3257 = vld [vmem:[#allocation20 + $0x48] sm:$0xff]
        %v3258 = vld [vmem:[#allocation20 + $0x50] sm:$0xff]
        %v3259 = vld [vmem:[#allocation20 + $0x58] sm:$0xff]
        %v3260 = vld [vmem:[#allocation20 + $0x60] sm:$0xff]
        %v3261 = vld [vmem:[#allocation20 + $0x68] sm:$0xff]
        %v3262 = vld [vmem:[#allocation20 + $0x70] sm:$0xff]
        %v3263 = vld [vmem:[#allocation20 + $0x78] sm:$0xff]
        %v3264 = vld [vmem:[#allocation20 + $0x80] sm:$0xff]
        %v3265 = vld [vmem:[#allocation20 + $0x88] sm:$0xff]
        %v3266 = vld [vmem:[#allocation20 + $0x90] sm:$0xff]
        %v3267 = vld [vmem:[#allocation20 + $0x98] sm:$0xff]
        %v3268 = vld [vmem:[#allocation20 + $0xa0] sm:$0xff]
        %v3269 = vld [vmem:[#allocation20 + $0xa8] sm:$0xff]
        %v3270 = vld [vmem:[#allocation20 + $0xb0] sm:$0xff]
        %v3271 = vld [vmem:[#allocation20 + $0xb8] sm:$0xff]
        %v3272 = vld [vmem:[#allocation20 + $0xc0] sm:$0xff]
        %v3273 = vld [vmem:[#allocation20 + $0xc8] sm:$0xff]
        %v3274 = vld [vmem:[#allocation20 + $0xd0] sm:$0xff]
        %v3275 = vld [vmem:[#allocation20 + $0xd8] sm:$0xff]
        %v3276 = vld [vmem:[#allocation20 + $0xe0] sm:$0xff]
        %v3277 = vld [vmem:[#allocation20 + $0xe8] sm:$0xff]
        %v3278 = vld [vmem:[#allocation20 + $0xf0] sm:$0xff]
        %v3279 = vld [vmem:[#allocation20 + $0xf8] sm:$0xff]
        %v3280 = vld [vmem:[#allocation20 + $0x100] sm:$0xff]
        %v3281 = vld [vmem:[#allocation20 + $0x108] sm:$0xff]
        %v3282 = vpack.c.bf16 %v3180, %v3180
        %v3283 = vpack.c.bf16 %v3182, %v3182
        %v3284 = vpack.c.bf16 %v3237, %v3237
        %s3285 = scalar_lea.vmem [#allocation20], 272
        %v3286 = vld [vmem:[%s3285] sm:$0xff]
        %v3287 = vld [vmem:[%s3285 + $0x8] sm:$0xff]
        %v3288 = vld [vmem:[%s3285 + $0x10] sm:$0xff]
        %v3289 = vld [vmem:[%s3285 + $0x18] sm:$0xff]
        %v3290 = vld [vmem:[%s3285 + $0x20] sm:$0xff]
        %v3291 = vld [vmem:[%s3285 + $0x28] sm:$0xff]
        %v3292 = vld [vmem:[%s3285 + $0x30] sm:$0xff]
        %v3293 = vld [vmem:[%s3285 + $0x38] sm:$0xff]
        %v3294 = vld [vmem:[%s3285 + $0x40] sm:$0xff]
        %v3295 = vld [vmem:[%s3285 + $0x48] sm:$0xff]
        %v3296 = vld [vmem:[%s3285 + $0x50] sm:$0xff]
        %v3297 = vld [vmem:[%s3285 + $0x58] sm:$0xff]
        %v3298 = vld [vmem:[%s3285 + $0x60] sm:$0xff]
        %v3299 = vld [vmem:[%s3285 + $0x68] sm:$0xff]
        %v3300 = vld [vmem:[%s3285 + $0x70] sm:$0xff]
        %v3301 = vld [vmem:[%s3285 + $0x78] sm:$0xff]
        %v3302 = vld [vmem:[%s3285 + $0x80] sm:$0xff]
        %v3303 = vld [vmem:[%s3285 + $0x88] sm:$0xff]
        %v3304 = vld [vmem:[%s3285 + $0x90] sm:$0xff]
        %v3305 = vld [vmem:[%s3285 + $0x98] sm:$0xff]
        %v3306 = vld [vmem:[%s3285 + $0xa0] sm:$0xff]
        %v3307 = vld [vmem:[%s3285 + $0xa8] sm:$0xff]
        %v3308 = vld [vmem:[%s3285 + $0xb0] sm:$0xff]
        %v3309 = vld [vmem:[%s3285 + $0xb8] sm:$0xff]
        %v3310 = vld [vmem:[%s3285 + $0xc0] sm:$0xff]
        %v3311 = vld [vmem:[%s3285 + $0xc8] sm:$0xff]
        %v3312 = vld [vmem:[%s3285 + $0xd0] sm:$0xff]
        %v3313 = vld [vmem:[%s3285 + $0xd8] sm:$0xff]
        %v3314 = vld [vmem:[%s3285 + $0xe0] sm:$0xff]
        %v3315 = vld [vmem:[%s3285 + $0xe8] sm:$0xff]
        %v3316 = vld [vmem:[%s3285 + $0xf0] sm:$0xff]
        %v3317 = vld [vmem:[%s3285 + $0xf8] sm:$0xff]
        %v3318 = vld [vmem:[%s3285 + $0x100] sm:$0xff]
        %v3319 = vld [vmem:[%s3285 + $0x108] sm:$0xff]
        %v3321 = vshrl.u32 %v3242, 16
        %v3323 = vshll.u32 %v3242, 16
        %v3325 = vrot.slane %v3323, 1
        %v3326 = vor.u32 %v3321, %v3325
        %v3328 = vshll.u32 %v3245, 16
        %v3330 = vrot.slane %v3328, 1
        %v3331 = vsel %vm923, %v3326, %v3330
        %v3333 = vshrl.u32 %v3243, 16
        %v3335 = vshll.u32 %v3243, 16
        %v3337 = vrot.slane %v3335, 1
        %v3338 = vor.u32 %v3333, %v3337
        %v3340 = vshll.u32 %v3246, 16
        %v3342 = vrot.slane %v3340, 1
        %v3343 = vsel %vm923, %v3338, %v3342
        %v3345 = vshrl.u32 %v3244, 16
        %v3347 = vshll.u32 %v3244, 16
        %v3349 = vrot.slane %v3347, 1
        %v3350 = vor.u32 %v3345, %v3349
        %v3352 = vshll.u32 %v3247, 16
        %v3354 = vrot.slane %v3352, 1
        %v3355 = vsel %vm923, %v3350, %v3354
        %v3356 = vshrl.u32 %v3245, 16
        %v3358 = vor.u32 %v3356, %v3330
        %v3360 = vshll.u32 %v3282, 16
        %v3362 = vrot.slane %v3360, 1
        %v3363 = vsel %vm923, %v3358, %v3362
        %v3364 = vshrl.u32 %v3246, 16
        %v3366 = vor.u32 %v3364, %v3342
        %v3368 = vshll.u32 %v3283, 16
        %v3370 = vrot.slane %v3368, 1
        %v3371 = vsel %vm923, %v3366, %v3370
        %v3372 = vshrl.u32 %v3247, 16
        %v3374 = vor.u32 %v3372, %v3354
        %v3376 = vshll.u32 %v3284, 16
        %v3378 = vrot.slane %v3376, 1
        %v3379 = vsel %vm923, %v3374, %v3378
        %v3418 = vunpack.c.l.b16 %v3286
        %v3419 = vunpack.c.h.b16 %v3286
        %v3420 = vunpack.c.l.b16 %v3287
        %v3421 = vunpack.c.h.b16 %v3287
        %v3422 = vunpack.c.l.b16 %v3288
        %v3423 = vunpack.c.h.b16 %v3288
        %v3424 = vunpack.c.l.b16 %v3289
        %v3425 = vunpack.c.h.b16 %v3289
        %v3426 = vunpack.c.l.b16 %v3290
        %v3427 = vunpack.c.h.b16 %v3290
        %v3428 = vunpack.c.l.b16 %v3291
        %v3429 = vunpack.c.h.b16 %v3291
        %v3430 = vunpack.c.l.b16 %v3292
        %v3431 = vunpack.c.h.b16 %v3292
        %v3432 = vunpack.c.l.b16 %v3293
        %v3433 = vunpack.c.h.b16 %v3293
        %v3434 = vunpack.c.l.b16 %v3294
        %v3435 = vunpack.c.h.b16 %v3294
        %v3436 = vunpack.c.l.b16 %v3295
        %v3437 = vunpack.c.h.b16 %v3295
        %v3438 = vunpack.c.l.b16 %v3296
        %v3439 = vunpack.c.h.b16 %v3296
        %v3440 = vunpack.c.l.b16 %v3297
        %v3441 = vunpack.c.h.b16 %v3297
        %v3442 = vunpack.c.l.b16 %v3298
        %v3443 = vunpack.c.h.b16 %v3298
        %v3444 = vunpack.c.l.b16 %v3299
        %v3445 = vunpack.c.h.b16 %v3299
        %v3446 = vunpack.c.l.b16 %v3300
        %v3447 = vunpack.c.h.b16 %v3300
        %v3448 = vunpack.c.l.b16 %v3301
        %v3449 = vunpack.c.h.b16 %v3301
        %v3450 = vunpack.c.l.b16 %v3302
        %v3451 = vunpack.c.h.b16 %v3302
        %v3452 = vunpack.c.l.b16 %v3303
        %v3453 = vunpack.c.h.b16 %v3303
        %v3454 = vunpack.c.l.b16 %v3304
        %v3455 = vunpack.c.h.b16 %v3304
        %v3456 = vunpack.c.l.b16 %v3305
        %v3457 = vunpack.c.h.b16 %v3305
        %v3458 = vunpack.c.l.b16 %v3306
        %v3459 = vunpack.c.h.b16 %v3306
        %v3460 = vunpack.c.l.b16 %v3307
        %v3461 = vunpack.c.h.b16 %v3307
        %v3462 = vunpack.c.l.b16 %v3308
        %v3463 = vunpack.c.h.b16 %v3308
        %v3464 = vunpack.c.l.b16 %v3309
        %v3465 = vunpack.c.h.b16 %v3309
        %v3466 = vunpack.c.l.b16 %v3310
        %v3467 = vunpack.c.h.b16 %v3310
        %v3468 = vunpack.c.l.b16 %v3311
        %v3469 = vunpack.c.h.b16 %v3311
        %v3470 = vunpack.c.l.b16 %v3312
        %v3471 = vunpack.c.h.b16 %v3312
        %v3472 = vunpack.c.l.b16 %v3313
        %v3473 = vunpack.c.h.b16 %v3313
        %v3474 = vunpack.c.l.b16 %v3314
        %v3475 = vunpack.c.h.b16 %v3314
        %v3476 = vunpack.c.l.b16 %v3315
        %v3477 = vunpack.c.h.b16 %v3315
        %v3478 = vunpack.c.l.b16 %v3316
        %v3479 = vunpack.c.h.b16 %v3316
        %v3480 = vunpack.c.l.b16 %v3317
        %v3481 = vunpack.c.h.b16 %v3317
        %v3482 = vunpack.c.l.b16 %v3318
        %v3483 = vunpack.c.h.b16 %v3318
        %v3484 = vunpack.c.l.b16 %v3319
        %v3485 = vunpack.c.h.b16 %v3319
        %v3486 = vpack.c.b16 %v3420, %v3418
        %v3487 = vpack.c.b16 %v3421, %v3419
        %v3488 = vpack.c.b16 %v3424, %v3422
        %v3489 = vpack.c.b16 %v3425, %v3423
        %v3490 = vpack.c.b16 %v3428, %v3426
        %v3491 = vpack.c.b16 %v3429, %v3427
        %v3492 = vpack.c.b16 %v3432, %v3430
        %v3493 = vpack.c.b16 %v3433, %v3431
        %v3494 = vpack.c.b16 %v3436, %v3434
        %v3495 = vpack.c.b16 %v3437, %v3435
        %v3496 = vpack.c.b16 %v3440, %v3438
        %v3497 = vpack.c.b16 %v3441, %v3439
        %v3498 = vpack.c.b16 %v3444, %v3442
        %v3499 = vpack.c.b16 %v3445, %v3443
        %v3500 = vpack.c.b16 %v3448, %v3446
        %v3501 = vpack.c.b16 %v3449, %v3447
        %v3502 = vpack.c.b16 %v3452, %v3450
        %v3503 = vpack.c.b16 %v3453, %v3451
        %v3504 = vpack.c.b16 %v3456, %v3454
        %v3505 = vpack.c.b16 %v3457, %v3455
        %v3506 = vpack.c.b16 %v3460, %v3458
        %v3507 = vpack.c.b16 %v3461, %v3459
        %v3508 = vpack.c.b16 %v3464, %v3462
        %v3509 = vpack.c.b16 %v3465, %v3463
        %v3510 = vpack.c.b16 %v3468, %v3466
        %v3511 = vpack.c.b16 %v3469, %v3467
        %v3512 = vpack.c.b16 %v3472, %v3470
        %v3513 = vpack.c.b16 %v3473, %v3471
        %v3514 = vpack.c.b16 %v3476, %v3474
        %v3515 = vpack.c.b16 %v3477, %v3475
        %v3516 = vpack.c.b16 %v3480, %v3478
        %v3517 = vpack.c.b16 %v3481, %v3479
        %v3518 = vpack.c.b16 %v3484, %v3482
        %v3519 = vpack.c.b16 %v3485, %v3483
        %v3555 = vsel %vm847, %v3355, 0
        %v3558 = vsel %vm847, %v3379, 0
        %3560 = vmatprep.subr.bf16.mxu0 %v3487
        %3561 = vmatpush1.bf16.msra.mxu0 %v3486
        %3562 = vmatprep.subr.bf16.mxu0 %v3489
        %3563 = vmatpush1.bf16.msra.mxu0 %v3488
        %3564 = vmatprep.subr.bf16.mxu0 %v3491
        %3565 = vmatpush1.bf16.msra.mxu0 %v3490
        %3566 = vmatprep.subr.bf16.mxu0 %v3493
        %3567 = vmatpush1.bf16.msra.mxu0 %v3492
        %3568 = vmatprep.subr.bf16.mxu0 %v3495
        %3569 = vmatpush1.bf16.msra.mxu0 %v3494
        %3570 = vmatprep.subr.bf16.mxu0 %v3497
        %3571 = vmatpush1.bf16.msra.mxu0 %v3496
        %3572 = vmatprep.subr.bf16.mxu0 %v3499
        %3573 = vmatpush1.bf16.msra.mxu0 %v3498
        %3574 = vmatprep.subr.bf16.mxu0 %v3501
        %3575 = vmatpush1.bf16.msra.mxu0 %v3500
        %3576 = vmatprep.subr.bf16.mxu0 %v3503
        %3577 = vmatpush1.bf16.msra.mxu0 %v3502
        %3578 = vmatprep.subr.bf16.mxu0 %v3505
        %3579 = vmatpush1.bf16.msra.mxu0 %v3504
        %3580 = vmatprep.subr.bf16.mxu0 %v3507
        %3581 = vmatpush1.bf16.msra.mxu0 %v3506
        %3582 = vmatprep.subr.bf16.mxu0 %v3509
        %3583 = vmatpush1.bf16.msra.mxu0 %v3508
        %3584 = vmatprep.subr.bf16.mxu0 %v3511
        %3585 = vmatpush1.bf16.msra.mxu0 %v3510
        %3586 = vmatprep.subr.bf16.mxu0 %v3513
        %3587 = vmatpush1.bf16.msra.mxu0 %v3512
        %3588 = vmatprep.subr.bf16.mxu0 %v3515
        %3589 = vmatpush1.bf16.msra.mxu0 %v3514
        %3590 = vmatprep.subr.bf16.mxu0 %v3517
        %3591 = vmatpush1.bf16.msra.mxu0 %v3516
        %3592 = vmatprep.mubr.bf16.mxu0 %v3343
        %3593 = vmatmul.mubr.bf16.gmra.mrb[0].mxu0 %v3331
        %v3594 = vpop.f32.mrb[0].mxu0
        %v3595 = vadd.f32 0.0, %v3594
        %v3596 = vpop.f32.mrb[0].mxu0
        %v3597 = vadd.f32 0.0, %v3596
        %v3598 = vpop.f32.mrb[0].mxu0
        %v3599 = vadd.f32 0.0, %v3598
        %v3600 = vpop.f32.mrb[0].mxu0
        %v3601 = vadd.f32 0.0, %v3600
        %3602 = vmatprep.mubr.bf16.mxu0 %v3371
        %3603 = vmatmul.mubr.bf16.gmra.mrb[0].mxu0 %v3363
        %v3604 = vpop.f32.mrb[0].mxu0
        %v3605 = vadd.f32 0.0, %v3604
        %v3606 = vpop.f32.mrb[0].mxu0
        %v3607 = vadd.f32 0.0, %v3606
        %v3608 = vpop.f32.mrb[0].mxu0
        %v3609 = vadd.f32 0.0, %v3608
        %v3610 = vpop.f32.mrb[0].mxu0
        %v3611 = vadd.f32 0.0, %v3610
        %3612 = vdwg.mxu0
        %3613 = vmatprep.subr.bf16.mxu0 %v3519
        %3614 = vmatpush1.bf16.msra.mxu0 %v3518
        %3615 = vmatprep.subr.bf16.mxu0 0
        %3616 = vmatpush1.bf16.msra.mxu0 0
        %3617 = vmatprep.subr.bf16.mxu0 0
        %3618 = vmatpush1.bf16.msra.mxu0 0
        %3619 = vmatprep.subr.bf16.mxu0 0
        %3620 = vmatpush1.bf16.msra.mxu0 0
        %3621 = vmatprep.subr.bf16.mxu0 0
        %3622 = vmatpush1.bf16.msra.mxu0 0
        %3623 = vmatprep.subr.bf16.mxu0 0
        %3624 = vmatpush1.bf16.msra.mxu0 0
        %3625 = vmatprep.subr.bf16.mxu0 0
        %3626 = vmatpush1.bf16.msra.mxu0 0
        %3627 = vmatprep.subr.bf16.mxu0 0
        %3628 = vmatpush1.bf16.msra.mxu0 0
        %3629 = vmatprep.subr.bf16.mxu0 0
        %3630 = vmatpush1.bf16.msra.mxu0 0
        %3631 = vmatprep.subr.bf16.mxu0 0
        %3632 = vmatpush1.bf16.msra.mxu0 0
        %3633 = vmatprep.subr.bf16.mxu0 0
        %3634 = vmatpush1.bf16.msra.mxu0 0
        %3635 = vmatprep.subr.bf16.mxu0 0
        %3636 = vmatpush1.bf16.msra.mxu0 0
        %3637 = vmatprep.subr.bf16.mxu0 0
        %3638 = vmatpush1.bf16.msra.mxu0 0
        %3639 = vmatprep.subr.bf16.mxu0 0
        %3640 = vmatpush1.bf16.msra.mxu0 0
        %3641 = vmatprep.subr.bf16.mxu0 0
        %3642 = vmatpush1.bf16.msra.mxu0 0
        %3643 = vmatprep.subr.bf16.mxu0 0
        %3644 = vmatpush1.bf16.msra.mxu0 0
        %3645 = vmatprep.mubr.bf16.mxu0 0
        %3646 = vmatmul.mubr.bf16.gmra.mrb[0].mxu0 %v3555
        %v3647 = vpop.f32.mrb[0].mxu0
        %v3648 = vadd.f32 %v3595, %v3647
        %v3649 = vpop.f32.mrb[0].mxu0
        %v3650 = vadd.f32 %v3597, %v3649
        %v3651 = vpop.f32.mrb[0].mxu0
        %v3652 = vadd.f32 %v3599, %v3651
        %v3653 = vpop.f32.mrb[0].mxu0
        %v3654 = vadd.f32 %v3601, %v3653
        %3655 = vmatprep.mubr.bf16.mxu0 0
        %3656 = vmatmul.mubr.bf16.gmra.mrb[0].mxu0 %v3558
        %v3657 = vpop.f32.mrb[0].mxu0
        %v3658 = vadd.f32 %v3605, %v3657
        %v3659 = vpop.f32.mrb[0].mxu0
        %v3660 = vadd.f32 %v3607, %v3659
        %v3661 = vpop.f32.mrb[0].mxu0
        %v3662 = vadd.f32 %v3609, %v3661
        %v3663 = vpop.f32.mrb[0].mxu0
        %v3664 = vadd.f32 %v3611, %v3663
        %3665 = vdwg.mxu0
        %v3700 = vunpack.c.l.b16 %v3248
        %v3701 = vunpack.c.h.b16 %v3248
        %v3702 = vunpack.c.l.b16 %v3249
        %v3703 = vunpack.c.h.b16 %v3249
        %v3704 = vunpack.c.l.b16 %v3250
        %v3705 = vunpack.c.h.b16 %v3250
        %v3706 = vunpack.c.l.b16 %v3251
        %v3707 = vunpack.c.h.b16 %v3251
        %v3708 = vunpack.c.l.b16 %v3252
        %v3709 = vunpack.c.h.b16 %v3252
        %v3710 = vunpack.c.l.b16 %v3253
        %v3711 = vunpack.c.h.b16 %v3253
        %v3712 = vunpack.c.l.b16 %v3254
        %v3713 = vunpack.c.h.b16 %v3254
        %v3714 = vunpack.c.l.b16 %v3255
        %v3715 = vunpack.c.h.b16 %v3255
        %v3716 = vunpack.c.l.b16 %v3256
        %v3717 = vunpack.c.h.b16 %v3256
        %v3718 = vunpack.c.l.b16 %v3257
        %v3719 = vunpack.c.h.b16 %v3257
        %v3720 = vunpack.c.l.b16 %v3258
        %v3721 = vunpack.c.h.b16 %v3258
        %v3722 = vunpack.c.l.b16 %v3259
        %v3723 = vunpack.c.h.b16 %v3259
        %v3724 = vunpack.c.l.b16 %v3260
        %v3725 = vunpack.c.h.b16 %v3260
        %v3726 = vunpack.c.l.b16 %v3261
        %v3727 = vunpack.c.h.b16 %v3261
        %v3728 = vunpack.c.l.b16 %v3262
        %v3729 = vunpack.c.h.b16 %v3262
        %v3730 = vunpack.c.l.b16 %v3263
        %v3731 = vunpack.c.h.b16 %v3263
        %v3732 = vunpack.c.l.b16 %v3264
        %v3733 = vunpack.c.h.b16 %v3264
        %v3734 = vunpack.c.l.b16 %v3265
        %v3735 = vunpack.c.h.b16 %v3265
        %v3736 = vunpack.c.l.b16 %v3266
        %v3737 = vunpack.c.h.b16 %v3266
        %v3738 = vunpack.c.l.b16 %v3267
        %v3739 = vunpack.c.h.b16 %v3267
        %v3740 = vunpack.c.l.b16 %v3268
        %v3741 = vunpack.c.h.b16 %v3268
        %v3742 = vunpack.c.l.b16 %v3269
        %v3743 = vunpack.c.h.b16 %v3269
        %v3744 = vunpack.c.l.b16 %v3270
        %v3745 = vunpack.c.h.b16 %v3270
        %v3746 = vunpack.c.l.b16 %v3271
        %v3747 = vunpack.c.h.b16 %v3271
        %v3748 = vunpack.c.l.b16 %v3272
        %v3749 = vunpack.c.h.b16 %v3272
        %v3750 = vunpack.c.l.b16 %v3273
        %v3751 = vunpack.c.h.b16 %v3273
        %v3752 = vunpack.c.l.b16 %v3274
        %v3753 = vunpack.c.h.b16 %v3274
        %v3754 = vunpack.c.l.b16 %v3275
        %v3755 = vunpack.c.h.b16 %v3275
        %v3756 = vunpack.c.l.b16 %v3276
        %v3757 = vunpack.c.h.b16 %v3276
        %v3758 = vunpack.c.l.b16 %v3277
        %v3759 = vunpack.c.h.b16 %v3277
        %v3760 = vunpack.c.l.b16 %v3278
        %v3761 = vunpack.c.h.b16 %v3278
        %v3762 = vunpack.c.l.b16 %v3279
        %v3763 = vunpack.c.h.b16 %v3279
        %v3764 = vunpack.c.l.b16 %v3280
        %v3765 = vunpack.c.h.b16 %v3280
        %v3766 = vunpack.c.l.b16 %v3281
        %v3767 = vunpack.c.h.b16 %v3281
        %v3768 = vpack.c.b16 %v3702, %v3700
        %v3769 = vpack.c.b16 %v3703, %v3701
        %v3770 = vpack.c.b16 %v3706, %v3704
        %v3771 = vpack.c.b16 %v3707, %v3705
        %v3772 = vpack.c.b16 %v3710, %v3708
        %v3773 = vpack.c.b16 %v3711, %v3709
        %v3774 = vpack.c.b16 %v3714, %v3712
        %v3775 = vpack.c.b16 %v3715, %v3713
        %v3776 = vpack.c.b16 %v3718, %v3716
        %v3777 = vpack.c.b16 %v3719, %v3717
        %v3778 = vpack.c.b16 %v3722, %v3720
        %v3779 = vpack.c.b16 %v3723, %v3721
        %v3780 = vpack.c.b16 %v3726, %v3724
        %v3781 = vpack.c.b16 %v3727, %v3725
        %v3782 = vpack.c.b16 %v3730, %v3728
        %v3783 = vpack.c.b16 %v3731, %v3729
        %v3784 = vpack.c.b16 %v3734, %v3732
        %v3785 = vpack.c.b16 %v3735, %v3733
        %v3786 = vpack.c.b16 %v3738, %v3736
        %v3787 = vpack.c.b16 %v3739, %v3737
        %v3788 = vpack.c.b16 %v3742, %v3740
        %v3789 = vpack.c.b16 %v3743, %v3741
        %v3790 = vpack.c.b16 %v3746, %v3744
        %v3791 = vpack.c.b16 %v3747, %v3745
        %v3792 = vpack.c.b16 %v3750, %v3748
        %v3793 = vpack.c.b16 %v3751, %v3749
        %v3794 = vpack.c.b16 %v3754, %v3752
        %v3795 = vpack.c.b16 %v3755, %v3753
        %v3796 = vpack.c.b16 %v3758, %v3756
        %v3797 = vpack.c.b16 %v3759, %v3757
        %v3798 = vpack.c.b16 %v3762, %v3760
        %v3799 = vpack.c.b16 %v3763, %v3761
        %v3800 = vpack.c.b16 %v3766, %v3764
        %v3801 = vpack.c.b16 %v3767, %v3765
        %v3836 = vsel %vm847, %v3244, 0
        %v3838 = vsel %vm847, %v3247, 0
        %3840 = vmatprep.subr.bf16.mxu0 %v3769
        %3841 = vmatpush1.bf16.msra.mxu0 %v3768
        %3842 = vmatprep.subr.bf16.mxu0 %v3771
        %3843 = vmatpush1.bf16.msra.mxu0 %v3770
        %3844 = vmatprep.subr.bf16.mxu0 %v3773
        %3845 = vmatpush1.bf16.msra.mxu0 %v3772
        %3846 = vmatprep.subr.bf16.mxu0 %v3775
        %3847 = vmatpush1.bf16.msra.mxu0 %v3774
        %3848 = vmatprep.subr.bf16.mxu0 %v3777
        %3849 = vmatpush1.bf16.msra.mxu0 %v3776
        %3850 = vmatprep.subr.bf16.mxu0 %v3779
        %3851 = vmatpush1.bf16.msra.mxu0 %v3778
        %3852 = vmatprep.subr.bf16.mxu0 %v3781
        %3853 = vmatpush1.bf16.msra.mxu0 %v3780
        %3854 = vmatprep.subr.bf16.mxu0 %v3783
        %3855 = vmatpush1.bf16.msra.mxu0 %v3782
        %3856 = vmatprep.subr.bf16.mxu0 %v3785
        %3857 = vmatpush1.bf16.msra.mxu0 %v3784
        %3858 = vmatprep.subr.bf16.mxu0 %v3787
        %3859 = vmatpush1.bf16.msra.mxu0 %v3786
        %3860 = vmatprep.subr.bf16.mxu0 %v3789
        %3861 = vmatpush1.bf16.msra.mxu0 %v3788
        %3862 = vmatprep.subr.bf16.mxu0 %v3791
        %3863 = vmatpush1.bf16.msra.mxu0 %v3790
        %3864 = vmatprep.subr.bf16.mxu0 %v3793
        %3865 = vmatpush1.bf16.msra.mxu0 %v3792
        %3866 = vmatprep.subr.bf16.mxu0 %v3795
        %3867 = vmatpush1.bf16.msra.mxu0 %v3794
        %3868 = vmatprep.subr.bf16.mxu0 %v3797
        %3869 = vmatpush1.bf16.msra.mxu0 %v3796
        %3870 = vmatprep.subr.bf16.mxu0 %v3799
        %3871 = vmatpush1.bf16.msra.mxu0 %v3798
        %3872 = vmatprep.mubr.bf16.mxu0 %v3243
        %3873 = vmatmul.mubr.bf16.gmra.mrb[0].mxu0 %v3242
        %v3874 = vpop.f32.mrb[0].mxu0
        %v3875 = vadd.f32 %v3648, %v3874
        %v3876 = vpop.f32.mrb[0].mxu0
        %v3877 = vadd.f32 %v3650, %v3876
        %v3878 = vpop.f32.mrb[0].mxu0
        %v3879 = vadd.f32 %v3652, %v3878
        %v3880 = vpop.f32.mrb[0].mxu0
        %v3881 = vadd.f32 %v3654, %v3880
        %3882 = vmatprep.mubr.bf16.mxu0 %v3246
        %3883 = vmatmul.mubr.bf16.gmra.mrb[0].mxu0 %v3245
        %v3884 = vpop.f32.mrb[0].mxu0
        %v3885 = vadd.f32 %v3658, %v3884
        %v3886 = vpop.f32.mrb[0].mxu0
        %v3887 = vadd.f32 %v3660, %v3886
        %v3888 = vpop.f32.mrb[0].mxu0
        %v3889 = vadd.f32 %v3662, %v3888
        %v3890 = vpop.f32.mrb[0].mxu0
        %v3891 = vadd.f32 %v3664, %v3890
        %3892 = vdwg.mxu0
        %3893 = vmatprep.subr.bf16.mxu0 %v3801
        %3894 = vmatpush1.bf16.msra.mxu0 %v3800
        %3895 = vmatprep.subr.bf16.mxu0 0
        %3896 = vmatpush1.bf16.msra.mxu0 0
        %3897 = vmatprep.subr.bf16.mxu0 0
        %3898 = vmatpush1.bf16.msra.mxu0 0
        %3899 = vmatprep.subr.bf16.mxu0 0
        %3900 = vmatpush1.bf16.msra.mxu0 0
        %3901 = vmatprep.subr.bf16.mxu0 0
        %3902 = vmatpush1.bf16.msra.mxu0 0
        %3903 = vmatprep.subr.bf16.mxu0 0
        %3904 = vmatpush1.bf16.msra.mxu0 0
        %3905 = vmatprep.subr.bf16.mxu0 0
        %3906 = vmatpush1.bf16.msra.mxu0 0
        %3907 = vmatprep.subr.bf16.mxu0 0
        %3908 = vmatpush1.bf16.msra.mxu0 0
        %3909 = vmatprep.subr.bf16.mxu0 0
        %3910 = vmatpush1.bf16.msra.mxu0 0
        %3911 = vmatprep.subr.bf16.mxu0 0
        %3912 = vmatpush1.bf16.msra.mxu0 0
        %3913 = vmatprep.subr.bf16.mxu0 0
        %3914 = vmatpush1.bf16.msra.mxu0 0
        %3915 = vmatprep.subr.bf16.mxu0 0
        %3916 = vmatpush1.bf16.msra.mxu0 0
        %3917 = vmatprep.subr.bf16.mxu0 0
        %3918 = vmatpush1.bf16.msra.mxu0 0
        %3919 = vmatprep.subr.bf16.mxu0 0
        %3920 = vmatpush1.bf16.msra.mxu0 0
        %3921 = vmatprep.subr.bf16.mxu0 0
        %3922 = vmatpush1.bf16.msra.mxu0 0
        %3923 = vmatprep.subr.bf16.mxu0 0
        %3924 = vmatpush1.bf16.msra.mxu0 0
        %3925 = vmatprep.mubr.bf16.mxu0 0
        %3926 = vmatmul.mubr.bf16.gmra.mrb[0].mxu0 %v3836
        %v3927 = vpop.f32.mrb[0].mxu0
        %v3928 = vadd.f32 %v3875, %v3927
        %v3929 = vpop.f32.mrb[0].mxu0
        %v3930 = vadd.f32 %v3877, %v3929
        %v3931 = vpop.f32.mrb[0].mxu0
        %v3932 = vadd.f32 %v3879, %v3931
        %v3933 = vpop.f32.mrb[0].mxu0
        %v3934 = vadd.f32 %v3881, %v3933
        %3935 = vmatprep.mubr.bf16.mxu0 0
        %3936 = vmatmul.mubr.bf16.gmra.mrb[0].mxu0 %v3838
        %v3937 = vpop.f32.mrb[0].mxu0
        %v3938 = vadd.f32 %v3885, %v3937
        %v3939 = vpop.f32.mrb[0].mxu0
        %v3940 = vadd.f32 %v3887, %v3939
        %v3941 = vpop.f32.mrb[0].mxu0
        %v3942 = vadd.f32 %v3889, %v3941
        %v3943 = vpop.f32.mrb[0].mxu0
        %v3944 = vadd.f32 %v3891, %v3943
        %3945 = vdwg.mxu0
        %s3946 = scalar_lea.vmem [#allocation20], 544
        %v3947 = vld [vmem:[%s3946] sm:$0xff]
        %v3948 = vld [vmem:[%s3946 + $0x8] sm:$0xff]
        %v3949 = vld [vmem:[%s3946 + $0x10] sm:$0xff]
        %v3950 = vld [vmem:[%s3946 + $0x18] sm:$0xff]
        %v3951 = vld [vmem:[%s3946 + $0x20] sm:$0xff]
        %v3952 = vld [vmem:[%s3946 + $0x28] sm:$0xff]
        %v3953 = vld [vmem:[%s3946 + $0x30] sm:$0xff]
        %v3954 = vld [vmem:[%s3946 + $0x38] sm:$0xff]
        %v3955 = vld [vmem:[%s3946 + $0x40] sm:$0xff]
        %v3956 = vld [vmem:[%s3946 + $0x48] sm:$0xff]
        %v3957 = vld [vmem:[%s3946 + $0x50] sm:$0xff]
        %v3958 = vld [vmem:[%s3946 + $0x58] sm:$0xff]
        %v3959 = vld [vmem:[%s3946 + $0x60] sm:$0xff]
        %v3960 = vld [vmem:[%s3946 + $0x68] sm:$0xff]
        %v3961 = vld [vmem:[%s3946 + $0x70] sm:$0xff]
        %v3962 = vld [vmem:[%s3946 + $0x78] sm:$0xff]
        %v3963 = vld [vmem:[%s3946 + $0x80] sm:$0xff]
        %v3964 = vld [vmem:[%s3946 + $0x88] sm:$0xff]
        %v3965 = vld [vmem:[%s3946 + $0x90] sm:$0xff]
        %v3966 = vld [vmem:[%s3946 + $0x98] sm:$0xff]
        %v3967 = vld [vmem:[%s3946 + $0xa0] sm:$0xff]
        %v3968 = vld [vmem:[%s3946 + $0xa8] sm:$0xff]
        %v3969 = vld [vmem:[%s3946 + $0xb0] sm:$0xff]
        %v3970 = vld [vmem:[%s3946 + $0xb8] sm:$0xff]
        %v3971 = vld [vmem:[%s3946 + $0xc0] sm:$0xff]
        %v3972 = vld [vmem:[%s3946 + $0xc8] sm:$0xff]
        %v3973 = vld [vmem:[%s3946 + $0xd0] sm:$0xff]
        %v3974 = vld [vmem:[%s3946 + $0xd8] sm:$0xff]
        %v3975 = vld [vmem:[%s3946 + $0xe0] sm:$0xff]
        %v3976 = vld [vmem:[%s3946 + $0xe8] sm:$0xff]
        %v3977 = vld [vmem:[%s3946 + $0xf0] sm:$0xff]
        %v3978 = vld [vmem:[%s3946 + $0xf8] sm:$0xff]
        %v3979 = vld [vmem:[%s3946 + $0x100] sm:$0xff]
        %v3980 = vld [vmem:[%s3946 + $0x108] sm:$0xff]
        %v3990 = vrot.slane %v3242, 1
        %v3991 = vrot.slane %v3245, 1
        %v3992 = vsel %vm1097, %v3990, %v3991
        %v3993 = vrot.slane %v3243, 1
        %v3994 = vrot.slane %v3246, 1
        %v3995 = vsel %vm1097, %v3993, %v3994
        %v3996 = vrot.slane %v3244, 1
        %v3997 = vrot.slane %v3247, 1
        %v3998 = vsel %vm1097, %v3996, %v3997
        %v3999 = vrot.slane %v3282, 1
        %v4000 = vsel %vm1097, %v3991, %v3999
        %v4001 = vrot.slane %v3283, 1
        %v4002 = vsel %vm1097, %v3994, %v4001
        %v4003 = vrot.slane %v3284, 1
        %v4004 = vsel %vm1097, %v3997, %v4003
        %v4043 = vunpack.c.l.b16 %v3947
        %v4044 = vunpack.c.h.b16 %v3947
        %v4045 = vunpack.c.l.b16 %v3948
        %v4046 = vunpack.c.h.b16 %v3948
        %v4047 = vunpack.c.l.b16 %v3949
        %v4048 = vunpack.c.h.b16 %v3949
        %v4049 = vunpack.c.l.b16 %v3950
        %v4050 = vunpack.c.h.b16 %v3950
        %v4051 = vunpack.c.l.b16 %v3951
        %v4052 = vunpack.c.h.b16 %v3951
        %v4053 = vunpack.c.l.b16 %v3952
        %v4054 = vunpack.c.h.b16 %v3952
        %v4055 = vunpack.c.l.b16 %v3953
        %v4056 = vunpack.c.h.b16 %v3953
        %v4057 = vunpack.c.l.b16 %v3954
        %v4058 = vunpack.c.h.b16 %v3954
        %v4059 = vunpack.c.l.b16 %v3955
        %v4060 = vunpack.c.h.b16 %v3955
        %v4061 = vunpack.c.l.b16 %v3956
        %v4062 = vunpack.c.h.b16 %v3956
        %v4063 = vunpack.c.l.b16 %v3957
        %v4064 = vunpack.c.h.b16 %v3957
        %v4065 = vunpack.c.l.b16 %v3958
        %v4066 = vunpack.c.h.b16 %v3958
        %v4067 = vunpack.c.l.b16 %v3959
        %v4068 = vunpack.c.h.b16 %v3959
        %v4069 = vunpack.c.l.b16 %v3960
        %v4070 = vunpack.c.h.b16 %v3960
        %v4071 = vunpack.c.l.b16 %v3961
        %v4072 = vunpack.c.h.b16 %v3961
        %v4073 = vunpack.c.l.b16 %v3962
        %v4074 = vunpack.c.h.b16 %v3962
        %v4075 = vunpack.c.l.b16 %v3963
        %v4076 = vunpack.c.h.b16 %v3963
        %v4077 = vunpack.c.l.b16 %v3964
        %v4078 = vunpack.c.h.b16 %v3964
        %v4079 = vunpack.c.l.b16 %v3965
        %v4080 = vunpack.c.h.b16 %v3965
        %v4081 = vunpack.c.l.b16 %v3966
        %v4082 = vunpack.c.h.b16 %v3966
        %v4083 = vunpack.c.l.b16 %v3967
        %v4084 = vunpack.c.h.b16 %v3967
        %v4085 = vunpack.c.l.b16 %v3968
        %v4086 = vunpack.c.h.b16 %v3968
        %v4087 = vunpack.c.l.b16 %v3969
        %v4088 = vunpack.c.h.b16 %v3969
        %v4089 = vunpack.c.l.b16 %v3970
        %v4090 = vunpack.c.h.b16 %v3970
        %v4091 = vunpack.c.l.b16 %v3971
        %v4092 = vunpack.c.h.b16 %v3971
        %v4093 = vunpack.c.l.b16 %v3972
        %v4094 = vunpack.c.h.b16 %v3972
        %v4095 = vunpack.c.l.b16 %v3973
        %v4096 = vunpack.c.h.b16 %v3973
        %v4097 = vunpack.c.l.b16 %v3974
        %v4098 = vunpack.c.h.b16 %v3974
        %v4099 = vunpack.c.l.b16 %v3975
        %v4100 = vunpack.c.h.b16 %v3975
        %v4101 = vunpack.c.l.b16 %v3976
        %v4102 = vunpack.c.h.b16 %v3976
        %v4103 = vunpack.c.l.b16 %v3977
        %v4104 = vunpack.c.h.b16 %v3977
        %v4105 = vunpack.c.l.b16 %v3978
        %v4106 = vunpack.c.h.b16 %v3978
        %v4107 = vunpack.c.l.b16 %v3979
        %v4108 = vunpack.c.h.b16 %v3979
        %v4109 = vunpack.c.l.b16 %v3980
        %v4110 = vunpack.c.h.b16 %v3980
        %v4111 = vpack.c.b16 %v4045, %v4043
        %v4112 = vpack.c.b16 %v4046, %v4044
        %v4113 = vpack.c.b16 %v4049, %v4047
        %v4114 = vpack.c.b16 %v4050, %v4048
        %v4115 = vpack.c.b16 %v4053, %v4051
        %v4116 = vpack.c.b16 %v4054, %v4052
        %v4117 = vpack.c.b16 %v4057, %v4055
        %v4118 = vpack.c.b16 %v4058, %v4056
        %v4119 = vpack.c.b16 %v4061, %v4059
        %v4120 = vpack.c.b16 %v4062, %v4060
        %v4121 = vpack.c.b16 %v4065, %v4063
        %v4122 = vpack.c.b16 %v4066, %v4064
        %v4123 = vpack.c.b16 %v4069, %v4067
        %v4124 = vpack.c.b16 %v4070, %v4068
        %v4125 = vpack.c.b16 %v4073, %v4071
        %v4126 = vpack.c.b16 %v4074, %v4072
        %v4127 = vpack.c.b16 %v4077, %v4075
        %v4128 = vpack.c.b16 %v4078, %v4076
        %v4129 = vpack.c.b16 %v4081, %v4079
        %v4130 = vpack.c.b16 %v4082, %v4080
        %v4131 = vpack.c.b16 %v4085, %v4083
        %v4132 = vpack.c.b16 %v4086, %v4084
        %v4133 = vpack.c.b16 %v4089, %v4087
        %v4134 = vpack.c.b16 %v4090, %v4088
        %v4135 = vpack.c.b16 %v4093, %v4091
        %v4136 = vpack.c.b16 %v4094, %v4092
        %v4137 = vpack.c.b16 %v4097, %v4095
        %v4138 = vpack.c.b16 %v4098, %v4096
        %v4139 = vpack.c.b16 %v4101, %v4099
        %v4140 = vpack.c.b16 %v4102, %v4100
        %v4141 = vpack.c.b16 %v4105, %v4103
        %v4142 = vpack.c.b16 %v4106, %v4104
        %v4143 = vpack.c.b16 %v4109, %v4107
        %v4144 = vpack.c.b16 %v4110, %v4108
        %v4180 = vsel %vm847, %v3998, 0
        %v4183 = vsel %vm847, %v4004, 0
        %4185 = vmatprep.subr.bf16.mxu0 %v4112
        %4186 = vmatpush1.bf16.msra.mxu0 %v4111
        %4187 = vmatprep.subr.bf16.mxu0 %v4114
        %4188 = vmatpush1.bf16.msra.mxu0 %v4113
        %4189 = vmatprep.subr.bf16.mxu0 %v4116
        %4190 = vmatpush1.bf16.msra.mxu0 %v4115
        %4191 = vmatprep.subr.bf16.mxu0 %v4118
        %4192 = vmatpush1.bf16.msra.mxu0 %v4117
        %4193 = vmatprep.subr.bf16.mxu0 %v4120
        %4194 = vmatpush1.bf16.msra.mxu0 %v4119
        %4195 = vmatprep.subr.bf16.mxu0 %v4122
        %4196 = vmatpush1.bf16.msra.mxu0 %v4121
        %4197 = vmatprep.subr.bf16.mxu0 %v4124
        %4198 = vmatpush1.bf16.msra.mxu0 %v4123
        %4199 = vmatprep.subr.bf16.mxu0 %v4126
        %4200 = vmatpush1.bf16.msra.mxu0 %v4125
        %4201 = vmatprep.subr.bf16.mxu0 %v4128
        %4202 = vmatpush1.bf16.msra.mxu0 %v4127
        %4203 = vmatprep.subr.bf16.mxu0 %v4130
        %4204 = vmatpush1.bf16.msra.mxu0 %v4129
        %4205 = vmatprep.subr.bf16.mxu0 %v4132
        %4206 = vmatpush1.bf16.msra.mxu0 %v4131
        %4207 = vmatprep.subr.bf16.mxu0 %v4134
        %4208 = vmatpush1.bf16.msra.mxu0 %v4133
        %4209 = vmatprep.subr.bf16.mxu0 %v4136
        %4210 = vmatpush1.bf16.msra.mxu0 %v4135
        %4211 = vmatprep.subr.bf16.mxu0 %v4138
        %4212 = vmatpush1.bf16.msra.mxu0 %v4137
        %4213 = vmatprep.subr.bf16.mxu0 %v4140
        %4214 = vmatpush1.bf16.msra.mxu0 %v4139
        %4215 = vmatprep.subr.bf16.mxu0 %v4142
        %4216 = vmatpush1.bf16.msra.mxu0 %v4141
        %4217 = vmatprep.mubr.bf16.mxu0 %v3995
        %4218 = vmatmul.mubr.bf16.gmra.mrb[0].mxu0 %v3992
        %v4219 = vpop.f32.mrb[0].mxu0
        %v4220 = vadd.f32 0.0, %v4219
        %v4221 = vpop.f32.mrb[0].mxu0
        %v4222 = vadd.f32 0.0, %v4221
        %v4223 = vpop.f32.mrb[0].mxu0
        %v4224 = vadd.f32 0.0, %v4223
        %v4225 = vpop.f32.mrb[0].mxu0
        %v4226 = vadd.f32 0.0, %v4225
        %4227 = vmatprep.mubr.bf16.mxu0 %v4002
        %4228 = vmatmul.mubr.bf16.gmra.mrb[0].mxu0 %v4000
        %v4229 = vpop.f32.mrb[0].mxu0
        %v4230 = vadd.f32 0.0, %v4229
        %v4231 = vpop.f32.mrb[0].mxu0
        %v4232 = vadd.f32 0.0, %v4231
        %v4233 = vpop.f32.mrb[0].mxu0
        %v4234 = vadd.f32 0.0, %v4233
        %v4235 = vpop.f32.mrb[0].mxu0
        %v4236 = vadd.f32 0.0, %v4235
        %4237 = vdwg.mxu0
        %4238 = vmatprep.subr.bf16.mxu0 %v4144
        %4239 = vmatpush1.bf16.msra.mxu0 %v4143
        %4240 = vmatprep.subr.bf16.mxu0 0
        %4241 = vmatpush1.bf16.msra.mxu0 0
        %4242 = vmatprep.subr.bf16.mxu0 0
        %4243 = vmatpush1.bf16.msra.mxu0 0
        %4244 = vmatprep.subr.bf16.mxu0 0
        %4245 = vmatpush1.bf16.msra.mxu0 0
        %4246 = vmatprep.subr.bf16.mxu0 0
        %4247 = vmatpush1.bf16.msra.mxu0 0
        %4248 = vmatprep.subr.bf16.mxu0 0
        %4249 = vmatpush1.bf16.msra.mxu0 0
        %4250 = vmatprep.subr.bf16.mxu0 0
        %4251 = vmatpush1.bf16.msra.mxu0 0
        %4252 = vmatprep.subr.bf16.mxu0 0
        %4253 = vmatpush1.bf16.msra.mxu0 0
        %4254 = vmatprep.subr.bf16.mxu0 0
        %4255 = vmatpush1.bf16.msra.mxu0 0
        %4256 = vmatprep.subr.bf16.mxu0 0
        %4257 = vmatpush1.bf16.msra.mxu0 0
        %4258 = vmatprep.subr.bf16.mxu0 0
        %4259 = vmatpush1.bf16.msra.mxu0 0
        %4260 = vmatprep.subr.bf16.mxu0 0
        %4261 = vmatpush1.bf16.msra.mxu0 0
        %4262 = vmatprep.subr.bf16.mxu0 0
        %4263 = vmatpush1.bf16.msra.mxu0 0
        %4264 = vmatprep.subr.bf16.mxu0 0
        %4265 = vmatpush1.bf16.msra.mxu0 0
        %4266 = vmatprep.subr.bf16.mxu0 0
        %4267 = vmatpush1.bf16.msra.mxu0 0
        %4268 = vmatprep.subr.bf16.mxu0 0
        %4269 = vmatpush1.bf16.msra.mxu0 0
        %4270 = vmatprep.mubr.bf16.mxu0 0
        %4271 = vmatmul.mubr.bf16.gmra.mrb[0].mxu0 %v4180
        %v4272 = vpop.f32.mrb[0].mxu0
        %v4273 = vadd.f32 %v4220, %v4272
        %v4274 = vpop.f32.mrb[0].mxu0
        %v4275 = vadd.f32 %v4222, %v4274
        %v4276 = vpop.f32.mrb[0].mxu0
        %v4277 = vadd.f32 %v4224, %v4276
        %v4278 = vpop.f32.mrb[0].mxu0
        %v4279 = vadd.f32 %v4226, %v4278
        %4280 = vmatprep.mubr.bf16.mxu0 0
        %4281 = vmatmul.mubr.bf16.gmra.mrb[0].mxu0 %v4183
        %v4282 = vpop.f32.mrb[0].mxu0
        %v4283 = vadd.f32 %v4230, %v4282
        %v4284 = vpop.f32.mrb[0].mxu0
        %v4285 = vadd.f32 %v4232, %v4284
        %v4286 = vpop.f32.mrb[0].mxu0
        %v4287 = vadd.f32 %v4234, %v4286
        %v4288 = vpop.f32.mrb[0].mxu0
        %v4289 = vadd.f32 %v4236, %v4288
        %4290 = vdwg.mxu0
        %v4291 = vadd.f32 %v3928, %v4273
        %v4292 = vadd.f32 %v3930, %v4275
        %v4293 = vadd.f32 %v3932, %v4277
        %v4294 = vadd.f32 %v3934, %v4279
        %v4295 = vadd.f32 %v3938, %v4283
        %v4296 = vadd.f32 %v3940, %v4285
        %v4297 = vadd.f32 %v3942, %v4287
        %v4298 = vadd.f32 %v3944, %v4289
        %v4299 = vld [vmem:[#allocation22] sm:$0x3]
        %v4301 = vlaneseq
        %v4302 = vshrl.u32 %v4301, 7
        %v4303 = vsub.s32 0, %v4302
        %v4304 = vrot.slane %v4299, %v4303
        %v4305 = vlaneseq
        %v4306 = vshrl.u32 %v4305, 7
        %v4307 = vsub.s32 1, %v4306
        %v4308 = vrot.slane %v4299, %v4307
        %v4311 = vadd.f32 %v4291, %v4304
        %v4312 = vadd.f32 %v4292, %v4308
        %v4313 = vadd.f32 %v4293, %v4304
        %v4314 = vadd.f32 %v4294, %v4308
        %v4315 = vadd.f32 %v4295, %v4304
        %v4316 = vadd.f32 %v4296, %v4308
        %v4317 = vadd.f32 %v4297, %v4304
        %v4318 = vadd.f32 %v4298, %v4308
        %v4319 = vmax.f32 %v4311, 0.0
        %v4320 = vmax.f32 %v4312, 0.0
        %v4321 = vmax.f32 %v4313, 0.0
        %v4322 = vmax.f32 %v4314, 0.0
        %v4323 = vmax.f32 %v4315, 0.0
        %v4324 = vmax.f32 %v4316, 0.0
        %v4325 = vmax.f32 %v4317, 0.0
        %v4326 = vmax.f32 %v4318, 0.0
        %v4327 = vld [vmem:[#allocation25] sm:$0xff]
        %v4328 = vld [vmem:[#allocation25 + $0x8] sm:$0xff]
        %v4329 = vld [vmem:[#allocation25 + $0x10] sm:$0xff]
        %v4330 = vld [vmem:[#allocation25 + $0x18] sm:$0xff]
        %v4331 = vld [vmem:[#allocation25 + $0x20] sm:$0xff]
        %v4332 = vld [vmem:[#allocation25 + $0x28] sm:$0xff]
        %v4333 = vld [vmem:[#allocation25 + $0x30] sm:$0xff]
        %v4334 = vld [vmem:[#allocation25 + $0x38] sm:$0xff]
        %v4343 = vunpack.c.l.b16 %v4327
        %v4344 = vunpack.c.h.b16 %v4327
        %v4345 = vunpack.c.l.b16 %v4328
        %v4346 = vunpack.c.h.b16 %v4328
        %v4347 = vunpack.c.l.b16 %v4329
        %v4348 = vunpack.c.h.b16 %v4329
        %v4349 = vunpack.c.l.b16 %v4330
        %v4350 = vunpack.c.h.b16 %v4330
        %v4351 = vunpack.c.l.b16 %v4331
        %v4352 = vunpack.c.h.b16 %v4331
        %v4353 = vunpack.c.l.b16 %v4332
        %v4354 = vunpack.c.h.b16 %v4332
        %v4355 = vunpack.c.l.b16 %v4333
        %v4356 = vunpack.c.h.b16 %v4333
        %v4357 = vunpack.c.l.b16 %v4334
        %v4358 = vunpack.c.h.b16 %v4334
        %v4359 = vpack.c.b16 %v4345, %v4343
        %v4360 = vpack.c.b16 %v4346, %v4344
        %v4361 = vpack.c.b16 %v4349, %v4347
        %v4362 = vpack.c.b16 %v4350, %v4348
        %v4363 = vpack.c.b16 %v4353, %v4351
        %v4364 = vpack.c.b16 %v4354, %v4352
        %v4365 = vpack.c.b16 %v4357, %v4355
        %v4366 = vpack.c.b16 %v4358, %v4356
        %4375 = vmatprep.subr.bf16.mxu0 %v4360
        %4376 = vmatpush1.bf16.msra.mxu0 %v4359
        %4377 = vmatprep.subr.bf16.mxu0 %v4362
        %4378 = vmatpush1.bf16.msra.mxu0 %v4361
        %4379 = vmatprep.subr.bf16.mxu0 %v4364
        %4380 = vmatpush1.bf16.msra.mxu0 %v4363
        %4381 = vmatprep.subr.bf16.mxu0 %v4366
        %4382 = vmatpush1.bf16.msra.mxu0 %v4365
        %4383 = vmatprep.subr.bf16.mxu0 0
        %4384 = vmatpush1.bf16.msra.mxu0 0
        %4385 = vmatprep.subr.bf16.mxu0 0
        %4386 = vmatpush1.bf16.msra.mxu0 0
        %4387 = vmatprep.subr.bf16.mxu0 0
        %4388 = vmatpush1.bf16.msra.mxu0 0
        %4389 = vmatprep.subr.bf16.mxu0 0
        %4390 = vmatpush1.bf16.msra.mxu0 0
        %4391 = vmatprep.subr.bf16.mxu0 0
        %4392 = vmatpush1.bf16.msra.mxu0 0
        %4393 = vmatprep.subr.bf16.mxu0 0
        %4394 = vmatpush1.bf16.msra.mxu0 0
        %4395 = vmatprep.subr.bf16.mxu0 0
        %4396 = vmatpush1.bf16.msra.mxu0 0
        %4397 = vmatprep.subr.bf16.mxu0 0
        %4398 = vmatpush1.bf16.msra.mxu0 0
        %4399 = vmatprep.subr.bf16.mxu0 0
        %4400 = vmatpush1.bf16.msra.mxu0 0
        %4401 = vmatprep.subr.bf16.mxu0 0
        %4402 = vmatpush1.bf16.msra.mxu0 0
        %4403 = vmatprep.subr.bf16.mxu0 0
        %4404 = vmatpush1.bf16.msra.mxu0 0
        %4405 = vmatprep.subr.bf16.mxu0 0
        %4406 = vmatpush1.bf16.msra.mxu0 0
        %4407 = vmatprep.mubr.bf16.mxu0 0
        %4408 = vmatmul.mubr.bf16.gmra.mrb[0].mxu0 %v792
        %v4409 = vpop.f32.mrb[0].mxu0
        %v4410 = vadd.f32 0.0, %v4409
        %v4411 = vpop.f32.mrb[0].mxu0
        %v4412 = vadd.f32 0.0, %v4411
        %v4413 = vpop.f32.mrb[0].mxu0
        %v4414 = vadd.f32 0.0, %v4413
        %v4415 = vpop.f32.mrb[0].mxu0
        %v4416 = vadd.f32 0.0, %v4415
        %4417 = vdwg.mxu0
        %v4418 = vld [vmem:[#allocation23] sm:$0xf]
        %v4419 = vld [vmem:[#allocation23 + $0x4] sm:$0xf]
        %v4420 = vld [vmem:[#allocation23 + $0x8] sm:$0xf]
        %v4421 = vld [vmem:[#allocation23 + $0xc] sm:$0xf]
        %v4422 = vpack.c.bf16 %v4414, %v4410
        %v4423 = vpack.c.bf16 %v4416, %v4412
        %v4428 = vunpack.c.l.b16 %v4418
        %v4429 = vunpack.c.l.b16 %v4419
        %v4430 = vunpack.c.l.b16 %v4420
        %v4431 = vunpack.c.l.b16 %v4421
        %v4432 = vpack.c.b16 %v4429, %v4428
        %v4433 = vpack.c.b16 %v4431, %v4430
        %v4435 = vsel %vm847, %v4432, 0
        %v4438 = vsel %vm847, %v4433, 0
        %4440 = vmatprep.subr.bf16.mxu0 %v4423
        %4441 = vmatpush1.bf16.msra.mxu0 %v4422
        %4442 = vmatprep.subr.bf16.mxu0 0
        %4443 = vmatpush1.bf16.msra.mxu0 0
        %4444 = vmatprep.subr.bf16.mxu0 0
        %4445 = vmatpush1.bf16.msra.mxu0 0
        %4446 = vmatprep.subr.bf16.mxu0 0
        %4447 = vmatpush1.bf16.msra.mxu0 0
        %4448 = vmatprep.subr.bf16.mxu0 0
        %4449 = vmatpush1.bf16.msra.mxu0 0
        %4450 = vmatprep.subr.bf16.mxu0 0
        %4451 = vmatpush1.bf16.msra.mxu0 0
        %4452 = vmatprep.subr.bf16.mxu0 0
        %4453 = vmatpush1.bf16.msra.mxu0 0
        %4454 = vmatprep.subr.bf16.mxu0 0
        %4455 = vmatpush1.bf16.msra.mxu0 0
        %4456 = vmatprep.subr.bf16.mxu0 0
        %4457 = vmatpush1.bf16.msra.mxu0 0
        %4458 = vmatprep.subr.bf16.mxu0 0
        %4459 = vmatpush1.bf16.msra.mxu0 0
        %4460 = vmatprep.subr.bf16.mxu0 0
        %4461 = vmatpush1.bf16.msra.mxu0 0
        %4462 = vmatprep.subr.bf16.mxu0 0
        %4463 = vmatpush1.bf16.msra.mxu0 0
        %4464 = vmatprep.subr.bf16.mxu0 0
        %4465 = vmatpush1.bf16.msra.mxu0 0
        %4466 = vmatprep.subr.bf16.mxu0 0
        %4467 = vmatpush1.bf16.msra.mxu0 0
        %4468 = vmatprep.subr.bf16.mxu0 0
        %4469 = vmatpush1.bf16.msra.mxu0 0
        %4470 = vmatprep.subr.bf16.mxu0 0
        %4471 = vmatpush1.bf16.msra.mxu0 0
        %4472 = vmatprep.mubr.bf16.mxu0 0
        %4473 = vmatmul.mubr.bf16.gmra.mrb[0].mxu0 %v4435
        %v4474 = vpop.f32.mrb[0].mxu0
        %v4475 = vadd.f32 0.0, %v4474
        %v4476 = vpop.f32.mrb[0].mxu0
        %v4477 = vadd.f32 0.0, %v4476
        %v4478 = vpop.f32.mrb[0].mxu0
        %v4479 = vadd.f32 0.0, %v4478
        %v4480 = vpop.f32.mrb[0].mxu0
        %v4481 = vadd.f32 0.0, %v4480
        %4482 = vmatprep.mubr.bf16.mxu0 0
        %4483 = vmatmul.mubr.bf16.gmra.mrb[0].mxu0 %v4438
        %v4484 = vpop.f32.mrb[0].mxu0
        %v4485 = vadd.f32 0.0, %v4484
        %v4486 = vpop.f32.mrb[0].mxu0
        %v4487 = vadd.f32 0.0, %v4486
        %v4488 = vpop.f32.mrb[0].mxu0
        %v4489 = vadd.f32 0.0, %v4488
        %v4490 = vpop.f32.mrb[0].mxu0
        %v4491 = vadd.f32 0.0, %v4490
        %4492 = vdwg.mxu0
        %v4493 = vadd.f32 %v4319, %v4475
        %v4494 = vadd.f32 %v4320, %v4477
        %v4495 = vadd.f32 %v4321, %v4479
        %v4496 = vadd.f32 %v4322, %v4481
        %v4497 = vadd.f32 %v4323, %v4485
        %v4498 = vadd.f32 %v4324, %v4487
        %v4499 = vadd.f32 %v4325, %v4489
        %v4500 = vadd.f32 %v4326, %v4491
        %v4501 = vld [vmem:[#allocation26] sm:$0x3]
        %v4503 = vlaneseq
        %v4504 = vshrl.u32 %v4503, 7
        %v4505 = vsub.s32 0, %v4504
        %v4506 = vrot.slane %v4501, %v4505
        %v4507 = vlaneseq
        %v4508 = vshrl.u32 %v4507, 7
        %v4509 = vsub.s32 1, %v4508
        %v4510 = vrot.slane %v4501, %v4509
        %v4513 = vadd.f32 %v4493, %v4506
        %v4514 = vadd.f32 %v4494, %v4510
        %v4515 = vadd.f32 %v4495, %v4506
        %v4516 = vadd.f32 %v4496, %v4510
        %v4517 = vadd.f32 %v4497, %v4506
        %v4518 = vadd.f32 %v4498, %v4510
        %v4519 = vadd.f32 %v4499, %v4506
        %v4520 = vadd.f32 %v4500, %v4510
        %4521 = vst [vmem:[%s749] sm:$0xff] %v4513
        %4522 = vst [vmem:[%s749 + $0x8] sm:$0xff] %v4514
        %4523 = vst [vmem:[%s749 + $0x10] sm:$0xff] %v4515
        %4524 = vst [vmem:[%s749 + $0x18] sm:$0xff] %v4516
        %4525 = vst [vmem:[%s749 + $0x20] sm:$0xff] %v4517
        %4526 = vst [vmem:[%s749 + $0x28] sm:$0xff] %v4518
        %4527 = vst [vmem:[%s749 + $0x30] sm:$0xff] %v4519
        %4528 = vst [vmem:[%s749 + $0x38] sm:$0xff] %v4520
        %s4529 = sand.u32 %s390, 1
        %s4530 = scalar_lea.sflag [#allocation4], %s4529
        %s4531 = sand.u32 %s390, 1
        %s4532 = smul.addr %s4531, 64
        %s4533 = scalar_lea.vmem [#allocation28], %s4532
        // Predicated region
        $region149: #{tpu_custom_call.1} parent=83 // pred_check
          %p4534 = pneg %p400
        $region150: #{tpu_custom_call.1} parent=83 // pred_check_branch
          %4536 = sbr.rel (%p4534) target = $region152
        $region151: #{tpu_custom_call.1} parent=83 // pred_region
          %s4538 = ssub.s32 1024, 1024
          %4539 = vsyncadd %s4530, %s4538
          %s4540 = smul.addr %s41, 8
          %s4541 = smul.addr %s4540, 128
          %s4542 = scalar_lea.hbm %s16, %s4541
          %s4543 = sshll.u32 %s4533, 4
          %s4544 = int_to_ptr.vmem [resolvable:$true] %s4543
          %4549 = dma.vmem_to_hbm [thread:$0]  %s4544, 1024, %s4542, %s4530, 256, 256, 16
        $region152: #{tpu_custom_call.1} parent=83 // pred_fallthru
          _
      $region84: #{tpu_custom_call.1} parent=5 // pred_fallthru
        _
      %p4550 = scmp.le.s32.totalorder 2, %s36
      // Predicated region
      $region153: #{tpu_custom_call.1} parent=5 // pred_check
        %p4551 = pneg %p4550
      $region154: #{tpu_custom_call.1} parent=5 // pred_check_branch
        %4553 = sbr.rel (%p4551) target = $region156
      $region155: #{tpu_custom_call.1} parent=5 // pred_region
        %s4554 = ssub.s32 %s36, 2
        // Predicated region
        $region157: #{tpu_custom_call.1} parent=155 // pred_check
          %p4555 = pneg %p406
        $region158: #{tpu_custom_call.1} parent=155 // pred_check_branch
          %4557 = sbr.rel (%p4555) target = $region160
        $region159: #{tpu_custom_call.1} parent=155 // pred_region
          %s4558 = sand.u32 %s391, 1
          %s4559 = scalar_lea.sflag [#allocation4], %s4558
          %s4560 = sand.u32 %s391, 1
          %s4561 = smul.addr %s4560, 64
          %s4562 = scalar_lea.vmem [#allocation28], %s4561
          %4563 = dma.done %s4559, 1024
        $region160: #{tpu_custom_call.1} parent=155 // pred_fallthru
          _
      $region156: #{tpu_custom_call.1} parent=5 // pred_fallthru
        _
    $region6: #{tpu_custom_call.1} parent=1 // loop_footer
      %s40 = sadd.s32 1, %s36
    $region7: #{tpu_custom_call.1} parent=1 // loop_footer_branch
      %35 = sbr.rel target = $region3
    $region8: #{tpu_custom_call.1} parent=1 // loop_exit
      _
    %4564 = vsyncpa [#allocation3], 1
    %s4565 = scalar_lea.sflag [#allocation3], 1
    %4566 = vsyncpa %s4565, 1
    %4567 = vsyncpa [#allocation6], 1
    %4568 = vsyncpa [#allocation9], 1
    %4569 = vsyncpa [#allocation12], 1
    %4570 = vsyncpa [#allocation15], 1
    %4571 = vsyncpa [#allocation18], 1
    %4572 = vsyncpa [#allocation21], 1
    %4573 = vsyncpa [#allocation24], 1
    %4574 = vsyncpa [#allocation27], 1
    %4575 = vsyncpa [#allocation4], 1
    %s4576 = scalar_lea.sflag [#allocation4], 1
    %4577 = vsyncpa %s4576, 1

</llo_original>
